<compile_context>
chip_gen: v7x
topology: tpu7x:2x2x1
jax: 0.10.0
libtpu: 0.0.40
codegen_flags: <defaults>
</compile_context>

<pallas_src>
import numpy as np
import jax
import jax.numpy as jnp
from jax.experimental import pallas as pl
from jax.experimental.pallas import tpu as pltpu


# ---------------------------------------------------------------------------
# Static geometry (28x28 input, 5x5 kernels, 2x2/2 avg pools -> 16*4*4 flatten)
# ---------------------------------------------------------------------------
_K1_OFFS = tuple(kh * 28 + kw for kh in range(5) for kw in range(5))
_K2_OFFS = tuple(kh * 12 + kw for kh in range(5) for kw in range(5))
_CONV1_M = 23 * 28 + 24        # 668 lanes: covers every valid 24x24 output pos
_POOL1_N = 12 * 12             # 144
_CONV2_M = 7 * 12 + 8          # 92 lanes: covers every valid 8x8 output pos
_FLAT_N = 16 * 4 * 4           # 256, PyTorch flatten order c*16 + h*4 + w
_OUT_PAD = 128                 # lane-dense final store; sliced to 10 outside


# ------------------------------ fused kernel --------------------------------

def _lenet_kernel(x_ref, w1_ref, b1_ref, p1_ref, w2_ref, b2_ref, p2_ref,
                  wf1_ref, bf1_ref, wf2_ref, bf2_ref, wf3_ref, bf3_ref, o_ref):
    # ---- conv1 (1->6, k=5): 25 broadcast multiply-accumulates on the VPU ----
    # x_ref: (1, 784) f32 flattened 28x28 image, w1_ref: (6, 25) f32.
    # Lane m of y1 holds conv output at (oh, ow) = divmod(m, 28); lanes with
    # ow >= 24 are garbage and are zeroed by the pool matrix below.
    y1 = jnp.zeros((6, _CONV1_M), jnp.float32)
    for j, o in enumerate(_K1_OFFS):
        y1 = y1 + w1_ref[:, j:j + 1] * x_ref[:, o:o + _CONV1_M]

    # ---- avgpool 2x2/2 as a matmul with a per-image constant matrix ----
    a1 = jnp.dot(y1.astype(jnp.bfloat16), p1_ref[...],
                 preferred_element_type=jnp.float32)
    a1 = (a1 + b1_ref[...]).astype(jnp.bfloat16)        # (6, 144) = 6ch x 12x12

    # ---- conv2 (6->16, k=5): 25 MXU matmuls contracting Cin ----
    # Lane m of y2 holds conv output at (oh, ow) = divmod(m, 12); ow >= 8 lanes
    # are garbage, zeroed by the pool2 matrix.
    y2 = jnp.zeros((16, _CONV2_M), jnp.float32)
    for j, o in enumerate(_K2_OFFS):
        y2 = y2 + jnp.dot(w2_ref[:, j * 6:(j + 1) * 6],
                          a1[:, o:o + _CONV2_M],
                          preferred_element_type=jnp.float32)

    # ---- pool2 + flatten to PyTorch (C, H, W) order ----
    # p2 is (92, 256) with the 16-wide per-spatial pattern tiled 16x along
    # lanes, so row c of g holds pool2[c, :] replicated in every 16-lane block;
    # a masked column-sum extracts flat[c*16 + s] = pool2[c, s].
    g = jnp.dot(y2.astype(jnp.bfloat16), p2_ref[...],
                preferred_element_type=jnp.float32)      # (16, 256)
    g = g + b2_ref[...]                                  # bias per channel row
    row = jax.lax.broadcasted_iota(jnp.int32, (16, _FLAT_N), 0)
    lane = jax.lax.broadcasted_iota(jnp.int32, (16, _FLAT_N), 1)
    sel = (lane >= row * 16) & (lane < row * 16 + 16)
    flat = jnp.sum(jnp.where(sel, g, 0.0), axis=0, keepdims=True)   # (1, 256)

    # ---- fc1 -> fc2 -> fc3 (fc3 zero-padded to 128 lanes) ----
    h = jnp.dot(flat.astype(jnp.bfloat16), wf1_ref[...],
                preferred_element_type=jnp.float32) + bf1_ref[...]
    h = jnp.dot(h.astype(jnp.bfloat16), wf2_ref[...],
                preferred_element_type=jnp.float32) + bf2_ref[...]
    h = jnp.dot(h.astype(jnp.bfloat16), wf3_ref[...],
                preferred_element_type=jnp.float32) + bf3_ref[...]
    o_ref[...] = h                                       # (1, 128) dense store


# --------------------------- one-time host prep ------------------------------

def _pool1_matrix():
    """(668, 144) matrix: 0.25 where a valid conv1 lane falls in a 2x2 window;
    zero rows kill the out-of-range (ow >= 24) lanes of the 28-wide layout."""
    p = np.zeros((_CONV1_M, _POOL1_N), np.float32)
    for m in range(_CONV1_M):
        oh, ow = divmod(m, 28)
        if ow < 24:
            p[m, (oh // 2) * 12 + ow // 2] = 0.25
    return p


def _pool2_matrix():
    """(92, 256) matrix: pool2 pattern replicated for each of the 16 channel
    blocks of the PyTorch flatten order; zero rows kill ow >= 8 lanes."""
    p = np.zeros((_CONV2_M, _FLAT_N), np.float32)
    for m in range(_CONV2_M):
        oh, ow = divmod(m, 12)
        if ow < 8:
            s = (oh // 2) * 4 + ow // 2
            p[m, np.arange(16) * 16 + s] = 0.25
    return p


def build_constants(params):
    """All weight reshapes / pool matrices, computed ONCE (not per forward)."""
    f32, bf16 = jnp.float32, jnp.bfloat16
    wf3 = jnp.zeros((84, _OUT_PAD), f32).at[:, :10].set(params["wf3"].T)
    bf3 = jnp.zeros((1, _OUT_PAD), f32).at[0, :10].set(params["bf3"])
    return {
        "w1": params["w1"].reshape(6, 25).astype(f32),                    # (6,25) cols=(kh,kw)
        "b1": params["b1"].reshape(6, 1).astype(f32),
        "p1": jnp.asarray(_pool1_matrix(), bf16),                         # (668,144)
        "w2": jnp.transpose(params["w2"], (0, 2, 3, 1)).reshape(16, 150).astype(bf16),
        "b2": params["b2"].reshape(16, 1).astype(f32),
        "p2": jnp.asarray(_pool2_matrix(), bf16),                         # (92,256)
        "wf1": params["wf1"].T.astype(bf16),                              # (256,120)
        "bf1": params["bf1"].reshape(1, 120).astype(f32),
        "wf2": params["wf2"].T.astype(bf16),                              # (120,84)
        "bf2": params["bf2"].reshape(1, 84).astype(f32),
        "wf3": wf3.astype(bf16),                                          # (84,128) padded
        "bf3": bf3,                                                       # (1,128)  padded
    }


_CONST_ORDER = ("w1", "b1", "p1", "w2", "b2", "p2",
                "wf1", "bf1", "wf2", "bf2", "wf3", "bf3")


@jax.jit
def lenet_forward(consts, x):
    n = x.shape[0]
    x3 = x.reshape(n, 1, 28 * 28).astype(jnp.float32)

    def _const_spec(name):
        a = consts[name]
        return pl.BlockSpec(a.shape, lambda i, _nd=a.ndim: (0,) * _nd)

    out = pl.pallas_call(
        _lenet_kernel,
        out_shape=jax.ShapeDtypeStruct((n, 1, _OUT_PAD), jnp.float32),
        grid=(n,),
        in_specs=[pl.BlockSpec((None, 1, 28 * 28), lambda i: (i, 0, 0))]
                 + [_const_spec(name) for name in _CONST_ORDER],
        out_specs=pl.BlockSpec((None, 1, _OUT_PAD), lambda i: (i, 0, 0)),
        compiler_params=pltpu.CompilerParams(
            dimension_semantics=("parallel",)),
    )(x3, *[consts[name] for name in _CONST_ORDER])
    return out[:, 0, :10]


# --------------------------- params & reference ------------------------------

def init_lenet_params(key):
    ks = jax.random.split(key, 10)

    def uniform(k, shape, fan_in):
        bound = 1.0 / np.sqrt(fan_in)
        return jax.random.uniform(k, shape, jnp.float32, -bound, bound)

    return {
        "w1": uniform(ks[0], (6, 1, 5, 5), 1 * 5 * 5),
        "b1": uniform(ks[1], (6,), 1 * 5 * 5),
        "w2": uniform(ks[2], (16, 6, 5, 5), 6 * 5 * 5),
        "b2": uniform(ks[3], (16,), 6 * 5 * 5),
        "wf1": uniform(ks[4], (120, 256), 256),
        "bf1": uniform(ks[5], (120,), 256),
        "wf2": uniform(ks[6], (84, 120), 120),
        "bf2": uniform(ks[7], (84,), 120),
        "wf3": uniform(ks[8], (10, 84), 84),
        "bf3": uniform(ks[9], (10,), 84),
    }


def lenet_reference(params, x):
    dn = ("NCHW", "OIHW", "NCHW")
    prec = jax.lax.Precision.HIGHEST
    y = jax.lax.conv_general_dilated(x, params["w1"], (1, 1), "VALID",
                                     dimension_numbers=dn, precision=prec)
    y = y + params["b1"].reshape(1, -1, 1, 1)
    y = jax.lax.reduce_window(y, 0.0, jax.lax.add,
                              (1, 1, 2, 2), (1, 1, 2, 2), "VALID") / 4.0
    y = jax.lax.conv_general_dilated(y, params["w2"], (1, 1), "VALID",
                                     dimension_numbers=dn, precision=prec)
    y = y + params["b2"].reshape(1, -1, 1, 1)
    y = jax.lax.reduce_window(y, 0.0, jax.lax.add,
                              (1, 1, 2, 2), (1, 1, 2, 2), "VALID") / 4.0
    h = y.reshape(x.shape[0], -1)
    h = jnp.dot(h, params["wf1"].T, precision=prec) + params["bf1"]
    h = jnp.dot(h, params["wf2"].T, precision=prec) + params["bf2"]
    h = jnp.dot(h, params["wf3"].T, precision=prec) + params["bf3"]
    return h


if __name__ == "__main__":
    key = jax.random.PRNGKey(0)
    kparam, kx = jax.random.split(key)
    params = init_lenet_params(kparam)
    # LeNet's flatten (4*4*16) fixes the input at 1x28x28; batch = 2.
    x = jax.random.normal(kx, (2, 1, 28, 28), jnp.float32)

    consts = build_constants(params)
    out = jax.block_until_ready(lenet_forward(consts, x))
    assert out.shape == (2, 10), out.shape

    ref = jax.block_until_ready(lenet_reference(params, x))
    max_err = float(np.max(np.abs(np.asarray(out) - np.asarray(ref))))
    assert np.allclose(np.asarray(out), np.asarray(ref),
                       rtol=1e-2, atol=1e-2), max_err
    print("KERNEL_OK")
</pallas_src>

<mosaic_0001>
module attributes {stable_mosaic.version = 11 : i64} {
  func.func @_lenet_kernel(%arg0: i32, %arg1: memref<1x1x784xf32, #tpu.memory_space<vmem>>, %arg2: memref<6x25xf32, #tpu.memory_space<vmem>>, %arg3: memref<6x1xf32, #tpu.memory_space<vmem>>, %arg4: memref<668x144xbf16, #tpu.memory_space<vmem>>, %arg5: memref<16x150xbf16, #tpu.memory_space<vmem>>, %arg6: memref<16x1xf32, #tpu.memory_space<vmem>>, %arg7: memref<92x256xbf16, #tpu.memory_space<vmem>>, %arg8: memref<256x120xbf16, #tpu.memory_space<vmem>>, %arg9: memref<1x120xf32, #tpu.memory_space<vmem>>, %arg10: memref<120x84xbf16, #tpu.memory_space<vmem>>, %arg11: memref<1x84xf32, #tpu.memory_space<vmem>>, %arg12: memref<84x128xbf16, #tpu.memory_space<vmem>>, %arg13: memref<1x128xf32, #tpu.memory_space<vmem>>, %arg14: memref<1x1x128xf32, #tpu.memory_space<vmem>>) attributes {dimension_semantics = [#tpu.dimension_semantics<parallel>], iteration_bounds = array<i64: 2>, scalar_prefetch = 0 : i64, scratch_operands = 0 : i64, tpu.core_type = #tpu.core_type<tc>, window_params = [{transform_indices = @transform_0, window_bounds = array<i64: 1, 1, 784>}, {pipeline_mode = #tpu.pipeline_mode<synchronous>, transform_indices = @transform_1, window_bounds = array<i64: 6, 25>}, {pipeline_mode = #tpu.pipeline_mode<synchronous>, transform_indices = @transform_2, window_bounds = array<i64: 6, 1>}, {pipeline_mode = #tpu.pipeline_mode<synchronous>, transform_indices = @transform_3, window_bounds = array<i64: 668, 144>}, {pipeline_mode = #tpu.pipeline_mode<synchronous>, transform_indices = @transform_4, window_bounds = array<i64: 16, 150>}, {pipeline_mode = #tpu.pipeline_mode<synchronous>, transform_indices = @transform_5, window_bounds = array<i64: 16, 1>}, {pipeline_mode = #tpu.pipeline_mode<synchronous>, transform_indices = @transform_6, window_bounds = array<i64: 92, 256>}, {pipeline_mode = #tpu.pipeline_mode<synchronous>, transform_indices = @transform_7, window_bounds = array<i64: 256, 120>}, {pipeline_mode = #tpu.pipeline_mode<synchronous>, transform_indices = @transform_8, window_bounds = array<i64: 1, 120>}, {pipeline_mode = #tpu.pipeline_mode<synchronous>, transform_indices = @transform_9, window_bounds = array<i64: 120, 84>}, {pipeline_mode = #tpu.pipeline_mode<synchronous>, transform_indices = @transform_10, window_bounds = array<i64: 1, 84>}, {pipeline_mode = #tpu.pipeline_mode<synchronous>, transform_indices = @transform_11, window_bounds = array<i64: 84, 128>}, {pipeline_mode = #tpu.pipeline_mode<synchronous>, transform_indices = @transform_12, window_bounds = array<i64: 1, 128>}, {transform_indices = @transform_13, window_bounds = array<i64: 1, 1, 128>}]} {
    %cst = arith.constant 0.000000e+00 : f32
    %0 = vector.broadcast %cst : f32 to vector<6x668xf32>
    %c0 = arith.constant 0 : index
    %c0_0 = arith.constant 0 : index
    %1 = vector.load %arg2[%c0, %c0_0] : memref<6x25xf32, #tpu.memory_space<vmem>>, vector<6x1xf32>
    %c0_1 = arith.constant 0 : index
    %c0_2 = arith.constant 0 : index
    %c0_3 = arith.constant 0 : index
    %2 = vector.load %arg1[%c0_1, %c0_2, %c0_3] : memref<1x1x784xf32, #tpu.memory_space<vmem>>, vector<1x1x668xf32>
    %3 = vector.shape_cast %2 : vector<1x1x668xf32> to vector<1x668xf32>
    %4 = vector.broadcast %1 : vector<6x1xf32> to vector<6x668xf32>
    %5 = vector.broadcast %3 : vector<1x668xf32> to vector<6x668xf32>
    %6 = arith.mulf %4, %5 : vector<6x668xf32>
    %7 = arith.addf %0, %6 : vector<6x668xf32>
    %c0_4 = arith.constant 0 : index
    %c1 = arith.constant 1 : index
    %8 = vector.load %arg2[%c0_4, %c1] : memref<6x25xf32, #tpu.memory_space<vmem>>, vector<6x1xf32>
    %c0_5 = arith.constant 0 : index
    %c0_6 = arith.constant 0 : index
    %c1_7 = arith.constant 1 : index
    %9 = vector.load %arg1[%c0_5, %c0_6, %c1_7] : memref<1x1x784xf32, #tpu.memory_space<vmem>>, vector<1x1x668xf32>
    %10 = vector.shape_cast %9 : vector<1x1x668xf32> to vector<1x668xf32>
    %11 = vector.broadcast %8 : vector<6x1xf32> to vector<6x668xf32>
    %12 = vector.broadcast %10 : vector<1x668xf32> to vector<6x668xf32>
    %13 = arith.mulf %11, %12 : vector<6x668xf32>
    %14 = arith.addf %7, %13 : vector<6x668xf32>
    %c0_8 = arith.constant 0 : index
    %c2 = arith.constant 2 : index
    %15 = vector.load %arg2[%c0_8, %c2] : memref<6x25xf32, #tpu.memory_space<vmem>>, vector<6x1xf32>
    %c0_9 = arith.constant 0 : index
    %c0_10 = arith.constant 0 : index
    %c2_11 = arith.constant 2 : index
    %16 = vector.load %arg1[%c0_9, %c0_10, %c2_11] : memref<1x1x784xf32, #tpu.memory_space<vmem>>, vector<1x1x668xf32>
    %17 = vector.shape_cast %16 : vector<1x1x668xf32> to vector<1x668xf32>
    %18 = vector.broadcast %15 : vector<6x1xf32> to vector<6x668xf32>
    %19 = vector.broadcast %17 : vector<1x668xf32> to vector<6x668xf32>
    %20 = arith.mulf %18, %19 : vector<6x668xf32>
    %21 = arith.addf %14, %20 : vector<6x668xf32>
    %c0_12 = arith.constant 0 : index
    %c3 = arith.constant 3 : index
    %22 = vector.load %arg2[%c0_12, %c3] : memref<6x25xf32, #tpu.memory_space<vmem>>, vector<6x1xf32>
    %c0_13 = arith.constant 0 : index
    %c0_14 = arith.constant 0 : index
    %c3_15 = arith.constant 3 : index
    %23 = vector.load %arg1[%c0_13, %c0_14, %c3_15] : memref<1x1x784xf32, #tpu.memory_space<vmem>>, vector<1x1x668xf32>
    %24 = vector.shape_cast %23 : vector<1x1x668xf32> to vector<1x668xf32>
    %25 = vector.broadcast %22 : vector<6x1xf32> to vector<6x668xf32>
    %26 = vector.broadcast %24 : vector<1x668xf32> to vector<6x668xf32>
    %27 = arith.mulf %25, %26 : vector<6x668xf32>
    %28 = arith.addf %21, %27 : vector<6x668xf32>
    %c0_16 = arith.constant 0 : index
    %c4 = arith.constant 4 : index
    %29 = vector.load %arg2[%c0_16, %c4] : memref<6x25xf32, #tpu.memory_space<vmem>>, vector<6x1xf32>
    %c0_17 = arith.constant 0 : index
    %c0_18 = arith.constant 0 : index
    %c4_19 = arith.constant 4 : index
    %30 = vector.load %arg1[%c0_17, %c0_18, %c4_19] : memref<1x1x784xf32, #tpu.memory_space<vmem>>, vector<1x1x668xf32>
    %31 = vector.shape_cast %30 : vector<1x1x668xf32> to vector<1x668xf32>
    %32 = vector.broadcast %29 : vector<6x1xf32> to vector<6x668xf32>
    %33 = vector.broadcast %31 : vector<1x668xf32> to vector<6x668xf32>
    %34 = arith.mulf %32, %33 : vector<6x668xf32>
    %35 = arith.addf %28, %34 : vector<6x668xf32>
    %c0_20 = arith.constant 0 : index
    %c5 = arith.constant 5 : index
    %36 = vector.load %arg2[%c0_20, %c5] : memref<6x25xf32, #tpu.memory_space<vmem>>, vector<6x1xf32>
    %c0_21 = arith.constant 0 : index
    %c0_22 = arith.constant 0 : index
    %c28 = arith.constant 28 : index
    %37 = vector.load %arg1[%c0_21, %c0_22, %c28] : memref<1x1x784xf32, #tpu.memory_space<vmem>>, vector<1x1x668xf32>
    %38 = vector.shape_cast %37 : vector<1x1x668xf32> to vector<1x668xf32>
    %39 = vector.broadcast %36 : vector<6x1xf32> to vector<6x668xf32>
    %40 = vector.broadcast %38 : vector<1x668xf32> to vector<6x668xf32>
    %41 = arith.mulf %39, %40 : vector<6x668xf32>
    %42 = arith.addf %35, %41 : vector<6x668xf32>
    %c0_23 = arith.constant 0 : index
    %c6 = arith.constant 6 : index
    %43 = vector.load %arg2[%c0_23, %c6] : memref<6x25xf32, #tpu.memory_space<vmem>>, vector<6x1xf32>
    %c0_24 = arith.constant 0 : index
    %c0_25 = arith.constant 0 : index
    %c29 = arith.constant 29 : index
    %44 = vector.load %arg1[%c0_24, %c0_25, %c29] : memref<1x1x784xf32, #tpu.memory_space<vmem>>, vector<1x1x668xf32>
    %45 = vector.shape_cast %44 : vector<1x1x668xf32> to vector<1x668xf32>
    %46 = vector.broadcast %43 : vector<6x1xf32> to vector<6x668xf32>
    %47 = vector.broadcast %45 : vector<1x668xf32> to vector<6x668xf32>
    %48 = arith.mulf %46, %47 : vector<6x668xf32>
    %49 = arith.addf %42, %48 : vector<6x668xf32>
    %c0_26 = arith.constant 0 : index
    %c7 = arith.constant 7 : index
    %50 = vector.load %arg2[%c0_26, %c7] : memref<6x25xf32, #tpu.memory_space<vmem>>, vector<6x1xf32>
    %c0_27 = arith.constant 0 : index
    %c0_28 = arith.constant 0 : index
    %c30 = arith.constant 30 : index
    %51 = vector.load %arg1[%c0_27, %c0_28, %c30] : memref<1x1x784xf32, #tpu.memory_space<vmem>>, vector<1x1x668xf32>
    %52 = vector.shape_cast %51 : vector<1x1x668xf32> to vector<1x668xf32>
    %53 = vector.broadcast %50 : vector<6x1xf32> to vector<6x668xf32>
    %54 = vector.broadcast %52 : vector<1x668xf32> to vector<6x668xf32>
    %55 = arith.mulf %53, %54 : vector<6x668xf32>
    %56 = arith.addf %49, %55 : vector<6x668xf32>
    %c0_29 = arith.constant 0 : index
    %c8 = arith.constant 8 : index
    %57 = vector.load %arg2[%c0_29, %c8] : memref<6x25xf32, #tpu.memory_space<vmem>>, vector<6x1xf32>
    %c0_30 = arith.constant 0 : index
    %c0_31 = arith.constant 0 : index
    %c31 = arith.constant 31 : index
    %58 = vector.load %arg1[%c0_30, %c0_31, %c31] : memref<1x1x784xf32, #tpu.memory_space<vmem>>, vector<1x1x668xf32>
    %59 = vector.shape_cast %58 : vector<1x1x668xf32> to vector<1x668xf32>
    %60 = vector.broadcast %57 : vector<6x1xf32> to vector<6x668xf32>
    %61 = vector.broadcast %59 : vector<1x668xf32> to vector<6x668xf32>
    %62 = arith.mulf %60, %61 : vector<6x668xf32>
    %63 = arith.addf %56, %62 : vector<6x668xf32>
    %c0_32 = arith.constant 0 : index
    %c9 = arith.constant 9 : index
    %64 = vector.load %arg2[%c0_32, %c9] : memref<6x25xf32, #tpu.memory_space<vmem>>, vector<6x1xf32>
    %c0_33 = arith.constant 0 : index
    %c0_34 = arith.constant 0 : index
    %c32 = arith.constant 32 : index
    %65 = vector.load %arg1[%c0_33, %c0_34, %c32] : memref<1x1x784xf32, #tpu.memory_space<vmem>>, vector<1x1x668xf32>
    %66 = vector.shape_cast %65 : vector<1x1x668xf32> to vector<1x668xf32>
    %67 = vector.broadcast %64 : vector<6x1xf32> to vector<6x668xf32>
    %68 = vector.broadcast %66 : vector<1x668xf32> to vector<6x668xf32>
    %69 = arith.mulf %67, %68 : vector<6x668xf32>
    %70 = arith.addf %63, %69 : vector<6x668xf32>
    %c0_35 = arith.constant 0 : index
    %c10 = arith.constant 10 : index
    %71 = vector.load %arg2[%c0_35, %c10] : memref<6x25xf32, #tpu.memory_space<vmem>>, vector<6x1xf32>
    %c0_36 = arith.constant 0 : index
    %c0_37 = arith.constant 0 : index
    %c56 = arith.constant 56 : index
    %72 = vector.load %arg1[%c0_36, %c0_37, %c56] : memref<1x1x784xf32, #tpu.memory_space<vmem>>, vector<1x1x668xf32>
    %73 = vector.shape_cast %72 : vector<1x1x668xf32> to vector<1x668xf32>
    %74 = vector.broadcast %71 : vector<6x1xf32> to vector<6x668xf32>
    %75 = vector.broadcast %73 : vector<1x668xf32> to vector<6x668xf32>
    %76 = arith.mulf %74, %75 : vector<6x668xf32>
    %77 = arith.addf %70, %76 : vector<6x668xf32>
    %c0_38 = arith.constant 0 : index
    %c11 = arith.constant 11 : index
    %78 = vector.load %arg2[%c0_38, %c11] : memref<6x25xf32, #tpu.memory_space<vmem>>, vector<6x1xf32>
    %c0_39 = arith.constant 0 : index
    %c0_40 = arith.constant 0 : index
    %c57 = arith.constant 57 : index
    %79 = vector.load %arg1[%c0_39, %c0_40, %c57] : memref<1x1x784xf32, #tpu.memory_space<vmem>>, vector<1x1x668xf32>
    %80 = vector.shape_cast %79 : vector<1x1x668xf32> to vector<1x668xf32>
    %81 = vector.broadcast %78 : vector<6x1xf32> to vector<6x668xf32>
    %82 = vector.broadcast %80 : vector<1x668xf32> to vector<6x668xf32>
    %83 = arith.mulf %81, %82 : vector<6x668xf32>
    %84 = arith.addf %77, %83 : vector<6x668xf32>
    %c0_41 = arith.constant 0 : index
    %c12 = arith.constant 12 : index
    %85 = vector.load %arg2[%c0_41, %c12] : memref<6x25xf32, #tpu.memory_space<vmem>>, vector<6x1xf32>
    %c0_42 = arith.constant 0 : index
    %c0_43 = arith.constant 0 : index
    %c58 = arith.constant 58 : index
    %86 = vector.load %arg1[%c0_42, %c0_43, %c58] : memref<1x1x784xf32, #tpu.memory_space<vmem>>, vector<1x1x668xf32>
    %87 = vector.shape_cast %86 : vector<1x1x668xf32> to vector<1x668xf32>
    %88 = vector.broadcast %85 : vector<6x1xf32> to vector<6x668xf32>
    %89 = vector.broadcast %87 : vector<1x668xf32> to vector<6x668xf32>
    %90 = arith.mulf %88, %89 : vector<6x668xf32>
    %91 = arith.addf %84, %90 : vector<6x668xf32>
    %c0_44 = arith.constant 0 : index
    %c13 = arith.constant 13 : index
    %92 = vector.load %arg2[%c0_44, %c13] : memref<6x25xf32, #tpu.memory_space<vmem>>, vector<6x1xf32>
    %c0_45 = arith.constant 0 : index
    %c0_46 = arith.constant 0 : index
    %c59 = arith.constant 59 : index
    %93 = vector.load %arg1[%c0_45, %c0_46, %c59] : memref<1x1x784xf32, #tpu.memory_space<vmem>>, vector<1x1x668xf32>
    %94 = vector.shape_cast %93 : vector<1x1x668xf32> to vector<1x668xf32>
    %95 = vector.broadcast %92 : vector<6x1xf32> to vector<6x668xf32>
    %96 = vector.broadcast %94 : vector<1x668xf32> to vector<6x668xf32>
    %97 = arith.mulf %95, %96 : vector<6x668xf32>
    %98 = arith.addf %91, %97 : vector<6x668xf32>
    %c0_47 = arith.constant 0 : index
    %c14 = arith.constant 14 : index
    %99 = vector.load %arg2[%c0_47, %c14] : memref<6x25xf32, #tpu.memory_space<vmem>>, vector<6x1xf32>
    %c0_48 = arith.constant 0 : index
    %c0_49 = arith.constant 0 : index
    %c60 = arith.constant 60 : index
    %100 = vector.load %arg1[%c0_48, %c0_49, %c60] : memref<1x1x784xf32, #tpu.memory_space<vmem>>, vector<1x1x668xf32>
    %101 = vector.shape_cast %100 : vector<1x1x668xf32> to vector<1x668xf32>
    %102 = vector.broadcast %99 : vector<6x1xf32> to vector<6x668xf32>
    %103 = vector.broadcast %101 : vector<1x668xf32> to vector<6x668xf32>
    %104 = arith.mulf %102, %103 : vector<6x668xf32>
    %105 = arith.addf %98, %104 : vector<6x668xf32>
    %c0_50 = arith.constant 0 : index
    %c15 = arith.constant 15 : index
    %106 = vector.load %arg2[%c0_50, %c15] : memref<6x25xf32, #tpu.memory_space<vmem>>, vector<6x1xf32>
    %c0_51 = arith.constant 0 : index
    %c0_52 = arith.constant 0 : index
    %c84 = arith.constant 84 : index
    %107 = vector.load %arg1[%c0_51, %c0_52, %c84] : memref<1x1x784xf32, #tpu.memory_space<vmem>>, vector<1x1x668xf32>
    %108 = vector.shape_cast %107 : vector<1x1x668xf32> to vector<1x668xf32>
    %109 = vector.broadcast %106 : vector<6x1xf32> to vector<6x668xf32>
    %110 = vector.broadcast %108 : vector<1x668xf32> to vector<6x668xf32>
    %111 = arith.mulf %109, %110 : vector<6x668xf32>
    %112 = arith.addf %105, %111 : vector<6x668xf32>
    %c0_53 = arith.constant 0 : index
    %c16 = arith.constant 16 : index
    %113 = vector.load %arg2[%c0_53, %c16] : memref<6x25xf32, #tpu.memory_space<vmem>>, vector<6x1xf32>
    %c0_54 = arith.constant 0 : index
    %c0_55 = arith.constant 0 : index
    %c85 = arith.constant 85 : index
    %114 = vector.load %arg1[%c0_54, %c0_55, %c85] : memref<1x1x784xf32, #tpu.memory_space<vmem>>, vector<1x1x668xf32>
    %115 = vector.shape_cast %114 : vector<1x1x668xf32> to vector<1x668xf32>
    %116 = vector.broadcast %113 : vector<6x1xf32> to vector<6x668xf32>
    %117 = vector.broadcast %115 : vector<1x668xf32> to vector<6x668xf32>
    %118 = arith.mulf %116, %117 : vector<6x668xf32>
    %119 = arith.addf %112, %118 : vector<6x668xf32>
    %c0_56 = arith.constant 0 : index
    %c17 = arith.constant 17 : index
    %120 = vector.load %arg2[%c0_56, %c17] : memref<6x25xf32, #tpu.memory_space<vmem>>, vector<6x1xf32>
    %c0_57 = arith.constant 0 : index
    %c0_58 = arith.constant 0 : index
    %c86 = arith.constant 86 : index
    %121 = vector.load %arg1[%c0_57, %c0_58, %c86] : memref<1x1x784xf32, #tpu.memory_space<vmem>>, vector<1x1x668xf32>
    %122 = vector.shape_cast %121 : vector<1x1x668xf32> to vector<1x668xf32>
    %123 = vector.broadcast %120 : vector<6x1xf32> to vector<6x668xf32>
    %124 = vector.broadcast %122 : vector<1x668xf32> to vector<6x668xf32>
    %125 = arith.mulf %123, %124 : vector<6x668xf32>
    %126 = arith.addf %119, %125 : vector<6x668xf32>
    %c0_59 = arith.constant 0 : index
    %c18 = arith.constant 18 : index
    %127 = vector.load %arg2[%c0_59, %c18] : memref<6x25xf32, #tpu.memory_space<vmem>>, vector<6x1xf32>
    %c0_60 = arith.constant 0 : index
    %c0_61 = arith.constant 0 : index
    %c87 = arith.constant 87 : index
    %128 = vector.load %arg1[%c0_60, %c0_61, %c87] : memref<1x1x784xf32, #tpu.memory_space<vmem>>, vector<1x1x668xf32>
    %129 = vector.shape_cast %128 : vector<1x1x668xf32> to vector<1x668xf32>
    %130 = vector.broadcast %127 : vector<6x1xf32> to vector<6x668xf32>
    %131 = vector.broadcast %129 : vector<1x668xf32> to vector<6x668xf32>
    %132 = arith.mulf %130, %131 : vector<6x668xf32>
    %133 = arith.addf %126, %132 : vector<6x668xf32>
    %c0_62 = arith.constant 0 : index
    %c19 = arith.constant 19 : index
    %134 = vector.load %arg2[%c0_62, %c19] : memref<6x25xf32, #tpu.memory_space<vmem>>, vector<6x1xf32>
    %c0_63 = arith.constant 0 : index
    %c0_64 = arith.constant 0 : index
    %c88 = arith.constant 88 : index
    %135 = vector.load %arg1[%c0_63, %c0_64, %c88] : memref<1x1x784xf32, #tpu.memory_space<vmem>>, vector<1x1x668xf32>
    %136 = vector.shape_cast %135 : vector<1x1x668xf32> to vector<1x668xf32>
    %137 = vector.broadcast %134 : vector<6x1xf32> to vector<6x668xf32>
    %138 = vector.broadcast %136 : vector<1x668xf32> to vector<6x668xf32>
    %139 = arith.mulf %137, %138 : vector<6x668xf32>
    %140 = arith.addf %133, %139 : vector<6x668xf32>
    %c0_65 = arith.constant 0 : index
    %c20 = arith.constant 20 : index
    %141 = vector.load %arg2[%c0_65, %c20] : memref<6x25xf32, #tpu.memory_space<vmem>>, vector<6x1xf32>
    %c0_66 = arith.constant 0 : index
    %c0_67 = arith.constant 0 : index
    %c112 = arith.constant 112 : index
    %142 = vector.load %arg1[%c0_66, %c0_67, %c112] : memref<1x1x784xf32, #tpu.memory_space<vmem>>, vector<1x1x668xf32>
    %143 = vector.shape_cast %142 : vector<1x1x668xf32> to vector<1x668xf32>
    %144 = vector.broadcast %141 : vector<6x1xf32> to vector<6x668xf32>
    %145 = vector.broadcast %143 : vector<1x668xf32> to vector<6x668xf32>
    %146 = arith.mulf %144, %145 : vector<6x668xf32>
    %147 = arith.addf %140, %146 : vector<6x668xf32>
    %c0_68 = arith.constant 0 : index
    %c21 = arith.constant 21 : index
    %148 = vector.load %arg2[%c0_68, %c21] : memref<6x25xf32, #tpu.memory_space<vmem>>, vector<6x1xf32>
    %c0_69 = arith.constant 0 : index
    %c0_70 = arith.constant 0 : index
    %c113 = arith.constant 113 : index
    %149 = vector.load %arg1[%c0_69, %c0_70, %c113] : memref<1x1x784xf32, #tpu.memory_space<vmem>>, vector<1x1x668xf32>
    %150 = vector.shape_cast %149 : vector<1x1x668xf32> to vector<1x668xf32>
    %151 = vector.broadcast %148 : vector<6x1xf32> to vector<6x668xf32>
    %152 = vector.broadcast %150 : vector<1x668xf32> to vector<6x668xf32>
    %153 = arith.mulf %151, %152 : vector<6x668xf32>
    %154 = arith.addf %147, %153 : vector<6x668xf32>
    %c0_71 = arith.constant 0 : index
    %c22 = arith.constant 22 : index
    %155 = vector.load %arg2[%c0_71, %c22] : memref<6x25xf32, #tpu.memory_space<vmem>>, vector<6x1xf32>
    %c0_72 = arith.constant 0 : index
    %c0_73 = arith.constant 0 : index
    %c114 = arith.constant 114 : index
    %156 = vector.load %arg1[%c0_72, %c0_73, %c114] : memref<1x1x784xf32, #tpu.memory_space<vmem>>, vector<1x1x668xf32>
    %157 = vector.shape_cast %156 : vector<1x1x668xf32> to vector<1x668xf32>
    %158 = vector.broadcast %155 : vector<6x1xf32> to vector<6x668xf32>
    %159 = vector.broadcast %157 : vector<1x668xf32> to vector<6x668xf32>
    %160 = arith.mulf %158, %159 : vector<6x668xf32>
    %161 = arith.addf %154, %160 : vector<6x668xf32>
    %c0_74 = arith.constant 0 : index
    %c23 = arith.constant 23 : index
    %162 = vector.load %arg2[%c0_74, %c23] : memref<6x25xf32, #tpu.memory_space<vmem>>, vector<6x1xf32>
    %c0_75 = arith.constant 0 : index
    %c0_76 = arith.constant 0 : index
    %c115 = arith.constant 115 : index
    %163 = vector.load %arg1[%c0_75, %c0_76, %c115] : memref<1x1x784xf32, #tpu.memory_space<vmem>>, vector<1x1x668xf32>
    %164 = vector.shape_cast %163 : vector<1x1x668xf32> to vector<1x668xf32>
    %165 = vector.broadcast %162 : vector<6x1xf32> to vector<6x668xf32>
    %166 = vector.broadcast %164 : vector<1x668xf32> to vector<6x668xf32>
    %167 = arith.mulf %165, %166 : vector<6x668xf32>
    %168 = arith.addf %161, %167 : vector<6x668xf32>
    %c0_77 = arith.constant 0 : index
    %c24 = arith.constant 24 : index
    %169 = vector.load %arg2[%c0_77, %c24] : memref<6x25xf32, #tpu.memory_space<vmem>>, vector<6x1xf32>
    %c0_78 = arith.constant 0 : index
    %c0_79 = arith.constant 0 : index
    %c116 = arith.constant 116 : index
    %170 = vector.load %arg1[%c0_78, %c0_79, %c116] : memref<1x1x784xf32, #tpu.memory_space<vmem>>, vector<1x1x668xf32>
    %171 = vector.shape_cast %170 : vector<1x1x668xf32> to vector<1x668xf32>
    %172 = vector.broadcast %169 : vector<6x1xf32> to vector<6x668xf32>
    %173 = vector.broadcast %171 : vector<1x668xf32> to vector<6x668xf32>
    %174 = arith.mulf %172, %173 : vector<6x668xf32>
    %175 = arith.addf %168, %174 : vector<6x668xf32>
    %176 = arith.truncf %175 : vector<6x668xf32> to vector<6x668xbf16>
    %c0_80 = arith.constant 0 : index
    %c0_81 = arith.constant 0 : index
    %177 = vector.load %arg4[%c0_80, %c0_81] : memref<668x144xbf16, #tpu.memory_space<vmem>>, vector<668x144xbf16>
    %cst_82 = arith.constant dense<0.000000e+00> : vector<6x144xf32>
    %178 = tpu.matmul %176, %177, %cst_82 {dimension_numbers = #tpu.dot_dimension_numbers<[1], [0], [0], [1], [0, 0, 1, 1], [], []>} : vector<6x668xbf16>, vector<668x144xbf16>, vector<6x144xf32> -> vector<6x144xf32>
    %c0_83 = arith.constant 0 : index
    %c0_84 = arith.constant 0 : index
    %179 = vector.load %arg3[%c0_83, %c0_84] : memref<6x1xf32, #tpu.memory_space<vmem>>, vector<6x1xf32>
    %180 = vector.broadcast %179 : vector<6x1xf32> to vector<6x144xf32>
    %181 = arith.addf %178, %180 : vector<6x144xf32>
    %182 = arith.truncf %181 : vector<6x144xf32> to vector<6x144xbf16>
    %cst_85 = arith.constant 0.000000e+00 : f32
    %183 = vector.broadcast %cst_85 : f32 to vector<16x92xf32>
    %c0_86 = arith.constant 0 : index
    %c0_87 = arith.constant 0 : index
    %184 = vector.load %arg5[%c0_86, %c0_87] : memref<16x150xbf16, #tpu.memory_space<vmem>>, vector<16x6xbf16>
    %185 = vector.extract_strided_slice %182 {offsets = [0, 0], sizes = [6, 92], strides = [1, 1]} : vector<6x144xbf16> to vector<6x92xbf16>
    %cst_88 = arith.constant dense<0.000000e+00> : vector<16x92xf32>
    %186 = tpu.matmul %184, %185, %cst_88 {dimension_numbers = #tpu.dot_dimension_numbers<[1], [0], [0], [1], [0, 0, 1, 1], [], []>} : vector<16x6xbf16>, vector<6x92xbf16>, vector<16x92xf32> -> vector<16x92xf32>
    %187 = arith.addf %183, %186 : vector<16x92xf32>
    %c0_89 = arith.constant 0 : index
    %c6_90 = arith.constant 6 : index
    %188 = vector.load %arg5[%c0_89, %c6_90] : memref<16x150xbf16, #tpu.memory_space<vmem>>, vector<16x6xbf16>
    %189 = vector.extract_strided_slice %182 {offsets = [0, 1], sizes = [6, 92], strides = [1, 1]} : vector<6x144xbf16> to vector<6x92xbf16>
    %cst_91 = arith.constant dense<0.000000e+00> : vector<16x92xf32>
    %190 = tpu.matmul %188, %189, %cst_91 {dimension_numbers = #tpu.dot_dimension_numbers<[1], [0], [0], [1], [0, 0, 1, 1], [], []>} : vector<16x6xbf16>, vector<6x92xbf16>, vector<16x92xf32> -> vector<16x92xf32>
    %191 = arith.addf %187, %190 : vector<16x92xf32>
    %c0_92 = arith.constant 0 : index
    %c12_93 = arith.constant 12 : index
    %192 = vector.load %arg5[%c0_92, %c12_93] : memref<16x150xbf16, #tpu.memory_space<vmem>>, vector<16x6xbf16>
    %193 = vector.extract_strided_slice %182 {offsets = [0, 2], sizes = [6, 92], strides = [1, 1]} : vector<6x144xbf16> to vector<6x92xbf16>
    %cst_94 = arith.constant dense<0.000000e+00> : vector<16x92xf32>
    %194 = tpu.matmul %192, %193, %cst_94 {dimension_numbers = #tpu.dot_dimension_numbers<[1], [0], [0], [1], [0, 0, 1, 1], [], []>} : vector<16x6xbf16>, vector<6x92xbf16>, vector<16x92xf32> -> vector<16x92xf32>
    %195 = arith.addf %191, %194 : vector<16x92xf32>
    %c0_95 = arith.constant 0 : index
    %c18_96 = arith.constant 18 : index
    %196 = vector.load %arg5[%c0_95, %c18_96] : memref<16x150xbf16, #tpu.memory_space<vmem>>, vector<16x6xbf16>
    %197 = vector.extract_strided_slice %182 {offsets = [0, 3], sizes = [6, 92], strides = [1, 1]} : vector<6x144xbf16> to vector<6x92xbf16>
    %cst_97 = arith.constant dense<0.000000e+00> : vector<16x92xf32>
    %198 = tpu.matmul %196, %197, %cst_97 {dimension_numbers = #tpu.dot_dimension_numbers<[1], [0], [0], [1], [0, 0, 1, 1], [], []>} : vector<16x6xbf16>, vector<6x92xbf16>, vector<16x92xf32> -> vector<16x92xf32>
    %199 = arith.addf %195, %198 : vector<16x92xf32>
    %c0_98 = arith.constant 0 : index
    %c24_99 = arith.constant 24 : index
    %200 = vector.load %arg5[%c0_98, %c24_99] : memref<16x150xbf16, #tpu.memory_space<vmem>>, vector<16x6xbf16>
    %201 = vector.extract_strided_slice %182 {offsets = [0, 4], sizes = [6, 92], strides = [1, 1]} : vector<6x144xbf16> to vector<6x92xbf16>
    %cst_100 = arith.constant dense<0.000000e+00> : vector<16x92xf32>
    %202 = tpu.matmul %200, %201, %cst_100 {dimension_numbers = #tpu.dot_dimension_numbers<[1], [0], [0], [1], [0, 0, 1, 1], [], []>} : vector<16x6xbf16>, vector<6x92xbf16>, vector<16x92xf32> -> vector<16x92xf32>
    %203 = arith.addf %199, %202 : vector<16x92xf32>
    %c0_101 = arith.constant 0 : index
    %c30_102 = arith.constant 30 : index
    %204 = vector.load %arg5[%c0_101, %c30_102] : memref<16x150xbf16, #tpu.memory_space<vmem>>, vector<16x6xbf16>
    %205 = vector.extract_strided_slice %182 {offsets = [0, 12], sizes = [6, 92], strides = [1, 1]} : vector<6x144xbf16> to vector<6x92xbf16>
    %cst_103 = arith.constant dense<0.000000e+00> : vector<16x92xf32>
    %206 = tpu.matmul %204, %205, %cst_103 {dimension_numbers = #tpu.dot_dimension_numbers<[1], [0], [0], [1], [0, 0, 1, 1], [], []>} : vector<16x6xbf16>, vector<6x92xbf16>, vector<16x92xf32> -> vector<16x92xf32>
    %207 = arith.addf %203, %206 : vector<16x92xf32>
    %c0_104 = arith.constant 0 : index
    %c36 = arith.constant 36 : index
    %208 = vector.load %arg5[%c0_104, %c36] : memref<16x150xbf16, #tpu.memory_space<vmem>>, vector<16x6xbf16>
    %209 = vector.extract_strided_slice %182 {offsets = [0, 13], sizes = [6, 92], strides = [1, 1]} : vector<6x144xbf16> to vector<6x92xbf16>
    %cst_105 = arith.constant dense<0.000000e+00> : vector<16x92xf32>
    %210 = tpu.matmul %208, %209, %cst_105 {dimension_numbers = #tpu.dot_dimension_numbers<[1], [0], [0], [1], [0, 0, 1, 1], [], []>} : vector<16x6xbf16>, vector<6x92xbf16>, vector<16x92xf32> -> vector<16x92xf32>
    %211 = arith.addf %207, %210 : vector<16x92xf32>
    %c0_106 = arith.constant 0 : index
    %c42 = arith.constant 42 : index
    %212 = vector.load %arg5[%c0_106, %c42] : memref<16x150xbf16, #tpu.memory_space<vmem>>, vector<16x6xbf16>
    %213 = vector.extract_strided_slice %182 {offsets = [0, 14], sizes = [6, 92], strides = [1, 1]} : vector<6x144xbf16> to vector<6x92xbf16>
    %cst_107 = arith.constant dense<0.000000e+00> : vector<16x92xf32>
    %214 = tpu.matmul %212, %213, %cst_107 {dimension_numbers = #tpu.dot_dimension_numbers<[1], [0], [0], [1], [0, 0, 1, 1], [], []>} : vector<16x6xbf16>, vector<6x92xbf16>, vector<16x92xf32> -> vector<16x92xf32>
    %215 = arith.addf %211, %214 : vector<16x92xf32>
    %c0_108 = arith.constant 0 : index
    %c48 = arith.constant 48 : index
    %216 = vector.load %arg5[%c0_108, %c48] : memref<16x150xbf16, #tpu.memory_space<vmem>>, vector<16x6xbf16>
    %217 = vector.extract_strided_slice %182 {offsets = [0, 15], sizes = [6, 92], strides = [1, 1]} : vector<6x144xbf16> to vector<6x92xbf16>
    %cst_109 = arith.constant dense<0.000000e+00> : vector<16x92xf32>
    %218 = tpu.matmul %216, %217, %cst_109 {dimension_numbers = #tpu.dot_dimension_numbers<[1], [0], [0], [1], [0, 0, 1, 1], [], []>} : vector<16x6xbf16>, vector<6x92xbf16>, vector<16x92xf32> -> vector<16x92xf32>
    %219 = arith.addf %215, %218 : vector<16x92xf32>
    %c0_110 = arith.constant 0 : index
    %c54 = arith.constant 54 : index
    %220 = vector.load %arg5[%c0_110, %c54] : memref<16x150xbf16, #tpu.memory_space<vmem>>, vector<16x6xbf16>
    %221 = vector.extract_strided_slice %182 {offsets = [0, 16], sizes = [6, 92], strides = [1, 1]} : vector<6x144xbf16> to vector<6x92xbf16>
    %cst_111 = arith.constant dense<0.000000e+00> : vector<16x92xf32>
    %222 = tpu.matmul %220, %221, %cst_111 {dimension_numbers = #tpu.dot_dimension_numbers<[1], [0], [0], [1], [0, 0, 1, 1], [], []>} : vector<16x6xbf16>, vector<6x92xbf16>, vector<16x92xf32> -> vector<16x92xf32>
    %223 = arith.addf %219, %222 : vector<16x92xf32>
    %c0_112 = arith.constant 0 : index
    %c60_113 = arith.constant 60 : index
    %224 = vector.load %arg5[%c0_112, %c60_113] : memref<16x150xbf16, #tpu.memory_space<vmem>>, vector<16x6xbf16>
    %225 = vector.extract_strided_slice %182 {offsets = [0, 24], sizes = [6, 92], strides = [1, 1]} : vector<6x144xbf16> to vector<6x92xbf16>
    %cst_114 = arith.constant dense<0.000000e+00> : vector<16x92xf32>
    %226 = tpu.matmul %224, %225, %cst_114 {dimension_numbers = #tpu.dot_dimension_numbers<[1], [0], [0], [1], [0, 0, 1, 1], [], []>} : vector<16x6xbf16>, vector<6x92xbf16>, vector<16x92xf32> -> vector<16x92xf32>
    %227 = arith.addf %223, %226 : vector<16x92xf32>
    %c0_115 = arith.constant 0 : index
    %c66 = arith.constant 66 : index
    %228 = vector.load %arg5[%c0_115, %c66] : memref<16x150xbf16, #tpu.memory_space<vmem>>, vector<16x6xbf16>
    %229 = vector.extract_strided_slice %182 {offsets = [0, 25], sizes = [6, 92], strides = [1, 1]} : vector<6x144xbf16> to vector<6x92xbf16>
    %cst_116 = arith.constant dense<0.000000e+00> : vector<16x92xf32>
    %230 = tpu.matmul %228, %229, %cst_116 {dimension_numbers = #tpu.dot_dimension_numbers<[1], [0], [0], [1], [0, 0, 1, 1], [], []>} : vector<16x6xbf16>, vector<6x92xbf16>, vector<16x92xf32> -> vector<16x92xf32>
    %231 = arith.addf %227, %230 : vector<16x92xf32>
    %c0_117 = arith.constant 0 : index
    %c72 = arith.constant 72 : index
    %232 = vector.load %arg5[%c0_117, %c72] : memref<16x150xbf16, #tpu.memory_space<vmem>>, vector<16x6xbf16>
    %233 = vector.extract_strided_slice %182 {offsets = [0, 26], sizes = [6, 92], strides = [1, 1]} : vector<6x144xbf16> to vector<6x92xbf16>
    %cst_118 = arith.constant dense<0.000000e+00> : vector<16x92xf32>
    %234 = tpu.matmul %232, %233, %cst_118 {dimension_numbers = #tpu.dot_dimension_numbers<[1], [0], [0], [1], [0, 0, 1, 1], [], []>} : vector<16x6xbf16>, vector<6x92xbf16>, vector<16x92xf32> -> vector<16x92xf32>
    %235 = arith.addf %231, %234 : vector<16x92xf32>
    %c0_119 = arith.constant 0 : index
    %c78 = arith.constant 78 : index
    %236 = vector.load %arg5[%c0_119, %c78] : memref<16x150xbf16, #tpu.memory_space<vmem>>, vector<16x6xbf16>
    %237 = vector.extract_strided_slice %182 {offsets = [0, 27], sizes = [6, 92], strides = [1, 1]} : vector<6x144xbf16> to vector<6x92xbf16>
    %cst_120 = arith.constant dense<0.000000e+00> : vector<16x92xf32>
    %238 = tpu.matmul %236, %237, %cst_120 {dimension_numbers = #tpu.dot_dimension_numbers<[1], [0], [0], [1], [0, 0, 1, 1], [], []>} : vector<16x6xbf16>, vector<6x92xbf16>, vector<16x92xf32> -> vector<16x92xf32>
    %239 = arith.addf %235, %238 : vector<16x92xf32>
    %c0_121 = arith.constant 0 : index
    %c84_122 = arith.constant 84 : index
    %240 = vector.load %arg5[%c0_121, %c84_122] : memref<16x150xbf16, #tpu.memory_space<vmem>>, vector<16x6xbf16>
    %241 = vector.extract_strided_slice %182 {offsets = [0, 28], sizes = [6, 92], strides = [1, 1]} : vector<6x144xbf16> to vector<6x92xbf16>
    %cst_123 = arith.constant dense<0.000000e+00> : vector<16x92xf32>
    %242 = tpu.matmul %240, %241, %cst_123 {dimension_numbers = #tpu.dot_dimension_numbers<[1], [0], [0], [1], [0, 0, 1, 1], [], []>} : vector<16x6xbf16>, vector<6x92xbf16>, vector<16x92xf32> -> vector<16x92xf32>
    %243 = arith.addf %239, %242 : vector<16x92xf32>
    %c0_124 = arith.constant 0 : index
    %c90 = arith.constant 90 : index
    %244 = vector.load %arg5[%c0_124, %c90] : memref<16x150xbf16, #tpu.memory_space<vmem>>, vector<16x6xbf16>
    %245 = vector.extract_strided_slice %182 {offsets = [0, 36], sizes = [6, 92], strides = [1, 1]} : vector<6x144xbf16> to vector<6x92xbf16>
    %cst_125 = arith.constant dense<0.000000e+00> : vector<16x92xf32>
    %246 = tpu.matmul %244, %245, %cst_125 {dimension_numbers = #tpu.dot_dimension_numbers<[1], [0], [0], [1], [0, 0, 1, 1], [], []>} : vector<16x6xbf16>, vector<6x92xbf16>, vector<16x92xf32> -> vector<16x92xf32>
    %247 = arith.addf %243, %246 : vector<16x92xf32>
    %c0_126 = arith.constant 0 : index
    %c96 = arith.constant 96 : index
    %248 = vector.load %arg5[%c0_126, %c96] : memref<16x150xbf16, #tpu.memory_space<vmem>>, vector<16x6xbf16>
    %249 = vector.extract_strided_slice %182 {offsets = [0, 37], sizes = [6, 92], strides = [1, 1]} : vector<6x144xbf16> to vector<6x92xbf16>
    %cst_127 = arith.constant dense<0.000000e+00> : vector<16x92xf32>
    %250 = tpu.matmul %248, %249, %cst_127 {dimension_numbers = #tpu.dot_dimension_numbers<[1], [0], [0], [1], [0, 0, 1, 1], [], []>} : vector<16x6xbf16>, vector<6x92xbf16>, vector<16x92xf32> -> vector<16x92xf32>
    %251 = arith.addf %247, %250 : vector<16x92xf32>
    %c0_128 = arith.constant 0 : index
    %c102 = arith.constant 102 : index
    %252 = vector.load %arg5[%c0_128, %c102] : memref<16x150xbf16, #tpu.memory_space<vmem>>, vector<16x6xbf16>
    %253 = vector.extract_strided_slice %182 {offsets = [0, 38], sizes = [6, 92], strides = [1, 1]} : vector<6x144xbf16> to vector<6x92xbf16>
    %cst_129 = arith.constant dense<0.000000e+00> : vector<16x92xf32>
    %254 = tpu.matmul %252, %253, %cst_129 {dimension_numbers = #tpu.dot_dimension_numbers<[1], [0], [0], [1], [0, 0, 1, 1], [], []>} : vector<16x6xbf16>, vector<6x92xbf16>, vector<16x92xf32> -> vector<16x92xf32>
    %255 = arith.addf %251, %254 : vector<16x92xf32>
    %c0_130 = arith.constant 0 : index
    %c108 = arith.constant 108 : index
    %256 = vector.load %arg5[%c0_130, %c108] : memref<16x150xbf16, #tpu.memory_space<vmem>>, vector<16x6xbf16>
    %257 = vector.extract_strided_slice %182 {offsets = [0, 39], sizes = [6, 92], strides = [1, 1]} : vector<6x144xbf16> to vector<6x92xbf16>
    %cst_131 = arith.constant dense<0.000000e+00> : vector<16x92xf32>
    %258 = tpu.matmul %256, %257, %cst_131 {dimension_numbers = #tpu.dot_dimension_numbers<[1], [0], [0], [1], [0, 0, 1, 1], [], []>} : vector<16x6xbf16>, vector<6x92xbf16>, vector<16x92xf32> -> vector<16x92xf32>
    %259 = arith.addf %255, %258 : vector<16x92xf32>
    %c0_132 = arith.constant 0 : index
    %c114_133 = arith.constant 114 : index
    %260 = vector.load %arg5[%c0_132, %c114_133] : memref<16x150xbf16, #tpu.memory_space<vmem>>, vector<16x6xbf16>
    %261 = vector.extract_strided_slice %182 {offsets = [0, 40], sizes = [6, 92], strides = [1, 1]} : vector<6x144xbf16> to vector<6x92xbf16>
    %cst_134 = arith.constant dense<0.000000e+00> : vector<16x92xf32>
    %262 = tpu.matmul %260, %261, %cst_134 {dimension_numbers = #tpu.dot_dimension_numbers<[1], [0], [0], [1], [0, 0, 1, 1], [], []>} : vector<16x6xbf16>, vector<6x92xbf16>, vector<16x92xf32> -> vector<16x92xf32>
    %263 = arith.addf %259, %262 : vector<16x92xf32>
    %c0_135 = arith.constant 0 : index
    %c120 = arith.constant 120 : index
    %264 = vector.load %arg5[%c0_135, %c120] : memref<16x150xbf16, #tpu.memory_space<vmem>>, vector<16x6xbf16>
    %265 = vector.extract_strided_slice %182 {offsets = [0, 48], sizes = [6, 92], strides = [1, 1]} : vector<6x144xbf16> to vector<6x92xbf16>
    %cst_136 = arith.constant dense<0.000000e+00> : vector<16x92xf32>
    %266 = tpu.matmul %264, %265, %cst_136 {dimension_numbers = #tpu.dot_dimension_numbers<[1], [0], [0], [1], [0, 0, 1, 1], [], []>} : vector<16x6xbf16>, vector<6x92xbf16>, vector<16x92xf32> -> vector<16x92xf32>
    %267 = arith.addf %263, %266 : vector<16x92xf32>
    %c0_137 = arith.constant 0 : index
    %c126 = arith.constant 126 : index
    %268 = vector.load %arg5[%c0_137, %c126] : memref<16x150xbf16, #tpu.memory_space<vmem>>, vector<16x6xbf16>
    %269 = vector.extract_strided_slice %182 {offsets = [0, 49], sizes = [6, 92], strides = [1, 1]} : vector<6x144xbf16> to vector<6x92xbf16>
    %cst_138 = arith.constant dense<0.000000e+00> : vector<16x92xf32>
    %270 = tpu.matmul %268, %269, %cst_138 {dimension_numbers = #tpu.dot_dimension_numbers<[1], [0], [0], [1], [0, 0, 1, 1], [], []>} : vector<16x6xbf16>, vector<6x92xbf16>, vector<16x92xf32> -> vector<16x92xf32>
    %271 = arith.addf %267, %270 : vector<16x92xf32>
    %c0_139 = arith.constant 0 : index
    %c132 = arith.constant 132 : index
    %272 = vector.load %arg5[%c0_139, %c132] : memref<16x150xbf16, #tpu.memory_space<vmem>>, vector<16x6xbf16>
    %273 = vector.extract_strided_slice %182 {offsets = [0, 50], sizes = [6, 92], strides = [1, 1]} : vector<6x144xbf16> to vector<6x92xbf16>
    %cst_140 = arith.constant dense<0.000000e+00> : vector<16x92xf32>
    %274 = tpu.matmul %272, %273, %cst_140 {dimension_numbers = #tpu.dot_dimension_numbers<[1], [0], [0], [1], [0, 0, 1, 1], [], []>} : vector<16x6xbf16>, vector<6x92xbf16>, vector<16x92xf32> -> vector<16x92xf32>
    %275 = arith.addf %271, %274 : vector<16x92xf32>
    %c0_141 = arith.constant 0 : index
    %c138 = arith.constant 138 : index
    %276 = vector.load %arg5[%c0_141, %c138] : memref<16x150xbf16, #tpu.memory_space<vmem>>, vector<16x6xbf16>
    %277 = vector.extract_strided_slice %182 {offsets = [0, 51], sizes = [6, 92], strides = [1, 1]} : vector<6x144xbf16> to vector<6x92xbf16>
    %cst_142 = arith.constant dense<0.000000e+00> : vector<16x92xf32>
    %278 = tpu.matmul %276, %277, %cst_142 {dimension_numbers = #tpu.dot_dimension_numbers<[1], [0], [0], [1], [0, 0, 1, 1], [], []>} : vector<16x6xbf16>, vector<6x92xbf16>, vector<16x92xf32> -> vector<16x92xf32>
    %279 = arith.addf %275, %278 : vector<16x92xf32>
    %c0_143 = arith.constant 0 : index
    %c144 = arith.constant 144 : index
    %280 = vector.load %arg5[%c0_143, %c144] : memref<16x150xbf16, #tpu.memory_space<vmem>>, vector<16x6xbf16>
    %281 = vector.extract_strided_slice %182 {offsets = [0, 52], sizes = [6, 92], strides = [1, 1]} : vector<6x144xbf16> to vector<6x92xbf16>
    %cst_144 = arith.constant dense<0.000000e+00> : vector<16x92xf32>
    %282 = tpu.matmul %280, %281, %cst_144 {dimension_numbers = #tpu.dot_dimension_numbers<[1], [0], [0], [1], [0, 0, 1, 1], [], []>} : vector<16x6xbf16>, vector<6x92xbf16>, vector<16x92xf32> -> vector<16x92xf32>
    %283 = arith.addf %279, %282 : vector<16x92xf32>
    %284 = arith.truncf %283 : vector<16x92xf32> to vector<16x92xbf16>
    %c0_145 = arith.constant 0 : index
    %c0_146 = arith.constant 0 : index
    %285 = vector.load %arg7[%c0_145, %c0_146] : memref<92x256xbf16, #tpu.memory_space<vmem>>, vector<92x256xbf16>
    %cst_147 = arith.constant dense<0.000000e+00> : vector<16x256xf32>
    %286 = tpu.matmul %284, %285, %cst_147 {dimension_numbers = #tpu.dot_dimension_numbers<[1], [0], [0], [1], [0, 0, 1, 1], [], []>} : vector<16x92xbf16>, vector<92x256xbf16>, vector<16x256xf32> -> vector<16x256xf32>
    %c0_148 = arith.constant 0 : index
    %c0_149 = arith.constant 0 : index
    %287 = vector.load %arg6[%c0_148, %c0_149] : memref<16x1xf32, #tpu.memory_space<vmem>>, vector<16x1xf32>
    %288 = vector.broadcast %287 : vector<16x1xf32> to vector<16x256xf32>
    %289 = arith.addf %286, %288 : vector<16x256xf32>
    %290 = tpu.iota {dimensions = array<i32: 0>} : vector<16x256xi32>
    %291 = tpu.iota {dimensions = array<i32: 1>} : vector<16x256xi32>
    %c16_i32 = arith.constant 16 : i32
    %292 = vector.broadcast %c16_i32 : i32 to vector<16x256xi32>
    %293 = arith.muli %290, %292 : vector<16x256xi32>
    %294 = arith.cmpi sge, %291, %293 : vector<16x256xi32>
    %c16_i32_150 = arith.constant 16 : i32
    %295 = vector.broadcast %c16_i32_150 : i32 to vector<16x256xi32>
    %296 = arith.muli %290, %295 : vector<16x256xi32>
    %c16_i32_151 = arith.constant 16 : i32
    %297 = vector.broadcast %c16_i32_151 : i32 to vector<16x256xi32>
    %298 = arith.addi %296, %297 : vector<16x256xi32>
    %299 = arith.cmpi slt, %291, %298 : vector<16x256xi32>
    %300 = arith.andi %294, %299 : vector<16x256xi1>
    %cst_152 = arith.constant 0.000000e+00 : f32
    %301 = vector.broadcast %cst_152 : f32 to vector<16x256xf32>
    %302 = arith.select %300, %289, %301 : vector<16x256xi1>, vector<16x256xf32>
    %cst_153 = arith.constant dense<0.000000e+00> : vector<256xf32>
    %303 = vector.multi_reduction <add>, %302, %cst_153 [0] : vector<16x256xf32> to vector<256xf32>
    %304 = vector.shape_cast %303 : vector<256xf32> to vector<1x256xf32>
    %305 = arith.truncf %304 : vector<1x256xf32> to vector<1x256xbf16>
    %c0_154 = arith.constant 0 : index
    %c0_155 = arith.constant 0 : index
    %306 = vector.load %arg8[%c0_154, %c0_155] : memref<256x120xbf16, #tpu.memory_space<vmem>>, vector<256x120xbf16>
    %cst_156 = arith.constant dense<0.000000e+00> : vector<1x120xf32>
    %307 = tpu.matmul %305, %306, %cst_156 {dimension_numbers = #tpu.dot_dimension_numbers<[1], [0], [0], [1], [0, 0, 1, 1], [], []>} : vector<1x256xbf16>, vector<256x120xbf16>, vector<1x120xf32> -> vector<1x120xf32>
    %c0_157 = arith.constant 0 : index
    %c0_158 = arith.constant 0 : index
    %308 = vector.load %arg9[%c0_157, %c0_158] : memref<1x120xf32, #tpu.memory_space<vmem>>, vector<1x120xf32>
    %309 = arith.addf %307, %308 : vector<1x120xf32>
    %310 = arith.truncf %309 : vector<1x120xf32> to vector<1x120xbf16>
    %c0_159 = arith.constant 0 : index
    %c0_160 = arith.constant 0 : index
    %311 = vector.load %arg10[%c0_159, %c0_160] : memref<120x84xbf16, #tpu.memory_space<vmem>>, vector<120x84xbf16>
    %cst_161 = arith.constant dense<0.000000e+00> : vector<1x84xf32>
    %312 = tpu.matmul %310, %311, %cst_161 {dimension_numbers = #tpu.dot_dimension_numbers<[1], [0], [0], [1], [0, 0, 1, 1], [], []>} : vector<1x120xbf16>, vector<120x84xbf16>, vector<1x84xf32> -> vector<1x84xf32>
    %c0_162 = arith.constant 0 : index
    %c0_163 = arith.constant 0 : index
    %313 = vector.load %arg11[%c0_162, %c0_163] : memref<1x84xf32, #tpu.memory_space<vmem>>, vector<1x84xf32>
    %314 = arith.addf %312, %313 : vector<1x84xf32>
    %315 = arith.truncf %314 : vector<1x84xf32> to vector<1x84xbf16>
    %c0_164 = arith.constant 0 : index
    %c0_165 = arith.constant 0 : index
    %316 = vector.load %arg12[%c0_164, %c0_165] : memref<84x128xbf16, #tpu.memory_space<vmem>>, vector<84x128xbf16>
    %cst_166 = arith.constant dense<0.000000e+00> : vector<1x128xf32>
    %317 = tpu.matmul %315, %316, %cst_166 {dimension_numbers = #tpu.dot_dimension_numbers<[1], [0], [0], [1], [0, 0, 1, 1], [], []>} : vector<1x84xbf16>, vector<84x128xbf16>, vector<1x128xf32> -> vector<1x128xf32>
    %c0_167 = arith.constant 0 : index
    %c0_168 = arith.constant 0 : index
    %318 = vector.load %arg13[%c0_167, %c0_168] : memref<1x128xf32, #tpu.memory_space<vmem>>, vector<1x128xf32>
    %319 = arith.addf %317, %318 : vector<1x128xf32>
    %c0_169 = arith.constant 0 : index
    %c0_170 = arith.constant 0 : index
    %c0_171 = arith.constant 0 : index
    %320 = vector.load %arg14[%c0_169, %c0_170, %c0_171] : memref<1x1x128xf32, #tpu.memory_space<vmem>>, vector<1x1x128xf32>
    %321 = vector.shape_cast %320 : vector<1x1x128xf32> to vector<1x128xf32>
    %322 = vector.shape_cast %319 : vector<1x128xf32> to vector<1x1x128xf32>
    tpu.vector_store %arg14[%c0_169, %c0_170, %c0_171], %322 {strides = array<i32>} : memref<1x1x128xf32, #tpu.memory_space<vmem>>, vector<1x1x128xf32>,
    return
  }
  func.func @transform_0(%arg0: i32) -> (i32, i32, i32) {
    %c0_i32 = arith.constant 0 : i32
    %c0_i32_0 = arith.constant 0 : i32
    %c0_i32_1 = arith.constant 0 : i32
    return %arg0, %c0_i32, %c0_i32_0 : i32, i32, i32
  }
  func.func @transform_1(%arg0: i32) -> (i32, i32) {
    %c0_i32 = arith.constant 0 : i32
    %c0_i32_0 = arith.constant 0 : i32
    %c0_i32_1 = arith.constant 0 : i32
    return %c0_i32, %c0_i32_0 : i32, i32
  }
  func.func @transform_2(%arg0: i32) -> (i32, i32) {
    %c0_i32 = arith.constant 0 : i32
    %c0_i32_0 = arith.constant 0 : i32
    %c0_i32_1 = arith.constant 0 : i32
    return %c0_i32, %c0_i32_0 : i32, i32
  }
  func.func @transform_3(%arg0: i32) -> (i32, i32) {
    %c0_i32 = arith.constant 0 : i32
    %c0_i32_0 = arith.constant 0 : i32
    %c0_i32_1 = arith.constant 0 : i32
    return %c0_i32, %c0_i32_0 : i32, i32
  }
  func.func @transform_4(%arg0: i32) -> (i32, i32) {
    %c0_i32 = arith.constant 0 : i32
    %c0_i32_0 = arith.constant 0 : i32
    %c0_i32_1 = arith.constant 0 : i32
    return %c0_i32, %c0_i32_0 : i32, i32
  }
  func.func @transform_5(%arg0: i32) -> (i32, i32) {
    %c0_i32 = arith.constant 0 : i32
    %c0_i32_0 = arith.constant 0 : i32
    %c0_i32_1 = arith.constant 0 : i32
    return %c0_i32, %c0_i32_0 : i32, i32
  }
  func.func @transform_6(%arg0: i32) -> (i32, i32) {
    %c0_i32 = arith.constant 0 : i32
    %c0_i32_0 = arith.constant 0 : i32
    %c0_i32_1 = arith.constant 0 : i32
    return %c0_i32, %c0_i32_0 : i32, i32
  }
  func.func @transform_7(%arg0: i32) -> (i32, i32) {
    %c0_i32 = arith.constant 0 : i32
    %c0_i32_0 = arith.constant 0 : i32
    %c0_i32_1 = arith.constant 0 : i32
    return %c0_i32, %c0_i32_0 : i32, i32
  }
  func.func @transform_8(%arg0: i32) -> (i32, i32) {
    %c0_i32 = arith.constant 0 : i32
    %c0_i32_0 = arith.constant 0 : i32
    %c0_i32_1 = arith.constant 0 : i32
    return %c0_i32, %c0_i32_0 : i32, i32
  }
  func.func @transform_9(%arg0: i32) -> (i32, i32) {
    %c0_i32 = arith.constant 0 : i32
    %c0_i32_0 = arith.constant 0 : i32
    %c0_i32_1 = arith.constant 0 : i32
    return %c0_i32, %c0_i32_0 : i32, i32
  }
  func.func @transform_10(%arg0: i32) -> (i32, i32) {
    %c0_i32 = arith.constant 0 : i32
    %c0_i32_0 = arith.constant 0 : i32
    %c0_i32_1 = arith.constant 0 : i32
    return %c0_i32, %c0_i32_0 : i32, i32
  }
  func.func @transform_11(%arg0: i32) -> (i32, i32) {
    %c0_i32 = arith.constant 0 : i32
    %c0_i32_0 = arith.constant 0 : i32
    %c0_i32_1 = arith.constant 0 : i32
    return %c0_i32, %c0_i32_0 : i32, i32
  }
  func.func @transform_12(%arg0: i32) -> (i32, i32) {
    %c0_i32 = arith.constant 0 : i32
    %c0_i32_0 = arith.constant 0 : i32
    %c0_i32_1 = arith.constant 0 : i32
    return %c0_i32, %c0_i32_0 : i32, i32
  }
  func.func @transform_13(%arg0: i32) -> (i32, i32, i32) {
    %c0_i32 = arith.constant 0 : i32
    %c0_i32_0 = arith.constant 0 : i32
    %c0_i32_1 = arith.constant 0 : i32
    return %arg0, %c0_i32, %c0_i32_0 : i32, i32, i32
  }
}

</mosaic_0001>

<llo_original>
// kernel: lenet_forward.1
$region0: #{lenet_forward.1}
  #allocation0 [shape = 'u32[]', space=smem, size = 0x4, offset = 0x4, fixed_abs, tag = 'smem constant byte address 0x4 - core index']
  #allocation1 [shape = 'u32[144,128]{1,0:T(1,128)}', space=vmem, size = 0x12000, scoped, tag = 'internal scratch']
  %s0 = inlined_call_operand.vmem [shape: f32[2,1,784], index: 0, kind: input, shape index: {}]
  %s1 = inlined_call_operand.vmem [shape: f32[6,25], index: 1, kind: input, shape index: {}]
  %s2 = inlined_call_operand.vmem [shape: f32[6,1], index: 2, kind: input, shape index: {}]
  %s3 = inlined_call_operand.vmem [shape: bf16[668,144], index: 3, kind: input, shape index: {}]
  %s4 = inlined_call_operand.vmem [shape: bf16[16,150], index: 4, kind: input, shape index: {}]
  %s5 = inlined_call_operand.vmem [shape: f32[16,1], index: 5, kind: input, shape index: {}]
  %s6 = inlined_call_operand.vmem [shape: bf16[92,256], index: 6, kind: input, shape index: {}]
  %s7 = inlined_call_operand.vmem [shape: bf16[256,120], index: 7, kind: input, shape index: {}]
  %s8 = inlined_call_operand.vmem [shape: f32[1,120], index: 8, kind: input, shape index: {}]
  %s9 = inlined_call_operand.vmem [shape: bf16[120,84], index: 9, kind: input, shape index: {}]
  %s10 = inlined_call_operand.vmem [shape: f32[1,84], index: 10, kind: input, shape index: {}]
  %s11 = inlined_call_operand.vmem [shape: bf16[84,128], index: 11, kind: input, shape index: {}]
  %s12 = inlined_call_operand.vmem [shape: f32[1,128], index: 12, kind: input, shape index: {}]
  %s13 = inlined_call_operand.hbm [shape: f32[2,1,128], index: 13, kind: output, shape index: {}]
  %s14 = sld [smem:[#allocation0]]
  $region85: #{lenet_forward.1} parent=0
    _
  %s16 = ssub.s32 1, %s14
  %s17 = scalar_select 0, %s16, %s14
  $region1: #{lenet_forward.1} parent=0
    #allocation2 [shape = 'u8[1024]{0}', space=vmem, size = 0x400, scoped, tag = 'output window, operand 0']
    #allocation3 [shape = 's32[2]{0}', space=sflag, size = 0x8, scoped, tag = 'scoped memory for lenet_forward.1']
    %18 = vsyncpa [#allocation3], 0
    %s19 = scalar_lea.sflag [#allocation3], 1
    %20 = vsyncpa %s19, 0
    loop: start=0, step=1, limit=4
    $region2: #{lenet_forward.1} parent=1 // loop_pre_header
      _
    $region3: #{lenet_forward.1} parent=1 // loop_header
      %s22 = sphi 0, %s26
      %p23 = scmp.ge.s32.totalorder %s22, 4
      %s32 = sphi 0, %s34
      %s35 = sphi 0, %s32
      %s36 = sphi 0, %s35
      %s52 = sphi 0, %s36
      %s56 = sphi 0, %s56
      %s58 = sphi 0, %s56
      %s59 = sphi 0, %s58
      %s73 = sphi 0, %s59
      %s77 = sphi 0, %s77
      %s79 = sphi 0, %s77
      %s80 = sphi 0, %s79
      %s94 = sphi 0, %s80
      %s98 = sphi 0, %s98
      %s100 = sphi 0, %s98
      %s101 = sphi 0, %s100
      %s115 = sphi 0, %s101
      %s119 = sphi 0, %s119
      %s121 = sphi 0, %s119
      %s122 = sphi 0, %s121
      %s136 = sphi 0, %s122
      %s140 = sphi 0, %s140
      %s142 = sphi 0, %s140
      %s143 = sphi 0, %s142
      %s157 = sphi 0, %s143
      %s161 = sphi 0, %s161
      %s163 = sphi 0, %s161
      %s164 = sphi 0, %s163
      %s178 = sphi 0, %s164
      %s182 = sphi 0, %s182
      %s184 = sphi 0, %s182
      %s185 = sphi 0, %s184
      %s199 = sphi 0, %s185
      %s203 = sphi 0, %s203
      %s205 = sphi 0, %s203
      %s206 = sphi 0, %s205
      %s220 = sphi 0, %s206
      %s224 = sphi 0, %s224
      %s226 = sphi 0, %s224
      %s227 = sphi 0, %s226
      %s241 = sphi 0, %s227
      %s245 = sphi 0, %s245
      %s247 = sphi 0, %s245
      %s248 = sphi 0, %s247
      %s262 = sphi 0, %s248
      %s266 = sphi 0, %s266
      %s268 = sphi 0, %s266
      %s269 = sphi 0, %s268
      %s283 = sphi 0, %s269
      %s287 = sphi 0, %s287
      %s289 = sphi 0, %s287
      %s290 = sphi 0, %s289
      %s304 = sphi 0, %s290
      %s310 = sphi 0, %s312
      %s313 = sphi 0, %s310
      %s314 = sphi 0, %s313
      %s330 = sphi 0, %s314
    $region4: #{lenet_forward.1} parent=1 // loop_header_branch
      %25 = sbr.rel (%p23) target = $region8
    $region5: #{lenet_forward.1} parent=1 // loop_body
      %s27 = ssub.s32 %s22, 1
      %s28 = ssub.s32 %s22, 2
      %s29 = sadd.s32 %s22, 1
      %s30 = ssub.s32 %s22, %s29
      %p31 = scmp.eq.s32.totalorder %s30, 0
      %s33 = sadd.s32 %s32, 1
      %s34 = scalar_select %p31, %s32, %s33
      %p37 = pneg %p31
      %p38 = scmp.eq.s32.totalorder %s22, 1
      %p39 = por %p37, %p38
      %p40 = scmp.ne.s32.totalorder %s32, %s35
      %p41 = scmp.eq.s32.totalorder %s22, 0
      %p42 = por %p40, %p41
      %p43 = scmp.ne.s32.totalorder %s32, %s35
      %p44 = scmp.eq.s32.totalorder %s27, 1
      %p45 = por %p43, %p44
      %p46 = scmp.ne.s32.totalorder %s35, %s36
      %p47 = scmp.eq.s32.totalorder %s27, 0
      %p48 = por %p46, %p47
      %p49 = scmp.ne.s32.totalorder %s35, %s36
      %p50 = scmp.eq.s32.totalorder %s28, 1
      %p51 = por %p49, %p50
      %p53 = scmp.ne.s32.totalorder %s36, %s52
      %p54 = scmp.eq.s32.totalorder %s28, 0
      %p55 = por %p53, %p54
      %s57 = sadd.s32 %s56, 1
      %p60 = scmp.eq.s32.totalorder %s22, 1
      %p61 = scmp.ne.s32.totalorder %s56, %s58
      %p62 = scmp.eq.s32.totalorder %s22, 0
      %p63 = por %p61, %p62
      %p64 = scmp.ne.s32.totalorder %s56, %s58
      %p65 = scmp.eq.s32.totalorder %s27, 1
      %p66 = por %p64, %p65
      %p67 = scmp.ne.s32.totalorder %s58, %s59
      %p68 = scmp.eq.s32.totalorder %s27, 0
      %p69 = por %p67, %p68
      %p70 = scmp.ne.s32.totalorder %s58, %s59
      %p71 = scmp.eq.s32.totalorder %s28, 1
      %p72 = por %p70, %p71
      %p74 = scmp.ne.s32.totalorder %s59, %s73
      %p75 = scmp.eq.s32.totalorder %s28, 0
      %p76 = por %p74, %p75
      %s78 = sadd.s32 %s77, 1
      %p81 = scmp.eq.s32.totalorder %s22, 1
      %p82 = scmp.ne.s32.totalorder %s77, %s79
      %p83 = scmp.eq.s32.totalorder %s22, 0
      %p84 = por %p82, %p83
      %p85 = scmp.ne.s32.totalorder %s77, %s79
      %p86 = scmp.eq.s32.totalorder %s27, 1
      %p87 = por %p85, %p86
      %p88 = scmp.ne.s32.totalorder %s79, %s80
      %p89 = scmp.eq.s32.totalorder %s27, 0
      %p90 = por %p88, %p89
      %p91 = scmp.ne.s32.totalorder %s79, %s80
      %p92 = scmp.eq.s32.totalorder %s28, 1
      %p93 = por %p91, %p92
      %p95 = scmp.ne.s32.totalorder %s80, %s94
      %p96 = scmp.eq.s32.totalorder %s28, 0
      %p97 = por %p95, %p96
      %s99 = sadd.s32 %s98, 1
      %p102 = scmp.eq.s32.totalorder %s22, 1
      %p103 = scmp.ne.s32.totalorder %s98, %s100
      %p104 = scmp.eq.s32.totalorder %s22, 0
      %p105 = por %p103, %p104
      %p106 = scmp.ne.s32.totalorder %s98, %s100
      %p107 = scmp.eq.s32.totalorder %s27, 1
      %p108 = por %p106, %p107
      %p109 = scmp.ne.s32.totalorder %s100, %s101
      %p110 = scmp.eq.s32.totalorder %s27, 0
      %p111 = por %p109, %p110
      %p112 = scmp.ne.s32.totalorder %s100, %s101
      %p113 = scmp.eq.s32.totalorder %s28, 1
      %p114 = por %p112, %p113
      %p116 = scmp.ne.s32.totalorder %s101, %s115
      %p117 = scmp.eq.s32.totalorder %s28, 0
      %p118 = por %p116, %p117
      %s120 = sadd.s32 %s119, 1
      %p123 = scmp.eq.s32.totalorder %s22, 1
      %p124 = scmp.ne.s32.totalorder %s119, %s121
      %p125 = scmp.eq.s32.totalorder %s22, 0
      %p126 = por %p124, %p125
      %p127 = scmp.ne.s32.totalorder %s119, %s121
      %p128 = scmp.eq.s32.totalorder %s27, 1
      %p129 = por %p127, %p128
      %p130 = scmp.ne.s32.totalorder %s121, %s122
      %p131 = scmp.eq.s32.totalorder %s27, 0
      %p132 = por %p130, %p131
      %p133 = scmp.ne.s32.totalorder %s121, %s122
      %p134 = scmp.eq.s32.totalorder %s28, 1
      %p135 = por %p133, %p134
      %p137 = scmp.ne.s32.totalorder %s122, %s136
      %p138 = scmp.eq.s32.totalorder %s28, 0
      %p139 = por %p137, %p138
      %s141 = sadd.s32 %s140, 1
      %p144 = scmp.eq.s32.totalorder %s22, 1
      %p145 = scmp.ne.s32.totalorder %s140, %s142
      %p146 = scmp.eq.s32.totalorder %s22, 0
      %p147 = por %p145, %p146
      %p148 = scmp.ne.s32.totalorder %s140, %s142
      %p149 = scmp.eq.s32.totalorder %s27, 1
      %p150 = por %p148, %p149
      %p151 = scmp.ne.s32.totalorder %s142, %s143
      %p152 = scmp.eq.s32.totalorder %s27, 0
      %p153 = por %p151, %p152
      %p154 = scmp.ne.s32.totalorder %s142, %s143
      %p155 = scmp.eq.s32.totalorder %s28, 1
      %p156 = por %p154, %p155
      %p158 = scmp.ne.s32.totalorder %s143, %s157
      %p159 = scmp.eq.s32.totalorder %s28, 0
      %p160 = por %p158, %p159
      %s162 = sadd.s32 %s161, 1
      %p165 = scmp.eq.s32.totalorder %s22, 1
      %p166 = scmp.ne.s32.totalorder %s161, %s163
      %p167 = scmp.eq.s32.totalorder %s22, 0
      %p168 = por %p166, %p167
      %p169 = scmp.ne.s32.totalorder %s161, %s163
      %p170 = scmp.eq.s32.totalorder %s27, 1
      %p171 = por %p169, %p170
      %p172 = scmp.ne.s32.totalorder %s163, %s164
      %p173 = scmp.eq.s32.totalorder %s27, 0
      %p174 = por %p172, %p173
      %p175 = scmp.ne.s32.totalorder %s163, %s164
      %p176 = scmp.eq.s32.totalorder %s28, 1
      %p177 = por %p175, %p176
      %p179 = scmp.ne.s32.totalorder %s164, %s178
      %p180 = scmp.eq.s32.totalorder %s28, 0
      %p181 = por %p179, %p180
      %s183 = sadd.s32 %s182, 1
      %p186 = scmp.eq.s32.totalorder %s22, 1
      %p187 = scmp.ne.s32.totalorder %s182, %s184
      %p188 = scmp.eq.s32.totalorder %s22, 0
      %p189 = por %p187, %p188
      %p190 = scmp.ne.s32.totalorder %s182, %s184
      %p191 = scmp.eq.s32.totalorder %s27, 1
      %p192 = por %p190, %p191
      %p193 = scmp.ne.s32.totalorder %s184, %s185
      %p194 = scmp.eq.s32.totalorder %s27, 0
      %p195 = por %p193, %p194
      %p196 = scmp.ne.s32.totalorder %s184, %s185
      %p197 = scmp.eq.s32.totalorder %s28, 1
      %p198 = por %p196, %p197
      %p200 = scmp.ne.s32.totalorder %s185, %s199
      %p201 = scmp.eq.s32.totalorder %s28, 0
      %p202 = por %p200, %p201
      %s204 = sadd.s32 %s203, 1
      %p207 = scmp.eq.s32.totalorder %s22, 1
      %p208 = scmp.ne.s32.totalorder %s203, %s205
      %p209 = scmp.eq.s32.totalorder %s22, 0
      %p210 = por %p208, %p209
      %p211 = scmp.ne.s32.totalorder %s203, %s205
      %p212 = scmp.eq.s32.totalorder %s27, 1
      %p213 = por %p211, %p212
      %p214 = scmp.ne.s32.totalorder %s205, %s206
      %p215 = scmp.eq.s32.totalorder %s27, 0
      %p216 = por %p214, %p215
      %p217 = scmp.ne.s32.totalorder %s205, %s206
      %p218 = scmp.eq.s32.totalorder %s28, 1
      %p219 = por %p217, %p218
      %p221 = scmp.ne.s32.totalorder %s206, %s220
      %p222 = scmp.eq.s32.totalorder %s28, 0
      %p223 = por %p221, %p222
      %s225 = sadd.s32 %s224, 1
      %p228 = scmp.eq.s32.totalorder %s22, 1
      %p229 = scmp.ne.s32.totalorder %s224, %s226
      %p230 = scmp.eq.s32.totalorder %s22, 0
      %p231 = por %p229, %p230
      %p232 = scmp.ne.s32.totalorder %s224, %s226
      %p233 = scmp.eq.s32.totalorder %s27, 1
      %p234 = por %p232, %p233
      %p235 = scmp.ne.s32.totalorder %s226, %s227
      %p236 = scmp.eq.s32.totalorder %s27, 0
      %p237 = por %p235, %p236
      %p238 = scmp.ne.s32.totalorder %s226, %s227
      %p239 = scmp.eq.s32.totalorder %s28, 1
      %p240 = por %p238, %p239
      %p242 = scmp.ne.s32.totalorder %s227, %s241
      %p243 = scmp.eq.s32.totalorder %s28, 0
      %p244 = por %p242, %p243
      %s246 = sadd.s32 %s245, 1
      %p249 = scmp.eq.s32.totalorder %s22, 1
      %p250 = scmp.ne.s32.totalorder %s245, %s247
      %p251 = scmp.eq.s32.totalorder %s22, 0
      %p252 = por %p250, %p251
      %p253 = scmp.ne.s32.totalorder %s245, %s247
      %p254 = scmp.eq.s32.totalorder %s27, 1
      %p255 = por %p253, %p254
      %p256 = scmp.ne.s32.totalorder %s247, %s248
      %p257 = scmp.eq.s32.totalorder %s27, 0
      %p258 = por %p256, %p257
      %p259 = scmp.ne.s32.totalorder %s247, %s248
      %p260 = scmp.eq.s32.totalorder %s28, 1
      %p261 = por %p259, %p260
      %p263 = scmp.ne.s32.totalorder %s248, %s262
      %p264 = scmp.eq.s32.totalorder %s28, 0
      %p265 = por %p263, %p264
      %s267 = sadd.s32 %s266, 1
      %p270 = scmp.eq.s32.totalorder %s22, 1
      %p271 = scmp.ne.s32.totalorder %s266, %s268
      %p272 = scmp.eq.s32.totalorder %s22, 0
      %p273 = por %p271, %p272
      %p274 = scmp.ne.s32.totalorder %s266, %s268
      %p275 = scmp.eq.s32.totalorder %s27, 1
      %p276 = por %p274, %p275
      %p277 = scmp.ne.s32.totalorder %s268, %s269
      %p278 = scmp.eq.s32.totalorder %s27, 0
      %p279 = por %p277, %p278
      %p280 = scmp.ne.s32.totalorder %s268, %s269
      %p281 = scmp.eq.s32.totalorder %s28, 1
      %p282 = por %p280, %p281
      %p284 = scmp.ne.s32.totalorder %s269, %s283
      %p285 = scmp.eq.s32.totalorder %s28, 0
      %p286 = por %p284, %p285
      %s288 = sadd.s32 %s287, 1
      %p291 = scmp.eq.s32.totalorder %s22, 1
      %p292 = scmp.ne.s32.totalorder %s287, %s289
      %p293 = scmp.eq.s32.totalorder %s22, 0
      %p294 = por %p292, %p293
      %p295 = scmp.ne.s32.totalorder %s287, %s289
      %p296 = scmp.eq.s32.totalorder %s27, 1
      %p297 = por %p295, %p296
      %p298 = scmp.ne.s32.totalorder %s289, %s290
      %p299 = scmp.eq.s32.totalorder %s27, 0
      %p300 = por %p298, %p299
      %p301 = scmp.ne.s32.totalorder %s289, %s290
      %p302 = scmp.eq.s32.totalorder %s28, 1
      %p303 = por %p301, %p302
      %p305 = scmp.ne.s32.totalorder %s290, %s304
      %p306 = scmp.eq.s32.totalorder %s28, 0
      %p307 = por %p305, %p306
      %s308 = ssub.s32 %s22, %s29
      %p309 = scmp.eq.s32.totalorder %s308, 0
      %s311 = sadd.s32 %s310, 1
      %s312 = scalar_select %p309, %s310, %s311
      %p315 = pneg %p309
      %p316 = scmp.eq.s32.totalorder %s22, 1
      %p317 = por %p315, %p316
      %p318 = scmp.ne.s32.totalorder %s310, %s313
      %p319 = scmp.eq.s32.totalorder %s22, 0
      %p320 = por %p318, %p319
      %p321 = scmp.ne.s32.totalorder %s310, %s313
      %p322 = scmp.eq.s32.totalorder %s27, 1
      %p323 = por %p321, %p322
      %p324 = scmp.ne.s32.totalorder %s313, %s314
      %p325 = scmp.eq.s32.totalorder %s27, 0
      %p326 = por %p324, %p325
      %p327 = scmp.ne.s32.totalorder %s313, %s314
      %p328 = scmp.eq.s32.totalorder %s28, 1
      %p329 = por %p327, %p328
      %p331 = scmp.ne.s32.totalorder %s314, %s330
      %p332 = scmp.eq.s32.totalorder %s28, 0
      %p333 = por %p331, %p332
      %p334 = scmp.le.s32.totalorder 1, %s22
      %p335 = scmp.lt.s32.totalorder %s22, 3
      %p336 = pnand %p334, %p335
      %p337 = pneg %p336
      // Predicated region
      $region9: #{lenet_forward.1} parent=5 // pred_check
        _
      $region10: #{lenet_forward.1} parent=5 // pred_check_branch
        %339 = sbr.rel (%p336) target = $region12
      $region11: #{lenet_forward.1} parent=5 // pred_region
        %s340 = ssub.s32 %s22, 1
        // Predicated region
        $region13: #{lenet_forward.1} parent=11 // pred_check
          %p341 = pneg %p69
        $region14: #{lenet_forward.1} parent=11 // pred_check_branch
          %343 = sbr.rel (%p341) target = $region16
        $region15: #{lenet_forward.1} parent=11 // pred_region
          _
        $region16: #{lenet_forward.1} parent=11 // pred_fallthru
          _
        // Predicated region
        $region17: #{lenet_forward.1} parent=11 // pred_check
          %p344 = pneg %p90
        $region18: #{lenet_forward.1} parent=11 // pred_check_branch
          %346 = sbr.rel (%p344) target = $region20
        $region19: #{lenet_forward.1} parent=11 // pred_region
          _
        $region20: #{lenet_forward.1} parent=11 // pred_fallthru
          _
        // Predicated region
        $region21: #{lenet_forward.1} parent=11 // pred_check
          %p347 = pneg %p111
        $region22: #{lenet_forward.1} parent=11 // pred_check_branch
          %349 = sbr.rel (%p347) target = $region24
        $region23: #{lenet_forward.1} parent=11 // pred_region
          _
        $region24: #{lenet_forward.1} parent=11 // pred_fallthru
          _
        // Predicated region
        $region25: #{lenet_forward.1} parent=11 // pred_check
          %p350 = pneg %p132
        $region26: #{lenet_forward.1} parent=11 // pred_check_branch
          %352 = sbr.rel (%p350) target = $region28
        $region27: #{lenet_forward.1} parent=11 // pred_region
          _
        $region28: #{lenet_forward.1} parent=11 // pred_fallthru
          _
        // Predicated region
        $region29: #{lenet_forward.1} parent=11 // pred_check
          %p353 = pneg %p153
        $region30: #{lenet_forward.1} parent=11 // pred_check_branch
          %355 = sbr.rel (%p353) target = $region32
        $region31: #{lenet_forward.1} parent=11 // pred_region
          _
        $region32: #{lenet_forward.1} parent=11 // pred_fallthru
          _
        // Predicated region
        $region33: #{lenet_forward.1} parent=11 // pred_check
          %p356 = pneg %p174
        $region34: #{lenet_forward.1} parent=11 // pred_check_branch
          %358 = sbr.rel (%p356) target = $region36
        $region35: #{lenet_forward.1} parent=11 // pred_region
          _
        $region36: #{lenet_forward.1} parent=11 // pred_fallthru
          _
        // Predicated region
        $region37: #{lenet_forward.1} parent=11 // pred_check
          %p359 = pneg %p195
        $region38: #{lenet_forward.1} parent=11 // pred_check_branch
          %361 = sbr.rel (%p359) target = $region40
        $region39: #{lenet_forward.1} parent=11 // pred_region
          _
        $region40: #{lenet_forward.1} parent=11 // pred_fallthru
          _
        // Predicated region
        $region41: #{lenet_forward.1} parent=11 // pred_check
          %p362 = pneg %p216
        $region42: #{lenet_forward.1} parent=11 // pred_check_branch
          %364 = sbr.rel (%p362) target = $region44
        $region43: #{lenet_forward.1} parent=11 // pred_region
          _
        $region44: #{lenet_forward.1} parent=11 // pred_fallthru
          _
        // Predicated region
        $region45: #{lenet_forward.1} parent=11 // pred_check
          %p365 = pneg %p237
        $region46: #{lenet_forward.1} parent=11 // pred_check_branch
          %367 = sbr.rel (%p365) target = $region48
        $region47: #{lenet_forward.1} parent=11 // pred_region
          _
        $region48: #{lenet_forward.1} parent=11 // pred_fallthru
          _
        // Predicated region
        $region49: #{lenet_forward.1} parent=11 // pred_check
          %p368 = pneg %p258
        $region50: #{lenet_forward.1} parent=11 // pred_check_branch
          %370 = sbr.rel (%p368) target = $region52
        $region51: #{lenet_forward.1} parent=11 // pred_region
          _
        $region52: #{lenet_forward.1} parent=11 // pred_fallthru
          _
        // Predicated region
        $region53: #{lenet_forward.1} parent=11 // pred_check
          %p371 = pneg %p279
        $region54: #{lenet_forward.1} parent=11 // pred_check_branch
          %373 = sbr.rel (%p371) target = $region56
        $region55: #{lenet_forward.1} parent=11 // pred_region
          _
        $region56: #{lenet_forward.1} parent=11 // pred_fallthru
          _
        // Predicated region
        $region57: #{lenet_forward.1} parent=11 // pred_check
          %p374 = pneg %p300
        $region58: #{lenet_forward.1} parent=11 // pred_check_branch
          %376 = sbr.rel (%p374) target = $region60
        $region59: #{lenet_forward.1} parent=11 // pred_region
          _
        $region60: #{lenet_forward.1} parent=11 // pred_fallthru
          _
      $region12: #{lenet_forward.1} parent=5 // pred_fallthru
        _
      %p377 = scmp.lt.s32.totalorder %s22, 2
      // Predicated region
      $region61: #{lenet_forward.1} parent=5 // pred_check
        %p378 = pneg %p377
      $region62: #{lenet_forward.1} parent=5 // pred_check_branch
        %380 = sbr.rel (%p378) target = $region64
      $region63: #{lenet_forward.1} parent=5 // pred_region
        // Predicated region
        $region65: #{lenet_forward.1} parent=63 // pred_check
          %p381 = pneg %p42
        $region66: #{lenet_forward.1} parent=63 // pred_check_branch
          %383 = sbr.rel (%p381) target = $region68
        $region67: #{lenet_forward.1} parent=63 // pred_region
          %p384 = scmp.lt.s32.totalorder %s22, 1
          %s385 = scalar_select %p384, %s22, 1
          %s386 = smul.addr %s385, 7
          %s387 = scalar_lea.vmem %s0, %s386
        $region68: #{lenet_forward.1} parent=63 // pred_fallthru
          _
      $region64: #{lenet_forward.1} parent=5 // pred_fallthru
        _
      %p388 = scmp.le.s32.totalorder 1, %s22
      %p389 = scmp.lt.s32.totalorder %s22, 3
      %p390 = pnand %p388, %p389
      %p391 = pneg %p390
      // Predicated region
      $region69: #{lenet_forward.1} parent=5 // pred_check
        _
      $region70: #{lenet_forward.1} parent=5 // pred_check_branch
        %393 = sbr.rel (%p390) target = $region72
      $region71: #{lenet_forward.1} parent=5 // pred_region
        %s394 = ssub.s32 %s22, 1
        %p395 = scmp.lt.s32.totalorder %s27, 1
        %s396 = scalar_select %p395, %s27, 1
        %s397 = smul.addr %s396, 7
        %s398 = scalar_lea.vmem %s0, %s397
        %p399 = pneg %p48
        %p400 = pneg %p45
        %p401 = pneg %p69
        %p402 = pneg %p66
        %p403 = pneg %p90
        %p404 = pneg %p87
        %p405 = pneg %p111
        %p406 = pneg %p108
        %p407 = pneg %p132
        %p408 = pneg %p129
        %p409 = pneg %p153
        %p410 = pneg %p150
        %p411 = pneg %p174
        %p412 = pneg %p171
        %p413 = pneg %p195
        %p414 = pneg %p192
        %p415 = pneg %p216
        %p416 = pneg %p213
        %p417 = pneg %p237
        %p418 = pneg %p234
        %p419 = pneg %p258
        %p420 = pneg %p255
        %p421 = pneg %p279
        %p422 = pneg %p276
        %p423 = pneg %p300
        %p424 = pneg %p297
        %p425 = pneg %p326
        %p426 = pneg %p323
        %s427 = sand.u32 %s313, 1
        %s428 = scalar_lea.sflag [#allocation3], %s427
        %s429 = sand.u32 %s313, 1
        %s430 = scalar_lea.vmem [#allocation2], %s429
        %p431 = scmp.lt.s32.totalorder %s27, 1
        %s432 = scalar_select %p431, %s27, 1
        %s433 = smul.addr %s432, 7
        %s434 = scalar_lea.vmem %s0, %s433
        %v436 = vld [vmem:[%s1] sm:$0x3f]
        %v437 = vld [vmem:[%s434] sm:$0x3f]
        %439 = vset.pattern.permute.xlu0 0
        %440 = vperm.xlu0 %439, %v436
        %v441 = vpop.permute.xlu0 %440
        %v444 = vlaneseq
        %v445 = vshrl.u32 %v444, 7
        %v446 = vsub.s32 0, %v445
        %v447 = vrot.slane %v437, %v446
        %v448 = vlaneseq
        %v449 = vshrl.u32 %v448, 7
        %v450 = vsub.s32 1, %v449
        %v451 = vrot.slane %v437, %v450
        %v452 = vlaneseq
        %v453 = vshrl.u32 %v452, 7
        %v454 = vsub.s32 2, %v453
        %v455 = vrot.slane %v437, %v454
        %v456 = vlaneseq
        %v457 = vshrl.u32 %v456, 7
        %v458 = vsub.s32 3, %v457
        %v459 = vrot.slane %v437, %v458
        %v460 = vlaneseq
        %v461 = vshrl.u32 %v460, 7
        %v462 = vsub.s32 4, %v461
        %v463 = vrot.slane %v437, %v462
        %v464 = vlaneseq
        %v465 = vshrl.u32 %v464, 7
        %v466 = vsub.s32 5, %v465
        %v467 = vrot.slane %v437, %v466
        %v474 = vmul.f32 %v441, %v447
        %v475 = vmul.f32 %v441, %v451
        %v476 = vmul.f32 %v441, %v455
        %v477 = vmul.f32 %v441, %v459
        %v478 = vmul.f32 %v441, %v463
        %v479 = vmul.f32 %v441, %v467
        %v480 = vadd.f32 %v474, 0.0
        %v481 = vadd.f32 %v475, 0.0
        %v482 = vadd.f32 %v476, 0.0
        %v483 = vadd.f32 %v477, 0.0
        %v484 = vadd.f32 %v478, 0.0
        %v485 = vadd.f32 %v479, 0.0
        %486 = vset.pattern.permute.xlu0 1
        %487 = vperm.xlu0 %486, %v436
        %v488 = vpop.permute.xlu0 %487
        %v490 = vmul.f32 %v488, %v447
        %v491 = vmul.f32 %v488, %v451
        %v492 = vmul.f32 %v488, %v455
        %v493 = vmul.f32 %v488, %v459
        %v494 = vmul.f32 %v488, %v463
        %v495 = vmul.f32 %v488, %v467
        %502 = vrot.lane.b32.xlu0 %v490, 127
        %v503 = vpop.permute.xlu0 %502
        %504 = vrot.lane.b32.xlu0 %v491, 127
        %v505 = vpop.permute.xlu0 %504
        %506 = vrot.lane.b32.xlu0 %v492, 127
        %v507 = vpop.permute.xlu0 %506
        %508 = vrot.lane.b32.xlu0 %v493, 127
        %v509 = vpop.permute.xlu0 %508
        %510 = vrot.lane.b32.xlu0 %v494, 127
        %v511 = vpop.permute.xlu0 %510
        %512 = vrot.lane.b32.xlu0 %v495, 127
        %v513 = vpop.permute.xlu0 %512
        %vm514 = vcmask 1039360
        %v515 = vsel %vm514, %v503, %v505
        %v516 = vsel %vm514, %v505, %v507
        %v517 = vsel %vm514, %v507, %v509
        %v518 = vsel %vm514, %v509, %v511
        %v519 = vsel %vm514, %v511, %v513
        %v526 = vadd.f32 %v480, %v515
        %v527 = vadd.f32 %v481, %v516
        %v528 = vadd.f32 %v482, %v517
        %v529 = vadd.f32 %v483, %v518
        %v530 = vadd.f32 %v484, %v519
        %v531 = vadd.f32 %v485, %v513
        %532 = vset.pattern.permute.xlu0 2
        %533 = vperm.xlu0 %532, %v436
        %v534 = vpop.permute.xlu0 %533
        %v536 = vmul.f32 %v534, %v447
        %v537 = vmul.f32 %v534, %v451
        %v538 = vmul.f32 %v534, %v455
        %v539 = vmul.f32 %v534, %v459
        %v540 = vmul.f32 %v534, %v463
        %v541 = vmul.f32 %v534, %v467
        %548 = vrot.lane.b32.xlu0 %v536, 126
        %v549 = vpop.permute.xlu0 %548
        %550 = vrot.lane.b32.xlu0 %v537, 126
        %v551 = vpop.permute.xlu0 %550
        %552 = vrot.lane.b32.xlu0 %v538, 126
        %v553 = vpop.permute.xlu0 %552
        %554 = vrot.lane.b32.xlu0 %v539, 126
        %v555 = vpop.permute.xlu0 %554
        %556 = vrot.lane.b32.xlu0 %v540, 126
        %v557 = vpop.permute.xlu0 %556
        %558 = vrot.lane.b32.xlu0 %v541, 126
        %v559 = vpop.permute.xlu0 %558
        %vm560 = vcmask 1031168
        %v561 = vsel %vm560, %v549, %v551
        %v562 = vsel %vm560, %v551, %v553
        %v563 = vsel %vm560, %v553, %v555
        %v564 = vsel %vm560, %v555, %v557
        %v565 = vsel %vm560, %v557, %v559
        %v572 = vadd.f32 %v526, %v561
        %v573 = vadd.f32 %v527, %v562
        %v574 = vadd.f32 %v528, %v563
        %v575 = vadd.f32 %v529, %v564
        %v576 = vadd.f32 %v530, %v565
        %v577 = vadd.f32 %v531, %v559
        %578 = vset.pattern.permute.xlu0 3
        %579 = vperm.xlu0 %578, %v436
        %v580 = vpop.permute.xlu0 %579
        %v582 = vmul.f32 %v580, %v447
        %v583 = vmul.f32 %v580, %v451
        %v584 = vmul.f32 %v580, %v455
        %v585 = vmul.f32 %v580, %v459
        %v586 = vmul.f32 %v580, %v463
        %v587 = vmul.f32 %v580, %v467
        %594 = vrot.lane.b32.xlu0 %v582, 125
        %v595 = vpop.permute.xlu0 %594
        %596 = vrot.lane.b32.xlu0 %v583, 125
        %v597 = vpop.permute.xlu0 %596
        %598 = vrot.lane.b32.xlu0 %v584, 125
        %v599 = vpop.permute.xlu0 %598
        %600 = vrot.lane.b32.xlu0 %v585, 125
        %v601 = vpop.permute.xlu0 %600
        %602 = vrot.lane.b32.xlu0 %v586, 125
        %v603 = vpop.permute.xlu0 %602
        %604 = vrot.lane.b32.xlu0 %v587, 125
        %v605 = vpop.permute.xlu0 %604
        %vm606 = vcmask 1022976
        %v607 = vsel %vm606, %v595, %v597
        %v608 = vsel %vm606, %v597, %v599
        %v609 = vsel %vm606, %v599, %v601
        %v610 = vsel %vm606, %v601, %v603
        %v611 = vsel %vm606, %v603, %v605
        %v618 = vadd.f32 %v572, %v607
        %v619 = vadd.f32 %v573, %v608
        %v620 = vadd.f32 %v574, %v609
        %v621 = vadd.f32 %v575, %v610
        %v622 = vadd.f32 %v576, %v611
        %v623 = vadd.f32 %v577, %v605
        %624 = vset.pattern.permute.xlu0 4
        %625 = vperm.xlu0 %624, %v436
        %v626 = vpop.permute.xlu0 %625
        %v628 = vmul.f32 %v626, %v447
        %v629 = vmul.f32 %v626, %v451
        %v630 = vmul.f32 %v626, %v455
        %v631 = vmul.f32 %v626, %v459
        %v632 = vmul.f32 %v626, %v463
        %v633 = vmul.f32 %v626, %v467
        %640 = vrot.lane.b32.xlu0 %v628, 124
        %v641 = vpop.permute.xlu0 %640
        %642 = vrot.lane.b32.xlu0 %v629, 124
        %v643 = vpop.permute.xlu0 %642
        %644 = vrot.lane.b32.xlu0 %v630, 124
        %v645 = vpop.permute.xlu0 %644
        %646 = vrot.lane.b32.xlu0 %v631, 124
        %v647 = vpop.permute.xlu0 %646
        %648 = vrot.lane.b32.xlu0 %v632, 124
        %v649 = vpop.permute.xlu0 %648
        %650 = vrot.lane.b32.xlu0 %v633, 124
        %v651 = vpop.permute.xlu0 %650
        %vm652 = vcmask 1014784
        %v653 = vsel %vm652, %v641, %v643
        %v654 = vsel %vm652, %v643, %v645
        %v655 = vsel %vm652, %v645, %v647
        %v656 = vsel %vm652, %v647, %v649
        %v657 = vsel %vm652, %v649, %v651
        %v664 = vadd.f32 %v618, %v653
        %v665 = vadd.f32 %v619, %v654
        %v666 = vadd.f32 %v620, %v655
        %v667 = vadd.f32 %v621, %v656
        %v668 = vadd.f32 %v622, %v657
        %v669 = vadd.f32 %v623, %v651
        %670 = vset.pattern.permute.xlu0 5
        %671 = vperm.xlu0 %670, %v436
        %v672 = vpop.permute.xlu0 %671
        %v674 = vmul.f32 %v672, %v447
        %v675 = vmul.f32 %v672, %v451
        %v676 = vmul.f32 %v672, %v455
        %v677 = vmul.f32 %v672, %v459
        %v678 = vmul.f32 %v672, %v463
        %v679 = vmul.f32 %v672, %v467
        %686 = vrot.lane.b32.xlu0 %v674, 100
        %v687 = vpop.permute.xlu0 %686
        %688 = vrot.lane.b32.xlu0 %v675, 100
        %v689 = vpop.permute.xlu0 %688
        %690 = vrot.lane.b32.xlu0 %v676, 100
        %v691 = vpop.permute.xlu0 %690
        %692 = vrot.lane.b32.xlu0 %v677, 100
        %v693 = vpop.permute.xlu0 %692
        %694 = vrot.lane.b32.xlu0 %v678, 100
        %v695 = vpop.permute.xlu0 %694
        %696 = vrot.lane.b32.xlu0 %v679, 100
        %v697 = vpop.permute.xlu0 %696
        %vm698 = vcmask 818176
        %v699 = vsel %vm698, %v687, %v689
        %v700 = vsel %vm698, %v689, %v691
        %v701 = vsel %vm698, %v691, %v693
        %v702 = vsel %vm698, %v693, %v695
        %v703 = vsel %vm698, %v695, %v697
        %v710 = vadd.f32 %v664, %v699
        %v711 = vadd.f32 %v665, %v700
        %v712 = vadd.f32 %v666, %v701
        %v713 = vadd.f32 %v667, %v702
        %v714 = vadd.f32 %v668, %v703
        %v715 = vadd.f32 %v669, %v697
        %716 = vset.pattern.permute.xlu0 6
        %717 = vperm.xlu0 %716, %v436
        %v718 = vpop.permute.xlu0 %717
        %v720 = vmul.f32 %v718, %v447
        %v721 = vmul.f32 %v718, %v451
        %v722 = vmul.f32 %v718, %v455
        %v723 = vmul.f32 %v718, %v459
        %v724 = vmul.f32 %v718, %v463
        %v725 = vmul.f32 %v718, %v467
        %732 = vrot.lane.b32.xlu0 %v720, 99
        %v733 = vpop.permute.xlu0 %732
        %734 = vrot.lane.b32.xlu0 %v721, 99
        %v735 = vpop.permute.xlu0 %734
        %736 = vrot.lane.b32.xlu0 %v722, 99
        %v737 = vpop.permute.xlu0 %736
        %738 = vrot.lane.b32.xlu0 %v723, 99
        %v739 = vpop.permute.xlu0 %738
        %740 = vrot.lane.b32.xlu0 %v724, 99
        %v741 = vpop.permute.xlu0 %740
        %742 = vrot.lane.b32.xlu0 %v725, 99
        %v743 = vpop.permute.xlu0 %742
        %vm744 = vcmask 809984
        %v745 = vsel %vm744, %v733, %v735
        %v746 = vsel %vm744, %v735, %v737
        %v747 = vsel %vm744, %v737, %v739
        %v748 = vsel %vm744, %v739, %v741
        %v749 = vsel %vm744, %v741, %v743
        %v756 = vadd.f32 %v710, %v745
        %v757 = vadd.f32 %v711, %v746
        %v758 = vadd.f32 %v712, %v747
        %v759 = vadd.f32 %v713, %v748
        %v760 = vadd.f32 %v714, %v749
        %v761 = vadd.f32 %v715, %v743
        %762 = vset.pattern.permute.xlu0 7
        %763 = vperm.xlu0 %762, %v436
        %v764 = vpop.permute.xlu0 %763
        %v766 = vmul.f32 %v764, %v447
        %v767 = vmul.f32 %v764, %v451
        %v768 = vmul.f32 %v764, %v455
        %v769 = vmul.f32 %v764, %v459
        %v770 = vmul.f32 %v764, %v463
        %v771 = vmul.f32 %v764, %v467
        %778 = vrot.lane.b32.xlu0 %v766, 98
        %v779 = vpop.permute.xlu0 %778
        %780 = vrot.lane.b32.xlu0 %v767, 98
        %v781 = vpop.permute.xlu0 %780
        %782 = vrot.lane.b32.xlu0 %v768, 98
        %v783 = vpop.permute.xlu0 %782
        %784 = vrot.lane.b32.xlu0 %v769, 98
        %v785 = vpop.permute.xlu0 %784
        %786 = vrot.lane.b32.xlu0 %v770, 98
        %v787 = vpop.permute.xlu0 %786
        %788 = vrot.lane.b32.xlu0 %v771, 98
        %v789 = vpop.permute.xlu0 %788
        %vm790 = vcmask 801792
        %v791 = vsel %vm790, %v779, %v781
        %v792 = vsel %vm790, %v781, %v783
        %v793 = vsel %vm790, %v783, %v785
        %v794 = vsel %vm790, %v785, %v787
        %v795 = vsel %vm790, %v787, %v789
        %v802 = vadd.f32 %v756, %v791
        %v803 = vadd.f32 %v757, %v792
        %v804 = vadd.f32 %v758, %v793
        %v805 = vadd.f32 %v759, %v794
        %v806 = vadd.f32 %v760, %v795
        %v807 = vadd.f32 %v761, %v789
        %808 = vset.pattern.permute.xlu0 8
        %809 = vperm.xlu0 %808, %v436
        %v810 = vpop.permute.xlu0 %809
        %v812 = vmul.f32 %v810, %v447
        %v813 = vmul.f32 %v810, %v451
        %v814 = vmul.f32 %v810, %v455
        %v815 = vmul.f32 %v810, %v459
        %v816 = vmul.f32 %v810, %v463
        %v817 = vmul.f32 %v810, %v467
        %824 = vrot.lane.b32.xlu0 %v812, 97
        %v825 = vpop.permute.xlu0 %824
        %826 = vrot.lane.b32.xlu0 %v813, 97
        %v827 = vpop.permute.xlu0 %826
        %828 = vrot.lane.b32.xlu0 %v814, 97
        %v829 = vpop.permute.xlu0 %828
        %830 = vrot.lane.b32.xlu0 %v815, 97
        %v831 = vpop.permute.xlu0 %830
        %832 = vrot.lane.b32.xlu0 %v816, 97
        %v833 = vpop.permute.xlu0 %832
        %834 = vrot.lane.b32.xlu0 %v817, 97
        %v835 = vpop.permute.xlu0 %834
        %vm836 = vcmask 793600
        %v837 = vsel %vm836, %v825, %v827
        %v838 = vsel %vm836, %v827, %v829
        %v839 = vsel %vm836, %v829, %v831
        %v840 = vsel %vm836, %v831, %v833
        %v841 = vsel %vm836, %v833, %v835
        %v848 = vadd.f32 %v802, %v837
        %v849 = vadd.f32 %v803, %v838
        %v850 = vadd.f32 %v804, %v839
        %v851 = vadd.f32 %v805, %v840
        %v852 = vadd.f32 %v806, %v841
        %v853 = vadd.f32 %v807, %v835
        %854 = vset.pattern.permute.xlu0 9
        %855 = vperm.xlu0 %854, %v436
        %v856 = vpop.permute.xlu0 %855
        %v858 = vmul.f32 %v856, %v447
        %v859 = vmul.f32 %v856, %v451
        %v860 = vmul.f32 %v856, %v455
        %v861 = vmul.f32 %v856, %v459
        %v862 = vmul.f32 %v856, %v463
        %v863 = vmul.f32 %v856, %v467
        %870 = vrot.lane.b32.xlu0 %v858, 96
        %v871 = vpop.permute.xlu0 %870
        %872 = vrot.lane.b32.xlu0 %v859, 96
        %v873 = vpop.permute.xlu0 %872
        %874 = vrot.lane.b32.xlu0 %v860, 96
        %v875 = vpop.permute.xlu0 %874
        %876 = vrot.lane.b32.xlu0 %v861, 96
        %v877 = vpop.permute.xlu0 %876
        %878 = vrot.lane.b32.xlu0 %v862, 96
        %v879 = vpop.permute.xlu0 %878
        %880 = vrot.lane.b32.xlu0 %v863, 96
        %v881 = vpop.permute.xlu0 %880
        %vm882 = vcmask 785408
        %v883 = vsel %vm882, %v871, %v873
        %v884 = vsel %vm882, %v873, %v875
        %v885 = vsel %vm882, %v875, %v877
        %v886 = vsel %vm882, %v877, %v879
        %v887 = vsel %vm882, %v879, %v881
        %v894 = vadd.f32 %v848, %v883
        %v895 = vadd.f32 %v849, %v884
        %v896 = vadd.f32 %v850, %v885
        %v897 = vadd.f32 %v851, %v886
        %v898 = vadd.f32 %v852, %v887
        %v899 = vadd.f32 %v853, %v881
        %900 = vset.pattern.permute.xlu0 10
        %901 = vperm.xlu0 %900, %v436
        %v902 = vpop.permute.xlu0 %901
        %v904 = vmul.f32 %v902, %v447
        %v905 = vmul.f32 %v902, %v451
        %v906 = vmul.f32 %v902, %v455
        %v907 = vmul.f32 %v902, %v459
        %v908 = vmul.f32 %v902, %v463
        %v909 = vmul.f32 %v902, %v467
        %916 = vrot.lane.b32.xlu0 %v904, 72
        %v917 = vpop.permute.xlu0 %916
        %918 = vrot.lane.b32.xlu0 %v905, 72
        %v919 = vpop.permute.xlu0 %918
        %920 = vrot.lane.b32.xlu0 %v906, 72
        %v921 = vpop.permute.xlu0 %920
        %922 = vrot.lane.b32.xlu0 %v907, 72
        %v923 = vpop.permute.xlu0 %922
        %924 = vrot.lane.b32.xlu0 %v908, 72
        %v925 = vpop.permute.xlu0 %924
        %926 = vrot.lane.b32.xlu0 %v909, 72
        %v927 = vpop.permute.xlu0 %926
        %vm928 = vcmask 588800
        %v929 = vsel %vm928, %v917, %v919
        %v930 = vsel %vm928, %v919, %v921
        %v931 = vsel %vm928, %v921, %v923
        %v932 = vsel %vm928, %v923, %v925
        %v933 = vsel %vm928, %v925, %v927
        %v940 = vadd.f32 %v894, %v929
        %v941 = vadd.f32 %v895, %v930
        %v942 = vadd.f32 %v896, %v931
        %v943 = vadd.f32 %v897, %v932
        %v944 = vadd.f32 %v898, %v933
        %v945 = vadd.f32 %v899, %v927
        %946 = vset.pattern.permute.xlu0 11
        %947 = vperm.xlu0 %946, %v436
        %v948 = vpop.permute.xlu0 %947
        %v950 = vmul.f32 %v948, %v447
        %v951 = vmul.f32 %v948, %v451
        %v952 = vmul.f32 %v948, %v455
        %v953 = vmul.f32 %v948, %v459
        %v954 = vmul.f32 %v948, %v463
        %v955 = vmul.f32 %v948, %v467
        %962 = vrot.lane.b32.xlu0 %v950, 71
        %v963 = vpop.permute.xlu0 %962
        %964 = vrot.lane.b32.xlu0 %v951, 71
        %v965 = vpop.permute.xlu0 %964
        %966 = vrot.lane.b32.xlu0 %v952, 71
        %v967 = vpop.permute.xlu0 %966
        %968 = vrot.lane.b32.xlu0 %v953, 71
        %v969 = vpop.permute.xlu0 %968
        %970 = vrot.lane.b32.xlu0 %v954, 71
        %v971 = vpop.permute.xlu0 %970
        %972 = vrot.lane.b32.xlu0 %v955, 71
        %v973 = vpop.permute.xlu0 %972
        %vm974 = vcmask 580608
        %v975 = vsel %vm974, %v963, %v965
        %v976 = vsel %vm974, %v965, %v967
        %v977 = vsel %vm974, %v967, %v969
        %v978 = vsel %vm974, %v969, %v971
        %v979 = vsel %vm974, %v971, %v973
        %v986 = vadd.f32 %v940, %v975
        %v987 = vadd.f32 %v941, %v976
        %v988 = vadd.f32 %v942, %v977
        %v989 = vadd.f32 %v943, %v978
        %v990 = vadd.f32 %v944, %v979
        %v991 = vadd.f32 %v945, %v973
        %992 = vset.pattern.permute.xlu0 12
        %993 = vperm.xlu0 %992, %v436
        %v994 = vpop.permute.xlu0 %993
        %v996 = vmul.f32 %v994, %v447
        %v997 = vmul.f32 %v994, %v451
        %v998 = vmul.f32 %v994, %v455
        %v999 = vmul.f32 %v994, %v459
        %v1000 = vmul.f32 %v994, %v463
        %v1001 = vmul.f32 %v994, %v467
        %1008 = vrot.lane.b32.xlu0 %v996, 70
        %v1009 = vpop.permute.xlu0 %1008
        %1010 = vrot.lane.b32.xlu0 %v997, 70
        %v1011 = vpop.permute.xlu0 %1010
        %1012 = vrot.lane.b32.xlu0 %v998, 70
        %v1013 = vpop.permute.xlu0 %1012
        %1014 = vrot.lane.b32.xlu0 %v999, 70
        %v1015 = vpop.permute.xlu0 %1014
        %1016 = vrot.lane.b32.xlu0 %v1000, 70
        %v1017 = vpop.permute.xlu0 %1016
        %1018 = vrot.lane.b32.xlu0 %v1001, 70
        %v1019 = vpop.permute.xlu0 %1018
        %vm1020 = vcmask 572416
        %v1021 = vsel %vm1020, %v1009, %v1011
        %v1022 = vsel %vm1020, %v1011, %v1013
        %v1023 = vsel %vm1020, %v1013, %v1015
        %v1024 = vsel %vm1020, %v1015, %v1017
        %v1025 = vsel %vm1020, %v1017, %v1019
        %v1032 = vadd.f32 %v986, %v1021
        %v1033 = vadd.f32 %v987, %v1022
        %v1034 = vadd.f32 %v988, %v1023
        %v1035 = vadd.f32 %v989, %v1024
        %v1036 = vadd.f32 %v990, %v1025
        %v1037 = vadd.f32 %v991, %v1019
        %1038 = vset.pattern.permute.xlu0 13
        %1039 = vperm.xlu0 %1038, %v436
        %v1040 = vpop.permute.xlu0 %1039
        %v1042 = vmul.f32 %v1040, %v447
        %v1043 = vmul.f32 %v1040, %v451
        %v1044 = vmul.f32 %v1040, %v455
        %v1045 = vmul.f32 %v1040, %v459
        %v1046 = vmul.f32 %v1040, %v463
        %v1047 = vmul.f32 %v1040, %v467
        %1054 = vrot.lane.b32.xlu0 %v1042, 69
        %v1055 = vpop.permute.xlu0 %1054
        %1056 = vrot.lane.b32.xlu0 %v1043, 69
        %v1057 = vpop.permute.xlu0 %1056
        %1058 = vrot.lane.b32.xlu0 %v1044, 69
        %v1059 = vpop.permute.xlu0 %1058
        %1060 = vrot.lane.b32.xlu0 %v1045, 69
        %v1061 = vpop.permute.xlu0 %1060
        %1062 = vrot.lane.b32.xlu0 %v1046, 69
        %v1063 = vpop.permute.xlu0 %1062
        %1064 = vrot.lane.b32.xlu0 %v1047, 69
        %v1065 = vpop.permute.xlu0 %1064
        %vm1066 = vcmask 564224
        %v1067 = vsel %vm1066, %v1055, %v1057
        %v1068 = vsel %vm1066, %v1057, %v1059
        %v1069 = vsel %vm1066, %v1059, %v1061
        %v1070 = vsel %vm1066, %v1061, %v1063
        %v1071 = vsel %vm1066, %v1063, %v1065
        %v1078 = vadd.f32 %v1032, %v1067
        %v1079 = vadd.f32 %v1033, %v1068
        %v1080 = vadd.f32 %v1034, %v1069
        %v1081 = vadd.f32 %v1035, %v1070
        %v1082 = vadd.f32 %v1036, %v1071
        %v1083 = vadd.f32 %v1037, %v1065
        %1084 = vset.pattern.permute.xlu0 14
        %1085 = vperm.xlu0 %1084, %v436
        %v1086 = vpop.permute.xlu0 %1085
        %v1088 = vmul.f32 %v1086, %v447
        %v1089 = vmul.f32 %v1086, %v451
        %v1090 = vmul.f32 %v1086, %v455
        %v1091 = vmul.f32 %v1086, %v459
        %v1092 = vmul.f32 %v1086, %v463
        %v1093 = vmul.f32 %v1086, %v467
        %1100 = vrot.lane.b32.xlu0 %v1088, 68
        %v1101 = vpop.permute.xlu0 %1100
        %1102 = vrot.lane.b32.xlu0 %v1089, 68
        %v1103 = vpop.permute.xlu0 %1102
        %1104 = vrot.lane.b32.xlu0 %v1090, 68
        %v1105 = vpop.permute.xlu0 %1104
        %1106 = vrot.lane.b32.xlu0 %v1091, 68
        %v1107 = vpop.permute.xlu0 %1106
        %1108 = vrot.lane.b32.xlu0 %v1092, 68
        %v1109 = vpop.permute.xlu0 %1108
        %1110 = vrot.lane.b32.xlu0 %v1093, 68
        %v1111 = vpop.permute.xlu0 %1110
        %vm1112 = vcmask 556032
        %v1113 = vsel %vm1112, %v1101, %v1103
        %v1114 = vsel %vm1112, %v1103, %v1105
        %v1115 = vsel %vm1112, %v1105, %v1107
        %v1116 = vsel %vm1112, %v1107, %v1109
        %v1117 = vsel %vm1112, %v1109, %v1111
        %v1124 = vadd.f32 %v1078, %v1113
        %v1125 = vadd.f32 %v1079, %v1114
        %v1126 = vadd.f32 %v1080, %v1115
        %v1127 = vadd.f32 %v1081, %v1116
        %v1128 = vadd.f32 %v1082, %v1117
        %v1129 = vadd.f32 %v1083, %v1111
        %1130 = vset.pattern.permute.xlu0 15
        %1131 = vperm.xlu0 %1130, %v436
        %v1132 = vpop.permute.xlu0 %1131
        %v1134 = vmul.f32 %v1132, %v447
        %v1135 = vmul.f32 %v1132, %v451
        %v1136 = vmul.f32 %v1132, %v455
        %v1137 = vmul.f32 %v1132, %v459
        %v1138 = vmul.f32 %v1132, %v463
        %v1139 = vmul.f32 %v1132, %v467
        %1146 = vrot.lane.b32.xlu0 %v1134, 44
        %v1147 = vpop.permute.xlu0 %1146
        %1148 = vrot.lane.b32.xlu0 %v1135, 44
        %v1149 = vpop.permute.xlu0 %1148
        %1150 = vrot.lane.b32.xlu0 %v1136, 44
        %v1151 = vpop.permute.xlu0 %1150
        %1152 = vrot.lane.b32.xlu0 %v1137, 44
        %v1153 = vpop.permute.xlu0 %1152
        %1154 = vrot.lane.b32.xlu0 %v1138, 44
        %v1155 = vpop.permute.xlu0 %1154
        %1156 = vrot.lane.b32.xlu0 %v1139, 44
        %v1157 = vpop.permute.xlu0 %1156
        %vm1158 = vcmask 359424
        %v1159 = vsel %vm1158, %v1147, %v1149
        %v1160 = vsel %vm1158, %v1149, %v1151
        %v1161 = vsel %vm1158, %v1151, %v1153
        %v1162 = vsel %vm1158, %v1153, %v1155
        %v1163 = vsel %vm1158, %v1155, %v1157
        %v1170 = vadd.f32 %v1124, %v1159
        %v1171 = vadd.f32 %v1125, %v1160
        %v1172 = vadd.f32 %v1126, %v1161
        %v1173 = vadd.f32 %v1127, %v1162
        %v1174 = vadd.f32 %v1128, %v1163
        %v1175 = vadd.f32 %v1129, %v1157
        %1176 = vset.pattern.permute.xlu0 16
        %1177 = vperm.xlu0 %1176, %v436
        %v1178 = vpop.permute.xlu0 %1177
        %v1180 = vmul.f32 %v1178, %v447
        %v1181 = vmul.f32 %v1178, %v451
        %v1182 = vmul.f32 %v1178, %v455
        %v1183 = vmul.f32 %v1178, %v459
        %v1184 = vmul.f32 %v1178, %v463
        %v1185 = vmul.f32 %v1178, %v467
        %1192 = vrot.lane.b32.xlu0 %v1180, 43
        %v1193 = vpop.permute.xlu0 %1192
        %1194 = vrot.lane.b32.xlu0 %v1181, 43
        %v1195 = vpop.permute.xlu0 %1194
        %1196 = vrot.lane.b32.xlu0 %v1182, 43
        %v1197 = vpop.permute.xlu0 %1196
        %1198 = vrot.lane.b32.xlu0 %v1183, 43
        %v1199 = vpop.permute.xlu0 %1198
        %1200 = vrot.lane.b32.xlu0 %v1184, 43
        %v1201 = vpop.permute.xlu0 %1200
        %1202 = vrot.lane.b32.xlu0 %v1185, 43
        %v1203 = vpop.permute.xlu0 %1202
        %vm1204 = vcmask 351232
        %v1205 = vsel %vm1204, %v1193, %v1195
        %v1206 = vsel %vm1204, %v1195, %v1197
        %v1207 = vsel %vm1204, %v1197, %v1199
        %v1208 = vsel %vm1204, %v1199, %v1201
        %v1209 = vsel %vm1204, %v1201, %v1203
        %v1216 = vadd.f32 %v1170, %v1205
        %v1217 = vadd.f32 %v1171, %v1206
        %v1218 = vadd.f32 %v1172, %v1207
        %v1219 = vadd.f32 %v1173, %v1208
        %v1220 = vadd.f32 %v1174, %v1209
        %v1221 = vadd.f32 %v1175, %v1203
        %1222 = vset.pattern.permute.xlu0 17
        %1223 = vperm.xlu0 %1222, %v436
        %v1224 = vpop.permute.xlu0 %1223
        %v1226 = vmul.f32 %v1224, %v447
        %v1227 = vmul.f32 %v1224, %v451
        %v1228 = vmul.f32 %v1224, %v455
        %v1229 = vmul.f32 %v1224, %v459
        %v1230 = vmul.f32 %v1224, %v463
        %v1231 = vmul.f32 %v1224, %v467
        %1238 = vrot.lane.b32.xlu0 %v1226, 42
        %v1239 = vpop.permute.xlu0 %1238
        %1240 = vrot.lane.b32.xlu0 %v1227, 42
        %v1241 = vpop.permute.xlu0 %1240
        %1242 = vrot.lane.b32.xlu0 %v1228, 42
        %v1243 = vpop.permute.xlu0 %1242
        %1244 = vrot.lane.b32.xlu0 %v1229, 42
        %v1245 = vpop.permute.xlu0 %1244
        %1246 = vrot.lane.b32.xlu0 %v1230, 42
        %v1247 = vpop.permute.xlu0 %1246
        %1248 = vrot.lane.b32.xlu0 %v1231, 42
        %v1249 = vpop.permute.xlu0 %1248
        %vm1250 = vcmask 343040
        %v1251 = vsel %vm1250, %v1239, %v1241
        %v1252 = vsel %vm1250, %v1241, %v1243
        %v1253 = vsel %vm1250, %v1243, %v1245
        %v1254 = vsel %vm1250, %v1245, %v1247
        %v1255 = vsel %vm1250, %v1247, %v1249
        %v1262 = vadd.f32 %v1216, %v1251
        %v1263 = vadd.f32 %v1217, %v1252
        %v1264 = vadd.f32 %v1218, %v1253
        %v1265 = vadd.f32 %v1219, %v1254
        %v1266 = vadd.f32 %v1220, %v1255
        %v1267 = vadd.f32 %v1221, %v1249
        %1268 = vset.pattern.permute.xlu0 18
        %1269 = vperm.xlu0 %1268, %v436
        %v1270 = vpop.permute.xlu0 %1269
        %v1272 = vmul.f32 %v1270, %v447
        %v1273 = vmul.f32 %v1270, %v451
        %v1274 = vmul.f32 %v1270, %v455
        %v1275 = vmul.f32 %v1270, %v459
        %v1276 = vmul.f32 %v1270, %v463
        %v1277 = vmul.f32 %v1270, %v467
        %1284 = vrot.lane.b32.xlu0 %v1272, 41
        %v1285 = vpop.permute.xlu0 %1284
        %1286 = vrot.lane.b32.xlu0 %v1273, 41
        %v1287 = vpop.permute.xlu0 %1286
        %1288 = vrot.lane.b32.xlu0 %v1274, 41
        %v1289 = vpop.permute.xlu0 %1288
        %1290 = vrot.lane.b32.xlu0 %v1275, 41
        %v1291 = vpop.permute.xlu0 %1290
        %1292 = vrot.lane.b32.xlu0 %v1276, 41
        %v1293 = vpop.permute.xlu0 %1292
        %1294 = vrot.lane.b32.xlu0 %v1277, 41
        %v1295 = vpop.permute.xlu0 %1294
        %vm1296 = vcmask 334848
        %v1297 = vsel %vm1296, %v1285, %v1287
        %v1298 = vsel %vm1296, %v1287, %v1289
        %v1299 = vsel %vm1296, %v1289, %v1291
        %v1300 = vsel %vm1296, %v1291, %v1293
        %v1301 = vsel %vm1296, %v1293, %v1295
        %v1308 = vadd.f32 %v1262, %v1297
        %v1309 = vadd.f32 %v1263, %v1298
        %v1310 = vadd.f32 %v1264, %v1299
        %v1311 = vadd.f32 %v1265, %v1300
        %v1312 = vadd.f32 %v1266, %v1301
        %v1313 = vadd.f32 %v1267, %v1295
        %1314 = vset.pattern.permute.xlu0 19
        %1315 = vperm.xlu0 %1314, %v436
        %v1316 = vpop.permute.xlu0 %1315
        %v1318 = vmul.f32 %v1316, %v447
        %v1319 = vmul.f32 %v1316, %v451
        %v1320 = vmul.f32 %v1316, %v455
        %v1321 = vmul.f32 %v1316, %v459
        %v1322 = vmul.f32 %v1316, %v463
        %v1323 = vmul.f32 %v1316, %v467
        %1330 = vrot.lane.b32.xlu0 %v1318, 40
        %v1331 = vpop.permute.xlu0 %1330
        %1332 = vrot.lane.b32.xlu0 %v1319, 40
        %v1333 = vpop.permute.xlu0 %1332
        %1334 = vrot.lane.b32.xlu0 %v1320, 40
        %v1335 = vpop.permute.xlu0 %1334
        %1336 = vrot.lane.b32.xlu0 %v1321, 40
        %v1337 = vpop.permute.xlu0 %1336
        %1338 = vrot.lane.b32.xlu0 %v1322, 40
        %v1339 = vpop.permute.xlu0 %1338
        %1340 = vrot.lane.b32.xlu0 %v1323, 40
        %v1341 = vpop.permute.xlu0 %1340
        %vm1342 = vcmask 326656
        %v1343 = vsel %vm1342, %v1331, %v1333
        %v1344 = vsel %vm1342, %v1333, %v1335
        %v1345 = vsel %vm1342, %v1335, %v1337
        %v1346 = vsel %vm1342, %v1337, %v1339
        %v1347 = vsel %vm1342, %v1339, %v1341
        %v1354 = vadd.f32 %v1308, %v1343
        %v1355 = vadd.f32 %v1309, %v1344
        %v1356 = vadd.f32 %v1310, %v1345
        %v1357 = vadd.f32 %v1311, %v1346
        %v1358 = vadd.f32 %v1312, %v1347
        %v1359 = vadd.f32 %v1313, %v1341
        %v1360 = vld [vmem:[%s434] sm:$0x7f]
        %1361 = vset.pattern.permute.xlu0 20
        %1362 = vperm.xlu0 %1361, %v436
        %v1363 = vpop.permute.xlu0 %1362
        %v1366 = vlaneseq
        %v1367 = vshrl.u32 %v1366, 7
        %v1368 = vsub.s32 0, %v1367
        %v1369 = vrot.slane %v1360, %v1368
        %v1370 = vlaneseq
        %v1371 = vshrl.u32 %v1370, 7
        %v1372 = vsub.s32 1, %v1371
        %v1373 = vrot.slane %v1360, %v1372
        %v1374 = vlaneseq
        %v1375 = vshrl.u32 %v1374, 7
        %v1376 = vsub.s32 2, %v1375
        %v1377 = vrot.slane %v1360, %v1376
        %v1378 = vlaneseq
        %v1379 = vshrl.u32 %v1378, 7
        %v1380 = vsub.s32 3, %v1379
        %v1381 = vrot.slane %v1360, %v1380
        %v1382 = vlaneseq
        %v1383 = vshrl.u32 %v1382, 7
        %v1384 = vsub.s32 4, %v1383
        %v1385 = vrot.slane %v1360, %v1384
        %v1386 = vlaneseq
        %v1387 = vshrl.u32 %v1386, 7
        %v1388 = vsub.s32 5, %v1387
        %v1389 = vrot.slane %v1360, %v1388
        %v1390 = vlaneseq
        %v1391 = vshrl.u32 %v1390, 7
        %v1392 = vsub.s32 6, %v1391
        %v1393 = vrot.slane %v1360, %v1392
        %v1401 = vmul.f32 %v1363, %v1369
        %v1402 = vmul.f32 %v1363, %v1373
        %v1403 = vmul.f32 %v1363, %v1377
        %v1404 = vmul.f32 %v1363, %v1381
        %v1405 = vmul.f32 %v1363, %v1385
        %v1406 = vmul.f32 %v1363, %v1389
        %v1407 = vmul.f32 %v1363, %v1393
        %1415 = vrot.lane.b32.xlu0 %v1401, 16
        %v1416 = vpop.permute.xlu0 %1415
        %1417 = vrot.lane.b32.xlu0 %v1402, 16
        %v1418 = vpop.permute.xlu0 %1417
        %1419 = vrot.lane.b32.xlu0 %v1403, 16
        %v1420 = vpop.permute.xlu0 %1419
        %1421 = vrot.lane.b32.xlu0 %v1404, 16
        %v1422 = vpop.permute.xlu0 %1421
        %1423 = vrot.lane.b32.xlu0 %v1405, 16
        %v1424 = vpop.permute.xlu0 %1423
        %1425 = vrot.lane.b32.xlu0 %v1406, 16
        %v1426 = vpop.permute.xlu0 %1425
        %1427 = vrot.lane.b32.xlu0 %v1407, 16
        %v1428 = vpop.permute.xlu0 %1427
        %vm1429 = vcmask 130048
        %v1430 = vsel %vm1429, %v1416, %v1418
        %v1431 = vsel %vm1429, %v1418, %v1420
        %v1432 = vsel %vm1429, %v1420, %v1422
        %v1433 = vsel %vm1429, %v1422, %v1424
        %v1434 = vsel %vm1429, %v1424, %v1426
        %v1435 = vsel %vm1429, %v1426, %v1428
        %v1442 = vadd.f32 %v1354, %v1430
        %v1443 = vadd.f32 %v1355, %v1431
        %v1444 = vadd.f32 %v1356, %v1432
        %v1445 = vadd.f32 %v1357, %v1433
        %v1446 = vadd.f32 %v1358, %v1434
        %v1447 = vadd.f32 %v1359, %v1435
        %1448 = vset.pattern.permute.xlu0 21
        %1449 = vperm.xlu0 %1448, %v436
        %v1450 = vpop.permute.xlu0 %1449
        %v1452 = vmul.f32 %v1450, %v1369
        %v1453 = vmul.f32 %v1450, %v1373
        %v1454 = vmul.f32 %v1450, %v1377
        %v1455 = vmul.f32 %v1450, %v1381
        %v1456 = vmul.f32 %v1450, %v1385
        %v1457 = vmul.f32 %v1450, %v1389
        %v1458 = vmul.f32 %v1450, %v1393
        %1466 = vrot.lane.b32.xlu0 %v1452, 15
        %v1467 = vpop.permute.xlu0 %1466
        %1468 = vrot.lane.b32.xlu0 %v1453, 15
        %v1469 = vpop.permute.xlu0 %1468
        %1470 = vrot.lane.b32.xlu0 %v1454, 15
        %v1471 = vpop.permute.xlu0 %1470
        %1472 = vrot.lane.b32.xlu0 %v1455, 15
        %v1473 = vpop.permute.xlu0 %1472
        %1474 = vrot.lane.b32.xlu0 %v1456, 15
        %v1475 = vpop.permute.xlu0 %1474
        %1476 = vrot.lane.b32.xlu0 %v1457, 15
        %v1477 = vpop.permute.xlu0 %1476
        %1478 = vrot.lane.b32.xlu0 %v1458, 15
        %v1479 = vpop.permute.xlu0 %1478
        %vm1480 = vcmask 121856
        %v1481 = vsel %vm1480, %v1467, %v1469
        %v1482 = vsel %vm1480, %v1469, %v1471
        %v1483 = vsel %vm1480, %v1471, %v1473
        %v1484 = vsel %vm1480, %v1473, %v1475
        %v1485 = vsel %vm1480, %v1475, %v1477
        %v1486 = vsel %vm1480, %v1477, %v1479
        %v1493 = vadd.f32 %v1442, %v1481
        %v1494 = vadd.f32 %v1443, %v1482
        %v1495 = vadd.f32 %v1444, %v1483
        %v1496 = vadd.f32 %v1445, %v1484
        %v1497 = vadd.f32 %v1446, %v1485
        %v1498 = vadd.f32 %v1447, %v1486
        %1499 = vset.pattern.permute.xlu0 22
        %1500 = vperm.xlu0 %1499, %v436
        %v1501 = vpop.permute.xlu0 %1500
        %v1503 = vmul.f32 %v1501, %v1369
        %v1504 = vmul.f32 %v1501, %v1373
        %v1505 = vmul.f32 %v1501, %v1377
        %v1506 = vmul.f32 %v1501, %v1381
        %v1507 = vmul.f32 %v1501, %v1385
        %v1508 = vmul.f32 %v1501, %v1389
        %v1509 = vmul.f32 %v1501, %v1393
        %1517 = vrot.lane.b32.xlu0 %v1503, 14
        %v1518 = vpop.permute.xlu0 %1517
        %1519 = vrot.lane.b32.xlu0 %v1504, 14
        %v1520 = vpop.permute.xlu0 %1519
        %1521 = vrot.lane.b32.xlu0 %v1505, 14
        %v1522 = vpop.permute.xlu0 %1521
        %1523 = vrot.lane.b32.xlu0 %v1506, 14
        %v1524 = vpop.permute.xlu0 %1523
        %1525 = vrot.lane.b32.xlu0 %v1507, 14
        %v1526 = vpop.permute.xlu0 %1525
        %1527 = vrot.lane.b32.xlu0 %v1508, 14
        %v1528 = vpop.permute.xlu0 %1527
        %1529 = vrot.lane.b32.xlu0 %v1509, 14
        %v1530 = vpop.permute.xlu0 %1529
        %vm1531 = vcmask 113664
        %v1532 = vsel %vm1531, %v1518, %v1520
        %v1533 = vsel %vm1531, %v1520, %v1522
        %v1534 = vsel %vm1531, %v1522, %v1524
        %v1535 = vsel %vm1531, %v1524, %v1526
        %v1536 = vsel %vm1531, %v1526, %v1528
        %v1537 = vsel %vm1531, %v1528, %v1530
        %v1544 = vadd.f32 %v1493, %v1532
        %v1545 = vadd.f32 %v1494, %v1533
        %v1546 = vadd.f32 %v1495, %v1534
        %v1547 = vadd.f32 %v1496, %v1535
        %v1548 = vadd.f32 %v1497, %v1536
        %v1549 = vadd.f32 %v1498, %v1537
        %1550 = vset.pattern.permute.xlu0 23
        %1551 = vperm.xlu0 %1550, %v436
        %v1552 = vpop.permute.xlu0 %1551
        %v1554 = vmul.f32 %v1552, %v1369
        %v1555 = vmul.f32 %v1552, %v1373
        %v1556 = vmul.f32 %v1552, %v1377
        %v1557 = vmul.f32 %v1552, %v1381
        %v1558 = vmul.f32 %v1552, %v1385
        %v1559 = vmul.f32 %v1552, %v1389
        %v1560 = vmul.f32 %v1552, %v1393
        %1568 = vrot.lane.b32.xlu0 %v1554, 13
        %v1569 = vpop.permute.xlu0 %1568
        %1570 = vrot.lane.b32.xlu0 %v1555, 13
        %v1571 = vpop.permute.xlu0 %1570
        %1572 = vrot.lane.b32.xlu0 %v1556, 13
        %v1573 = vpop.permute.xlu0 %1572
        %1574 = vrot.lane.b32.xlu0 %v1557, 13
        %v1575 = vpop.permute.xlu0 %1574
        %1576 = vrot.lane.b32.xlu0 %v1558, 13
        %v1577 = vpop.permute.xlu0 %1576
        %1578 = vrot.lane.b32.xlu0 %v1559, 13
        %v1579 = vpop.permute.xlu0 %1578
        %1580 = vrot.lane.b32.xlu0 %v1560, 13
        %v1581 = vpop.permute.xlu0 %1580
        %vm1582 = vcmask 105472
        %v1583 = vsel %vm1582, %v1569, %v1571
        %v1584 = vsel %vm1582, %v1571, %v1573
        %v1585 = vsel %vm1582, %v1573, %v1575
        %v1586 = vsel %vm1582, %v1575, %v1577
        %v1587 = vsel %vm1582, %v1577, %v1579
        %v1588 = vsel %vm1582, %v1579, %v1581
        %v1595 = vadd.f32 %v1544, %v1583
        %v1596 = vadd.f32 %v1545, %v1584
        %v1597 = vadd.f32 %v1546, %v1585
        %v1598 = vadd.f32 %v1547, %v1586
        %v1599 = vadd.f32 %v1548, %v1587
        %v1600 = vadd.f32 %v1549, %v1588
        %1601 = vset.pattern.permute.xlu0 24
        %1602 = vperm.xlu0 %1601, %v436
        %v1603 = vpop.permute.xlu0 %1602
        %v1605 = vmul.f32 %v1603, %v1369
        %v1606 = vmul.f32 %v1603, %v1373
        %v1607 = vmul.f32 %v1603, %v1377
        %v1608 = vmul.f32 %v1603, %v1381
        %v1609 = vmul.f32 %v1603, %v1385
        %v1610 = vmul.f32 %v1603, %v1389
        %v1611 = vmul.f32 %v1603, %v1393
        %1619 = vrot.lane.b32.xlu0 %v1605, 12
        %v1620 = vpop.permute.xlu0 %1619
        %1621 = vrot.lane.b32.xlu0 %v1606, 12
        %v1622 = vpop.permute.xlu0 %1621
        %1623 = vrot.lane.b32.xlu0 %v1607, 12
        %v1624 = vpop.permute.xlu0 %1623
        %1625 = vrot.lane.b32.xlu0 %v1608, 12
        %v1626 = vpop.permute.xlu0 %1625
        %1627 = vrot.lane.b32.xlu0 %v1609, 12
        %v1628 = vpop.permute.xlu0 %1627
        %1629 = vrot.lane.b32.xlu0 %v1610, 12
        %v1630 = vpop.permute.xlu0 %1629
        %1631 = vrot.lane.b32.xlu0 %v1611, 12
        %v1632 = vpop.permute.xlu0 %1631
        %vm1633 = vcmask 97280
        %v1634 = vsel %vm1633, %v1620, %v1622
        %v1635 = vsel %vm1633, %v1622, %v1624
        %v1636 = vsel %vm1633, %v1624, %v1626
        %v1637 = vsel %vm1633, %v1626, %v1628
        %v1638 = vsel %vm1633, %v1628, %v1630
        %v1639 = vsel %vm1633, %v1630, %v1632
        %v1646 = vadd.f32 %v1595, %v1634
        %v1647 = vadd.f32 %v1596, %v1635
        %v1648 = vadd.f32 %v1597, %v1636
        %v1649 = vadd.f32 %v1598, %v1637
        %v1650 = vadd.f32 %v1599, %v1638
        %v1651 = vadd.f32 %v1600, %v1639
        %v1652 = vpack.c.bf16 %v1646, %v1646
        %v1653 = vpack.c.bf16 %v1647, %v1647
        %v1654 = vpack.c.bf16 %v1648, %v1648
        %v1655 = vpack.c.bf16 %v1649, %v1649
        %v1656 = vpack.c.bf16 %v1650, %v1650
        %v1657 = vpack.c.bf16 %v1651, %v1651
        %v1658 = vld [vmem:[%s3] sm:$0xff]
        %v1659 = vld [vmem:[%s3 + $0x8] sm:$0xff]
        %v1660 = vld [vmem:[%s3 + $0x10] sm:$0xff]
        %v1661 = vld [vmem:[%s3 + $0x18] sm:$0xff]
        %v1662 = vld [vmem:[%s3 + $0x20] sm:$0xff]
        %v1663 = vld [vmem:[%s3 + $0x28] sm:$0xff]
        %v1664 = vld [vmem:[%s3 + $0x30] sm:$0xff]
        %v1665 = vld [vmem:[%s3 + $0x38] sm:$0xff]
        %v1666 = vld [vmem:[%s3 + $0x40] sm:$0xff]
        %v1667 = vld [vmem:[%s3 + $0x48] sm:$0xff]
        %v1668 = vld [vmem:[%s3 + $0x50] sm:$0xff]
        %v1669 = vld [vmem:[%s3 + $0x58] sm:$0xff]
        %v1670 = vld [vmem:[%s3 + $0x60] sm:$0xff]
        %v1671 = vld [vmem:[%s3 + $0x68] sm:$0xff]
        %v1672 = vld [vmem:[%s3 + $0x70] sm:$0xff]
        %v1673 = vld [vmem:[%s3 + $0x78] sm:$0xff]
        %v1674 = vld [vmem:[%s3 + $0x80] sm:$0xff]
        %v1675 = vld [vmem:[%s3 + $0x88] sm:$0xff]
        %v1676 = vld [vmem:[%s3 + $0x90] sm:$0xff]
        %v1677 = vld [vmem:[%s3 + $0x98] sm:$0xff]
        %v1678 = vld [vmem:[%s3 + $0xa0] sm:$0xff]
        %v1679 = vld [vmem:[%s3 + $0xa8] sm:$0xff]
        %v1680 = vld [vmem:[%s3 + $0xb0] sm:$0xff]
        %v1681 = vld [vmem:[%s3 + $0xb8] sm:$0xff]
        %v1682 = vld [vmem:[%s3 + $0xc0] sm:$0xff]
        %v1683 = vld [vmem:[%s3 + $0xc8] sm:$0xff]
        %v1684 = vld [vmem:[%s3 + $0xd0] sm:$0xff]
        %v1685 = vld [vmem:[%s3 + $0xd8] sm:$0xff]
        %v1686 = vld [vmem:[%s3 + $0xe0] sm:$0xff]
        %v1687 = vld [vmem:[%s3 + $0xe8] sm:$0xff]
        %v1688 = vld [vmem:[%s3 + $0xf0] sm:$0xff]
        %v1689 = vld [vmem:[%s3 + $0xf8] sm:$0xff]
        %v1690 = vld [vmem:[%s3 + $0x100] sm:$0xff]
        %v1691 = vld [vmem:[%s3 + $0x108] sm:$0xff]
        %v1692 = vld [vmem:[%s3 + $0x110] sm:$0xff]
        %v1693 = vld [vmem:[%s3 + $0x118] sm:$0xff]
        %v1694 = vld [vmem:[%s3 + $0x120] sm:$0xff]
        %v1695 = vld [vmem:[%s3 + $0x128] sm:$0xff]
        %v1696 = vld [vmem:[%s3 + $0x130] sm:$0xff]
        %v1697 = vld [vmem:[%s3 + $0x138] sm:$0xff]
        %v1698 = vld [vmem:[%s3 + $0x140] sm:$0xff]
        %v1699 = vld [vmem:[%s3 + $0x148] sm:$0xff]
        %v1700 = vld [vmem:[%s3 + $0x150] sm:$0xff]
        %v1701 = vld [vmem:[%s3 + $0x158] sm:$0xff]
        %v1702 = vld [vmem:[%s3 + $0x160] sm:$0xff]
        %v1703 = vld [vmem:[%s3 + $0x168] sm:$0xff]
        %v1704 = vld [vmem:[%s3 + $0x170] sm:$0xff]
        %v1705 = vld [vmem:[%s3 + $0x178] sm:$0xff]
        %v1706 = vld [vmem:[%s3 + $0x180] sm:$0xff]
        %v1707 = vld [vmem:[%s3 + $0x188] sm:$0xff]
        %v1708 = vld [vmem:[%s3 + $0x190] sm:$0xff]
        %v1709 = vld [vmem:[%s3 + $0x198] sm:$0xff]
        %v1710 = vld [vmem:[%s3 + $0x1a0] sm:$0xff]
        %v1711 = vld [vmem:[%s3 + $0x1a8] sm:$0xff]
        %v1712 = vld [vmem:[%s3 + $0x1b0] sm:$0xff]
        %v1713 = vld [vmem:[%s3 + $0x1b8] sm:$0xff]
        %v1714 = vld [vmem:[%s3 + $0x1c0] sm:$0xff]
        %v1715 = vld [vmem:[%s3 + $0x1c8] sm:$0xff]
        %v1716 = vld [vmem:[%s3 + $0x1d0] sm:$0xff]
        %v1717 = vld [vmem:[%s3 + $0x1d8] sm:$0xff]
        %v1718 = vld [vmem:[%s3 + $0x1e0] sm:$0xff]
        %v1719 = vld [vmem:[%s3 + $0x1e8] sm:$0xff]
        %v1720 = vld [vmem:[%s3 + $0x1f0] sm:$0xff]
        %v1721 = vld [vmem:[%s3 + $0x1f8] sm:$0xff]
        %v1722 = vld [vmem:[%s3 + $0x200] sm:$0xff]
        %v1723 = vld [vmem:[%s3 + $0x208] sm:$0xff]
        %v1724 = vld [vmem:[%s3 + $0x210] sm:$0xff]
        %v1725 = vld [vmem:[%s3 + $0x218] sm:$0xff]
        %v1726 = vld [vmem:[%s3 + $0x220] sm:$0xff]
        %v1727 = vld [vmem:[%s3 + $0x228] sm:$0xff]
        %v1728 = vld [vmem:[%s3 + $0x230] sm:$0xff]
        %v1729 = vld [vmem:[%s3 + $0x238] sm:$0xff]
        %v1730 = vld [vmem:[%s3 + $0x240] sm:$0xff]
        %v1731 = vld [vmem:[%s3 + $0x248] sm:$0xff]
        %v1732 = vld [vmem:[%s3 + $0x250] sm:$0xff]
        %v1733 = vld [vmem:[%s3 + $0x258] sm:$0xff]
        %v1734 = vld [vmem:[%s3 + $0x260] sm:$0xff]
        %v1735 = vld [vmem:[%s3 + $0x268] sm:$0xff]
        %v1736 = vld [vmem:[%s3 + $0x270] sm:$0xff]
        %v1737 = vld [vmem:[%s3 + $0x278] sm:$0xff]
        %v1738 = vld [vmem:[%s3 + $0x280] sm:$0xff]
        %v1739 = vld [vmem:[%s3 + $0x288] sm:$0xff]
        %v1740 = vld [vmem:[%s3 + $0x290] sm:$0xff]
        %v1741 = vld [vmem:[%s3 + $0x298] sm:$0x33]
        %v1742 = vld [vmem:[%s2] sm:$0x3f]
        %1744 = vset.pattern.permute.xlu0 0
        %1745 = vperm.xlu0 %1744, %v1742
        %v1746 = vpop.permute.xlu0 %1745
        %v1832 = vunpack.c.l.b16 %v1658
        %v1833 = vunpack.c.h.b16 %v1658
        %v1834 = vunpack.c.l.b16 %v1659
        %v1835 = vunpack.c.h.b16 %v1659
        %v1836 = vunpack.c.l.b16 %v1660
        %v1837 = vunpack.c.h.b16 %v1660
        %v1838 = vunpack.c.l.b16 %v1661
        %v1839 = vunpack.c.h.b16 %v1661
        %v1840 = vunpack.c.l.b16 %v1662
        %v1841 = vunpack.c.h.b16 %v1662
        %v1842 = vunpack.c.l.b16 %v1663
        %v1843 = vunpack.c.h.b16 %v1663
        %v1844 = vunpack.c.l.b16 %v1664
        %v1845 = vunpack.c.h.b16 %v1664
        %v1846 = vunpack.c.l.b16 %v1665
        %v1847 = vunpack.c.h.b16 %v1665
        %v1848 = vunpack.c.l.b16 %v1666
        %v1849 = vunpack.c.h.b16 %v1666
        %v1850 = vunpack.c.l.b16 %v1667
        %v1851 = vunpack.c.h.b16 %v1667
        %v1852 = vunpack.c.l.b16 %v1668
        %v1853 = vunpack.c.h.b16 %v1668
        %v1854 = vunpack.c.l.b16 %v1669
        %v1855 = vunpack.c.h.b16 %v1669
        %v1856 = vunpack.c.l.b16 %v1670
        %v1857 = vunpack.c.h.b16 %v1670
        %v1858 = vunpack.c.l.b16 %v1671
        %v1859 = vunpack.c.h.b16 %v1671
        %v1860 = vunpack.c.l.b16 %v1672
        %v1861 = vunpack.c.h.b16 %v1672
        %v1862 = vunpack.c.l.b16 %v1673
        %v1863 = vunpack.c.h.b16 %v1673
        %v1864 = vunpack.c.l.b16 %v1674
        %v1865 = vunpack.c.h.b16 %v1674
        %v1866 = vunpack.c.l.b16 %v1675
        %v1867 = vunpack.c.h.b16 %v1675
        %v1868 = vunpack.c.l.b16 %v1676
        %v1869 = vunpack.c.h.b16 %v1676
        %v1870 = vunpack.c.l.b16 %v1677
        %v1871 = vunpack.c.h.b16 %v1677
        %v1872 = vunpack.c.l.b16 %v1678
        %v1873 = vunpack.c.h.b16 %v1678
        %v1874 = vunpack.c.l.b16 %v1679
        %v1875 = vunpack.c.h.b16 %v1679
        %v1876 = vunpack.c.l.b16 %v1680
        %v1877 = vunpack.c.h.b16 %v1680
        %v1878 = vunpack.c.l.b16 %v1681
        %v1879 = vunpack.c.h.b16 %v1681
        %v1880 = vunpack.c.l.b16 %v1682
        %v1881 = vunpack.c.h.b16 %v1682
        %v1882 = vunpack.c.l.b16 %v1683
        %v1883 = vunpack.c.h.b16 %v1683
        %v1884 = vunpack.c.l.b16 %v1684
        %v1885 = vunpack.c.h.b16 %v1684
        %v1886 = vunpack.c.l.b16 %v1685
        %v1887 = vunpack.c.h.b16 %v1685
        %v1888 = vunpack.c.l.b16 %v1686
        %v1889 = vunpack.c.h.b16 %v1686
        %v1890 = vunpack.c.l.b16 %v1687
        %v1891 = vunpack.c.h.b16 %v1687
        %v1892 = vunpack.c.l.b16 %v1688
        %v1893 = vunpack.c.h.b16 %v1688
        %v1894 = vunpack.c.l.b16 %v1689
        %v1895 = vunpack.c.h.b16 %v1689
        %v1896 = vunpack.c.l.b16 %v1690
        %v1897 = vunpack.c.h.b16 %v1690
        %v1898 = vunpack.c.l.b16 %v1691
        %v1899 = vunpack.c.h.b16 %v1691
        %v1900 = vunpack.c.l.b16 %v1692
        %v1901 = vunpack.c.h.b16 %v1692
        %v1902 = vunpack.c.l.b16 %v1693
        %v1903 = vunpack.c.h.b16 %v1693
        %v1904 = vunpack.c.l.b16 %v1694
        %v1905 = vunpack.c.h.b16 %v1694
        %v1906 = vunpack.c.l.b16 %v1695
        %v1907 = vunpack.c.h.b16 %v1695
        %v1908 = vunpack.c.l.b16 %v1696
        %v1909 = vunpack.c.h.b16 %v1696
        %v1910 = vunpack.c.l.b16 %v1697
        %v1911 = vunpack.c.h.b16 %v1697
        %v1912 = vunpack.c.l.b16 %v1698
        %v1913 = vunpack.c.h.b16 %v1698
        %v1914 = vunpack.c.l.b16 %v1699
        %v1915 = vunpack.c.h.b16 %v1699
        %v1916 = vunpack.c.l.b16 %v1700
        %v1917 = vunpack.c.h.b16 %v1700
        %v1918 = vunpack.c.l.b16 %v1701
        %v1919 = vunpack.c.h.b16 %v1701
        %v1920 = vunpack.c.l.b16 %v1702
        %v1921 = vunpack.c.h.b16 %v1702
        %v1922 = vunpack.c.l.b16 %v1703
        %v1923 = vunpack.c.h.b16 %v1703
        %v1924 = vunpack.c.l.b16 %v1704
        %v1925 = vunpack.c.h.b16 %v1704
        %v1926 = vunpack.c.l.b16 %v1705
        %v1927 = vunpack.c.h.b16 %v1705
        %v1928 = vunpack.c.l.b16 %v1706
        %v1929 = vunpack.c.h.b16 %v1706
        %v1930 = vunpack.c.l.b16 %v1707
        %v1931 = vunpack.c.h.b16 %v1707
        %v1932 = vunpack.c.l.b16 %v1708
        %v1933 = vunpack.c.h.b16 %v1708
        %v1934 = vunpack.c.l.b16 %v1709
        %v1935 = vunpack.c.h.b16 %v1709
        %v1936 = vunpack.c.l.b16 %v1710
        %v1937 = vunpack.c.h.b16 %v1710
        %v1938 = vunpack.c.l.b16 %v1711
        %v1939 = vunpack.c.h.b16 %v1711
        %v1940 = vunpack.c.l.b16 %v1712
        %v1941 = vunpack.c.h.b16 %v1712
        %v1942 = vunpack.c.l.b16 %v1713
        %v1943 = vunpack.c.h.b16 %v1713
        %v1944 = vunpack.c.l.b16 %v1714
        %v1945 = vunpack.c.h.b16 %v1714
        %v1946 = vunpack.c.l.b16 %v1715
        %v1947 = vunpack.c.h.b16 %v1715
        %v1948 = vunpack.c.l.b16 %v1716
        %v1949 = vunpack.c.h.b16 %v1716
        %v1950 = vunpack.c.l.b16 %v1717
        %v1951 = vunpack.c.h.b16 %v1717
        %v1952 = vunpack.c.l.b16 %v1718
        %v1953 = vunpack.c.h.b16 %v1718
        %v1954 = vunpack.c.l.b16 %v1719
        %v1955 = vunpack.c.h.b16 %v1719
        %v1956 = vunpack.c.l.b16 %v1720
        %v1957 = vunpack.c.h.b16 %v1720
        %v1958 = vunpack.c.l.b16 %v1721
        %v1959 = vunpack.c.h.b16 %v1721
        %v1960 = vunpack.c.l.b16 %v1722
        %v1961 = vunpack.c.h.b16 %v1722
        %v1962 = vunpack.c.l.b16 %v1723
        %v1963 = vunpack.c.h.b16 %v1723
        %v1964 = vunpack.c.l.b16 %v1724
        %v1965 = vunpack.c.h.b16 %v1724
        %v1966 = vunpack.c.l.b16 %v1725
        %v1967 = vunpack.c.h.b16 %v1725
        %v1968 = vunpack.c.l.b16 %v1726
        %v1969 = vunpack.c.h.b16 %v1726
        %v1970 = vunpack.c.l.b16 %v1727
        %v1971 = vunpack.c.h.b16 %v1727
        %v1972 = vunpack.c.l.b16 %v1728
        %v1973 = vunpack.c.h.b16 %v1728
        %v1974 = vunpack.c.l.b16 %v1729
        %v1975 = vunpack.c.h.b16 %v1729
        %v1976 = vunpack.c.l.b16 %v1730
        %v1977 = vunpack.c.h.b16 %v1730
        %v1978 = vunpack.c.l.b16 %v1731
        %v1979 = vunpack.c.h.b16 %v1731
        %v1980 = vunpack.c.l.b16 %v1732
        %v1981 = vunpack.c.h.b16 %v1732
        %v1982 = vunpack.c.l.b16 %v1733
        %v1983 = vunpack.c.h.b16 %v1733
        %v1984 = vunpack.c.l.b16 %v1734
        %v1985 = vunpack.c.h.b16 %v1734
        %v1986 = vunpack.c.l.b16 %v1735
        %v1987 = vunpack.c.h.b16 %v1735
        %v1988 = vunpack.c.l.b16 %v1736
        %v1989 = vunpack.c.h.b16 %v1736
        %v1990 = vunpack.c.l.b16 %v1737
        %v1991 = vunpack.c.h.b16 %v1737
        %v1992 = vunpack.c.l.b16 %v1738
        %v1993 = vunpack.c.h.b16 %v1738
        %v1994 = vunpack.c.l.b16 %v1739
        %v1995 = vunpack.c.h.b16 %v1739
        %v1996 = vunpack.c.l.b16 %v1740
        %v1997 = vunpack.c.h.b16 %v1740
        %v1998 = vunpack.c.l.b16 %v1741
        %v1999 = vunpack.c.h.b16 %v1741
        %v2000 = vpack.c.b16 %v1834, %v1832
        %v2001 = vpack.c.b16 %v1835, %v1833
        %v2002 = vpack.c.b16 %v1838, %v1836
        %v2003 = vpack.c.b16 %v1839, %v1837
        %v2004 = vpack.c.b16 %v1842, %v1840
        %v2005 = vpack.c.b16 %v1843, %v1841
        %v2006 = vpack.c.b16 %v1846, %v1844
        %v2007 = vpack.c.b16 %v1847, %v1845
        %v2008 = vpack.c.b16 %v1850, %v1848
        %v2009 = vpack.c.b16 %v1851, %v1849
        %v2010 = vpack.c.b16 %v1854, %v1852
        %v2011 = vpack.c.b16 %v1855, %v1853
        %v2012 = vpack.c.b16 %v1858, %v1856
        %v2013 = vpack.c.b16 %v1859, %v1857
        %v2014 = vpack.c.b16 %v1862, %v1860
        %v2015 = vpack.c.b16 %v1863, %v1861
        %v2016 = vpack.c.b16 %v1866, %v1864
        %v2017 = vpack.c.b16 %v1867, %v1865
        %v2018 = vpack.c.b16 %v1870, %v1868
        %v2019 = vpack.c.b16 %v1871, %v1869
        %v2020 = vpack.c.b16 %v1874, %v1872
        %v2021 = vpack.c.b16 %v1875, %v1873
        %v2022 = vpack.c.b16 %v1878, %v1876
        %v2023 = vpack.c.b16 %v1879, %v1877
        %v2024 = vpack.c.b16 %v1882, %v1880
        %v2025 = vpack.c.b16 %v1883, %v1881
        %v2026 = vpack.c.b16 %v1886, %v1884
        %v2027 = vpack.c.b16 %v1887, %v1885
        %v2028 = vpack.c.b16 %v1890, %v1888
        %v2029 = vpack.c.b16 %v1891, %v1889
        %v2030 = vpack.c.b16 %v1894, %v1892
        %v2031 = vpack.c.b16 %v1895, %v1893
        %v2032 = vpack.c.b16 %v1898, %v1896
        %v2033 = vpack.c.b16 %v1899, %v1897
        %v2034 = vpack.c.b16 %v1902, %v1900
        %v2035 = vpack.c.b16 %v1903, %v1901
        %v2036 = vpack.c.b16 %v1906, %v1904
        %v2037 = vpack.c.b16 %v1907, %v1905
        %v2038 = vpack.c.b16 %v1910, %v1908
        %v2039 = vpack.c.b16 %v1911, %v1909
        %v2040 = vpack.c.b16 %v1914, %v1912
        %v2041 = vpack.c.b16 %v1915, %v1913
        %v2042 = vpack.c.b16 %v1918, %v1916
        %v2043 = vpack.c.b16 %v1919, %v1917
        %v2044 = vpack.c.b16 %v1922, %v1920
        %v2045 = vpack.c.b16 %v1923, %v1921
        %v2046 = vpack.c.b16 %v1926, %v1924
        %v2047 = vpack.c.b16 %v1927, %v1925
        %v2048 = vpack.c.b16 %v1930, %v1928
        %v2049 = vpack.c.b16 %v1931, %v1929
        %v2050 = vpack.c.b16 %v1934, %v1932
        %v2051 = vpack.c.b16 %v1935, %v1933
        %v2052 = vpack.c.b16 %v1938, %v1936
        %v2053 = vpack.c.b16 %v1939, %v1937
        %v2054 = vpack.c.b16 %v1942, %v1940
        %v2055 = vpack.c.b16 %v1943, %v1941
        %v2056 = vpack.c.b16 %v1946, %v1944
        %v2057 = vpack.c.b16 %v1947, %v1945
        %v2058 = vpack.c.b16 %v1950, %v1948
        %v2059 = vpack.c.b16 %v1951, %v1949
        %v2060 = vpack.c.b16 %v1954, %v1952
        %v2061 = vpack.c.b16 %v1955, %v1953
        %v2062 = vpack.c.b16 %v1958, %v1956
        %v2063 = vpack.c.b16 %v1959, %v1957
        %v2064 = vpack.c.b16 %v1962, %v1960
        %v2065 = vpack.c.b16 %v1963, %v1961
        %v2066 = vpack.c.b16 %v1966, %v1964
        %v2067 = vpack.c.b16 %v1967, %v1965
        %v2068 = vpack.c.b16 %v1970, %v1968
        %v2069 = vpack.c.b16 %v1971, %v1969
        %v2070 = vpack.c.b16 %v1974, %v1972
        %v2071 = vpack.c.b16 %v1975, %v1973
        %v2072 = vpack.c.b16 %v1978, %v1976
        %v2073 = vpack.c.b16 %v1979, %v1977
        %v2074 = vpack.c.b16 %v1982, %v1980
        %v2075 = vpack.c.b16 %v1983, %v1981
        %v2076 = vpack.c.b16 %v1986, %v1984
        %v2077 = vpack.c.b16 %v1987, %v1985
        %v2078 = vpack.c.b16 %v1990, %v1988
        %v2079 = vpack.c.b16 %v1991, %v1989
        %v2080 = vpack.c.b16 %v1994, %v1992
        %v2081 = vpack.c.b16 %v1995, %v1993
        %v2082 = vpack.c.b16 %v1998, %v1996
        %v2083 = vpack.c.b16 %v1999, %v1997
        %vm2166 = vcmask 228352
        %v2168 = vsel %vm2166, %v1657, 0
        %vm2170 = vcmask 1045504
        %v2172 = vsel %vm2170, %v2082, 0
        %v2175 = vsel %vm2170, %v2083, 0
        %2177 = vmatprep.subr.bf16.mxu0 %v2001
        %2178 = vmatpush1.bf16.msra.mxu0 %v2000
        %2179 = vmatprep.subr.bf16.mxu0 %v2003
        %2180 = vmatpush1.bf16.msra.mxu0 %v2002
        %2181 = vmatprep.subr.bf16.mxu0 %v2005
        %2182 = vmatpush1.bf16.msra.mxu0 %v2004
        %2183 = vmatprep.subr.bf16.mxu0 %v2007
        %2184 = vmatpush1.bf16.msra.mxu0 %v2006
        %2185 = vmatprep.subr.bf16.mxu0 %v2009
        %2186 = vmatpush1.bf16.msra.mxu0 %v2008
        %2187 = vmatprep.subr.bf16.mxu0 %v2011
        %2188 = vmatpush1.bf16.msra.mxu0 %v2010
        %2189 = vmatprep.subr.bf16.mxu0 %v2013
        %2190 = vmatpush1.bf16.msra.mxu0 %v2012
        %2191 = vmatprep.subr.bf16.mxu0 %v2015
        %2192 = vmatpush1.bf16.msra.mxu0 %v2014
        %2193 = vmatprep.subr.bf16.mxu0 %v2017
        %2194 = vmatpush1.bf16.msra.mxu0 %v2016
        %2195 = vmatprep.subr.bf16.mxu0 %v2019
        %2196 = vmatpush1.bf16.msra.mxu0 %v2018
        %2197 = vmatprep.subr.bf16.mxu0 %v2021
        %2198 = vmatpush1.bf16.msra.mxu0 %v2020
        %2199 = vmatprep.subr.bf16.mxu0 %v2023
        %2200 = vmatpush1.bf16.msra.mxu0 %v2022
        %2201 = vmatprep.subr.bf16.mxu0 %v2025
        %2202 = vmatpush1.bf16.msra.mxu0 %v2024
        %2203 = vmatprep.subr.bf16.mxu0 %v2027
        %2204 = vmatpush1.bf16.msra.mxu0 %v2026
        %2205 = vmatprep.subr.bf16.mxu0 %v2029
        %2206 = vmatpush1.bf16.msra.mxu0 %v2028
        %2207 = vmatprep.subr.bf16.mxu0 %v2031
        %2208 = vmatpush1.bf16.msra.mxu0 %v2030
        %2209 = vmatprep.mubr.bf16.mxu0 %v1653
        %2210 = vmatmul.mubr.bf16.gmra.mrb[0].mxu0 %v1652
        %v2211 = vpop.f32.mrb[0].mxu0
        %v2212 = vadd.f32 %v1746, %v2211
        %v2213 = vpop.f32.mrb[0].mxu0
        %v2214 = vadd.f32 %v1746, %v2213
        %v2215 = vpop.f32.mrb[0].mxu0
        %v2216 = vpop.f32.mrb[0].mxu0
        %2217 = vdwg.mxu0
        %2218 = vmatprep.subr.bf16.mxu0 %v2033
        %2219 = vmatpush1.bf16.msra.mxu0 %v2032
        %2220 = vmatprep.subr.bf16.mxu0 %v2035
        %2221 = vmatpush1.bf16.msra.mxu0 %v2034
        %2222 = vmatprep.subr.bf16.mxu0 %v2037
        %2223 = vmatpush1.bf16.msra.mxu0 %v2036
        %2224 = vmatprep.subr.bf16.mxu0 %v2039
        %2225 = vmatpush1.bf16.msra.mxu0 %v2038
        %2226 = vmatprep.subr.bf16.mxu0 %v2041
        %2227 = vmatpush1.bf16.msra.mxu0 %v2040
        %2228 = vmatprep.subr.bf16.mxu0 %v2043
        %2229 = vmatpush1.bf16.msra.mxu0 %v2042
        %2230 = vmatprep.subr.bf16.mxu0 %v2045
        %2231 = vmatpush1.bf16.msra.mxu0 %v2044
        %2232 = vmatprep.subr.bf16.mxu0 %v2047
        %2233 = vmatpush1.bf16.msra.mxu0 %v2046
        %2234 = vmatprep.subr.bf16.mxu0 %v2049
        %2235 = vmatpush1.bf16.msra.mxu0 %v2048
        %2236 = vmatprep.subr.bf16.mxu0 %v2051
        %2237 = vmatpush1.bf16.msra.mxu0 %v2050
        %2238 = vmatprep.subr.bf16.mxu0 %v2053
        %2239 = vmatpush1.bf16.msra.mxu0 %v2052
        %2240 = vmatprep.subr.bf16.mxu0 %v2055
        %2241 = vmatpush1.bf16.msra.mxu0 %v2054
        %2242 = vmatprep.subr.bf16.mxu0 %v2057
        %2243 = vmatpush1.bf16.msra.mxu0 %v2056
        %2244 = vmatprep.subr.bf16.mxu0 %v2059
        %2245 = vmatpush1.bf16.msra.mxu0 %v2058
        %2246 = vmatprep.subr.bf16.mxu0 %v2061
        %2247 = vmatpush1.bf16.msra.mxu0 %v2060
        %2248 = vmatprep.subr.bf16.mxu0 %v2063
        %2249 = vmatpush1.bf16.msra.mxu0 %v2062
        %2250 = vmatprep.mubr.bf16.mxu0 %v1655
        %2251 = vmatmul.mubr.bf16.gmra.mrb[0].mxu0 %v1654
        %v2252 = vpop.f32.mrb[0].mxu0
        %v2253 = vadd.f32 %v2212, %v2252
        %v2254 = vpop.f32.mrb[0].mxu0
        %v2255 = vadd.f32 %v2214, %v2254
        %v2256 = vpop.f32.mrb[0].mxu0
        %v2257 = vpop.f32.mrb[0].mxu0
        %2258 = vdwg.mxu0
        %2259 = vmatprep.subr.bf16.mxu0 %v2065
        %2260 = vmatpush1.bf16.msra.mxu0 %v2064
        %2261 = vmatprep.subr.bf16.mxu0 %v2067
        %2262 = vmatpush1.bf16.msra.mxu0 %v2066
        %2263 = vmatprep.subr.bf16.mxu0 %v2069
        %2264 = vmatpush1.bf16.msra.mxu0 %v2068
        %2265 = vmatprep.subr.bf16.mxu0 %v2071
        %2266 = vmatpush1.bf16.msra.mxu0 %v2070
        %2267 = vmatprep.subr.bf16.mxu0 %v2073
        %2268 = vmatpush1.bf16.msra.mxu0 %v2072
        %2269 = vmatprep.subr.bf16.mxu0 %v2075
        %2270 = vmatpush1.bf16.msra.mxu0 %v2074
        %2271 = vmatprep.subr.bf16.mxu0 %v2077
        %2272 = vmatpush1.bf16.msra.mxu0 %v2076
        %2273 = vmatprep.subr.bf16.mxu0 %v2079
        %2274 = vmatpush1.bf16.msra.mxu0 %v2078
        %2275 = vmatprep.subr.bf16.mxu0 %v2081
        %2276 = vmatpush1.bf16.msra.mxu0 %v2080
        %2277 = vmatprep.subr.bf16.mxu0 %v2175
        %2278 = vmatpush1.bf16.msra.mxu0 %v2172
        %2279 = vmatprep.subr.bf16.mxu0 0
        %2280 = vmatpush1.bf16.msra.mxu0 0
        %2281 = vmatprep.subr.bf16.mxu0 0
        %2282 = vmatpush1.bf16.msra.mxu0 0
        %2283 = vmatprep.subr.bf16.mxu0 0
        %2284 = vmatpush1.bf16.msra.mxu0 0
        %2285 = vmatprep.subr.bf16.mxu0 0
        %2286 = vmatpush1.bf16.msra.mxu0 0
        %2287 = vmatprep.subr.bf16.mxu0 0
        %2288 = vmatpush1.bf16.msra.mxu0 0
        %2289 = vmatprep.subr.bf16.mxu0 0
        %2290 = vmatpush1.bf16.msra.mxu0 0
        %2291 = vmatprep.mubr.bf16.mxu0 %v2168
        %2292 = vmatmul.mubr.bf16.gmra.mrb[0].mxu0 %v1656
        %v2293 = vpop.f32.mrb[0].mxu0
        %v2294 = vadd.f32 %v2253, %v2293
        %v2295 = vpop.f32.mrb[0].mxu0
        %v2296 = vadd.f32 %v2255, %v2295
        %v2297 = vpop.f32.mrb[0].mxu0
        %v2298 = vpop.f32.mrb[0].mxu0
        %2299 = vdwg.mxu0
        %v2300 = vpack.c.bf16 %v2294, %v2294
        %v2301 = vpack.c.bf16 %v2296, %v2296
        %v2302 = vld [vmem:[%s4] sm:$0xf]
        %v2303 = vld [vmem:[%s4 + $0x8] sm:$0xf]
        %v2306 = vunpack.c.l.b16 %v2302
        %v2307 = vunpack.c.l.b16 %v2303
        %v2308 = vpack.c.b16 %v2307, %v2306
        %2309 = vrot.lane.b32.xlu0 %v2308, 122
        %v2310 = vpop.permute.xlu0 %2309
        %2312 = vrot.lane.b32.xlu0 %v2300, 127
        %v2313 = vpop.permute.xlu0 %2312
        %vm2314 = vcmask 48128
        %v2316 = vsel %vm2314, %v2310, 0
        %vm2318 = vcmask 1042432
        %v2320 = vsel %vm2318, %v2313, 0
        %2322 = vmatprep.subr.bf16.mxu0 0
        %2323 = vmatpush1.bf16.msra.mxu0 %v2320
        %2324 = vmatprep.subr.bf16.mxu0 0
        %2325 = vmatpush1.bf16.msra.mxu0 0
        %2326 = vmatprep.subr.bf16.mxu0 0
        %2327 = vmatpush1.bf16.msra.mxu0 0
        %2328 = vmatprep.subr.bf16.mxu0 0
        %2329 = vmatpush1.bf16.msra.mxu0 0
        %2330 = vmatprep.subr.bf16.mxu0 0
        %2331 = vmatpush1.bf16.msra.mxu0 0
        %2332 = vmatprep.subr.bf16.mxu0 0
        %2333 = vmatpush1.bf16.msra.mxu0 0
        %2334 = vmatprep.subr.bf16.mxu0 0
        %2335 = vmatpush1.bf16.msra.mxu0 0
        %2336 = vmatprep.subr.bf16.mxu0 0
        %2337 = vmatpush1.bf16.msra.mxu0 0
        %2338 = vmatprep.subr.bf16.mxu0 0
        %2339 = vmatpush1.bf16.msra.mxu0 0
        %2340 = vmatprep.subr.bf16.mxu0 0
        %2341 = vmatpush1.bf16.msra.mxu0 0
        %2342 = vmatprep.subr.bf16.mxu0 0
        %2343 = vmatpush1.bf16.msra.mxu0 0
        %2344 = vmatprep.subr.bf16.mxu0 0
        %2345 = vmatpush1.bf16.msra.mxu0 0
        %2346 = vmatprep.subr.bf16.mxu0 0
        %2347 = vmatpush1.bf16.msra.mxu0 0
        %2348 = vmatprep.subr.bf16.mxu0 0
        %2349 = vmatpush1.bf16.msra.mxu0 0
        %2350 = vmatprep.subr.bf16.mxu0 0
        %2351 = vmatpush1.bf16.msra.mxu0 0
        %2352 = vmatprep.subr.bf16.mxu0 0
        %2353 = vmatpush1.bf16.msra.mxu0 0
        %2354 = vmatprep.mubr.bf16.mxu0 0
        %2355 = vmatmul.mubr.bf16.gmra.mrb[0].mxu0 %v2316
        %v2356 = vpop.f32.mrb[0].mxu0
        %v2357 = vadd.f32 0.0, %v2356
        %v2358 = vpop.f32.mrb[0].mxu0
        %v2359 = vpop.f32.mrb[0].mxu0
        %v2360 = vadd.f32 0.0, %v2359
        %v2361 = vpop.f32.mrb[0].mxu0
        %2362 = vdwg.mxu0
        %v2364 = vsel %vm2314, %v2308, 0
        %v2367 = vsel %vm2318, %v2300, 0
        %2369 = vmatprep.subr.bf16.mxu0 0
        %2370 = vmatpush1.bf16.msra.mxu0 %v2367
        %2371 = vmatprep.subr.bf16.mxu0 0
        %2372 = vmatpush1.bf16.msra.mxu0 0
        %2373 = vmatprep.subr.bf16.mxu0 0
        %2374 = vmatpush1.bf16.msra.mxu0 0
        %2375 = vmatprep.subr.bf16.mxu0 0
        %2376 = vmatpush1.bf16.msra.mxu0 0
        %2377 = vmatprep.subr.bf16.mxu0 0
        %2378 = vmatpush1.bf16.msra.mxu0 0
        %2379 = vmatprep.subr.bf16.mxu0 0
        %2380 = vmatpush1.bf16.msra.mxu0 0
        %2381 = vmatprep.subr.bf16.mxu0 0
        %2382 = vmatpush1.bf16.msra.mxu0 0
        %2383 = vmatprep.subr.bf16.mxu0 0
        %2384 = vmatpush1.bf16.msra.mxu0 0
        %2385 = vmatprep.subr.bf16.mxu0 0
        %2386 = vmatpush1.bf16.msra.mxu0 0
        %2387 = vmatprep.subr.bf16.mxu0 0
        %2388 = vmatpush1.bf16.msra.mxu0 0
        %2389 = vmatprep.subr.bf16.mxu0 0
        %2390 = vmatpush1.bf16.msra.mxu0 0
        %2391 = vmatprep.subr.bf16.mxu0 0
        %2392 = vmatpush1.bf16.msra.mxu0 0
        %2393 = vmatprep.subr.bf16.mxu0 0
        %2394 = vmatpush1.bf16.msra.mxu0 0
        %2395 = vmatprep.subr.bf16.mxu0 0
        %2396 = vmatpush1.bf16.msra.mxu0 0
        %2397 = vmatprep.subr.bf16.mxu0 0
        %2398 = vmatpush1.bf16.msra.mxu0 0
        %2399 = vmatprep.subr.bf16.mxu0 0
        %2400 = vmatpush1.bf16.msra.mxu0 0
        %2401 = vmatprep.mubr.bf16.mxu0 0
        %2402 = vmatmul.mubr.bf16.gmra.mrb[0].mxu0 %v2364
        %v2403 = vpop.f32.mrb[0].mxu0
        %v2404 = vadd.f32 %v2357, %v2403
        %v2405 = vpop.f32.mrb[0].mxu0
        %v2406 = vpop.f32.mrb[0].mxu0
        %v2407 = vadd.f32 %v2360, %v2406
        %v2408 = vpop.f32.mrb[0].mxu0
        %2409 = vdwg.mxu0
        %2410 = vrot.lane.b32.xlu0 %v2308, 116
        %v2411 = vpop.permute.xlu0 %2410
        %2412 = vrot.lane.b32.xlu0 %v2300, 126
        %v2413 = vpop.permute.xlu0 %2412
        %v2415 = vsel %vm2314, %v2411, 0
        %v2418 = vsel %vm2318, %v2413, 0
        %2420 = vmatprep.subr.bf16.mxu0 0
        %2421 = vmatpush1.bf16.msra.mxu0 %v2418
        %2422 = vmatprep.subr.bf16.mxu0 0
        %2423 = vmatpush1.bf16.msra.mxu0 0
        %2424 = vmatprep.subr.bf16.mxu0 0
        %2425 = vmatpush1.bf16.msra.mxu0 0
        %2426 = vmatprep.subr.bf16.mxu0 0
        %2427 = vmatpush1.bf16.msra.mxu0 0
        %2428 = vmatprep.subr.bf16.mxu0 0
        %2429 = vmatpush1.bf16.msra.mxu0 0
        %2430 = vmatprep.subr.bf16.mxu0 0
        %2431 = vmatpush1.bf16.msra.mxu0 0
        %2432 = vmatprep.subr.bf16.mxu0 0
        %2433 = vmatpush1.bf16.msra.mxu0 0
        %2434 = vmatprep.subr.bf16.mxu0 0
        %2435 = vmatpush1.bf16.msra.mxu0 0
        %2436 = vmatprep.subr.bf16.mxu0 0
        %2437 = vmatpush1.bf16.msra.mxu0 0
        %2438 = vmatprep.subr.bf16.mxu0 0
        %2439 = vmatpush1.bf16.msra.mxu0 0
        %2440 = vmatprep.subr.bf16.mxu0 0
        %2441 = vmatpush1.bf16.msra.mxu0 0
        %2442 = vmatprep.subr.bf16.mxu0 0
        %2443 = vmatpush1.bf16.msra.mxu0 0
        %2444 = vmatprep.subr.bf16.mxu0 0
        %2445 = vmatpush1.bf16.msra.mxu0 0
        %2446 = vmatprep.subr.bf16.mxu0 0
        %2447 = vmatpush1.bf16.msra.mxu0 0
        %2448 = vmatprep.subr.bf16.mxu0 0
        %2449 = vmatpush1.bf16.msra.mxu0 0
        %2450 = vmatprep.subr.bf16.mxu0 0
        %2451 = vmatpush1.bf16.msra.mxu0 0
        %2452 = vmatprep.mubr.bf16.mxu0 0
        %2453 = vmatmul.mubr.bf16.gmra.mrb[0].mxu0 %v2415
        %v2454 = vpop.f32.mrb[0].mxu0
        %v2455 = vadd.f32 0.0, %v2454
        %v2456 = vpop.f32.mrb[0].mxu0
        %v2457 = vpop.f32.mrb[0].mxu0
        %v2458 = vadd.f32 0.0, %v2457
        %v2459 = vpop.f32.mrb[0].mxu0
        %2460 = vdwg.mxu0
        %v2461 = vadd.f32 %v2404, %v2455
        %v2462 = vadd.f32 %v2407, %v2458
        %2463 = vrot.lane.b32.xlu0 %v2308, 110
        %v2464 = vpop.permute.xlu0 %2463
        %2465 = vrot.lane.b32.xlu0 %v2300, 125
        %v2466 = vpop.permute.xlu0 %2465
        %v2468 = vsel %vm2314, %v2464, 0
        %v2471 = vsel %vm2318, %v2466, 0
        %2473 = vmatprep.subr.bf16.mxu0 0
        %2474 = vmatpush1.bf16.msra.mxu0 %v2471
        %2475 = vmatprep.subr.bf16.mxu0 0
        %2476 = vmatpush1.bf16.msra.mxu0 0
        %2477 = vmatprep.subr.bf16.mxu0 0
        %2478 = vmatpush1.bf16.msra.mxu0 0
        %2479 = vmatprep.subr.bf16.mxu0 0
        %2480 = vmatpush1.bf16.msra.mxu0 0
        %2481 = vmatprep.subr.bf16.mxu0 0
        %2482 = vmatpush1.bf16.msra.mxu0 0
        %2483 = vmatprep.subr.bf16.mxu0 0
        %2484 = vmatpush1.bf16.msra.mxu0 0
        %2485 = vmatprep.subr.bf16.mxu0 0
        %2486 = vmatpush1.bf16.msra.mxu0 0
        %2487 = vmatprep.subr.bf16.mxu0 0
        %2488 = vmatpush1.bf16.msra.mxu0 0
        %2489 = vmatprep.subr.bf16.mxu0 0
        %2490 = vmatpush1.bf16.msra.mxu0 0
        %2491 = vmatprep.subr.bf16.mxu0 0
        %2492 = vmatpush1.bf16.msra.mxu0 0
        %2493 = vmatprep.subr.bf16.mxu0 0
        %2494 = vmatpush1.bf16.msra.mxu0 0
        %2495 = vmatprep.subr.bf16.mxu0 0
        %2496 = vmatpush1.bf16.msra.mxu0 0
        %2497 = vmatprep.subr.bf16.mxu0 0
        %2498 = vmatpush1.bf16.msra.mxu0 0
        %2499 = vmatprep.subr.bf16.mxu0 0
        %2500 = vmatpush1.bf16.msra.mxu0 0
        %2501 = vmatprep.subr.bf16.mxu0 0
        %2502 = vmatpush1.bf16.msra.mxu0 0
        %2503 = vmatprep.subr.bf16.mxu0 0
        %2504 = vmatpush1.bf16.msra.mxu0 0
        %2505 = vmatprep.mubr.bf16.mxu0 0
        %2506 = vmatmul.mubr.bf16.gmra.mrb[0].mxu0 %v2468
        %v2507 = vpop.f32.mrb[0].mxu0
        %v2508 = vadd.f32 0.0, %v2507
        %v2509 = vpop.f32.mrb[0].mxu0
        %v2510 = vpop.f32.mrb[0].mxu0
        %v2511 = vadd.f32 0.0, %v2510
        %v2512 = vpop.f32.mrb[0].mxu0
        %2513 = vdwg.mxu0
        %v2514 = vadd.f32 %v2461, %v2508
        %v2515 = vadd.f32 %v2462, %v2511
        %2516 = vrot.lane.b32.xlu0 %v2308, 104
        %v2517 = vpop.permute.xlu0 %2516
        %2518 = vrot.lane.b32.xlu0 %v2300, 124
        %v2519 = vpop.permute.xlu0 %2518
        %v2521 = vsel %vm2314, %v2517, 0
        %v2524 = vsel %vm2318, %v2519, 0
        %2526 = vmatprep.subr.bf16.mxu0 0
        %2527 = vmatpush1.bf16.msra.mxu0 %v2524
        %2528 = vmatprep.subr.bf16.mxu0 0
        %2529 = vmatpush1.bf16.msra.mxu0 0
        %2530 = vmatprep.subr.bf16.mxu0 0
        %2531 = vmatpush1.bf16.msra.mxu0 0
        %2532 = vmatprep.subr.bf16.mxu0 0
        %2533 = vmatpush1.bf16.msra.mxu0 0
        %2534 = vmatprep.subr.bf16.mxu0 0
        %2535 = vmatpush1.bf16.msra.mxu0 0
        %2536 = vmatprep.subr.bf16.mxu0 0
        %2537 = vmatpush1.bf16.msra.mxu0 0
        %2538 = vmatprep.subr.bf16.mxu0 0
        %2539 = vmatpush1.bf16.msra.mxu0 0
        %2540 = vmatprep.subr.bf16.mxu0 0
        %2541 = vmatpush1.bf16.msra.mxu0 0
        %2542 = vmatprep.subr.bf16.mxu0 0
        %2543 = vmatpush1.bf16.msra.mxu0 0
        %2544 = vmatprep.subr.bf16.mxu0 0
        %2545 = vmatpush1.bf16.msra.mxu0 0
        %2546 = vmatprep.subr.bf16.mxu0 0
        %2547 = vmatpush1.bf16.msra.mxu0 0
        %2548 = vmatprep.subr.bf16.mxu0 0
        %2549 = vmatpush1.bf16.msra.mxu0 0
        %2550 = vmatprep.subr.bf16.mxu0 0
        %2551 = vmatpush1.bf16.msra.mxu0 0
        %2552 = vmatprep.subr.bf16.mxu0 0
        %2553 = vmatpush1.bf16.msra.mxu0 0
        %2554 = vmatprep.subr.bf16.mxu0 0
        %2555 = vmatpush1.bf16.msra.mxu0 0
        %2556 = vmatprep.subr.bf16.mxu0 0
        %2557 = vmatpush1.bf16.msra.mxu0 0
        %2558 = vmatprep.mubr.bf16.mxu0 0
        %2559 = vmatmul.mubr.bf16.gmra.mrb[0].mxu0 %v2521
        %v2560 = vpop.f32.mrb[0].mxu0
        %v2561 = vadd.f32 0.0, %v2560
        %v2562 = vpop.f32.mrb[0].mxu0
        %v2563 = vpop.f32.mrb[0].mxu0
        %v2564 = vadd.f32 0.0, %v2563
        %v2565 = vpop.f32.mrb[0].mxu0
        %2566 = vdwg.mxu0
        %v2567 = vadd.f32 %v2514, %v2561
        %v2568 = vadd.f32 %v2515, %v2564
        %2569 = vrot.lane.b32.xlu0 %v2308, 98
        %v2570 = vpop.permute.xlu0 %2569
        %2571 = vrot.lane.b32.xlu0 %v2300, 116
        %v2572 = vpop.permute.xlu0 %2571
        %v2574 = vsel %vm2314, %v2570, 0
        %v2577 = vsel %vm2318, %v2572, 0
        %2579 = vmatprep.subr.bf16.mxu0 0
        %2580 = vmatpush1.bf16.msra.mxu0 %v2577
        %2581 = vmatprep.subr.bf16.mxu0 0
        %2582 = vmatpush1.bf16.msra.mxu0 0
        %2583 = vmatprep.subr.bf16.mxu0 0
        %2584 = vmatpush1.bf16.msra.mxu0 0
        %2585 = vmatprep.subr.bf16.mxu0 0
        %2586 = vmatpush1.bf16.msra.mxu0 0
        %2587 = vmatprep.subr.bf16.mxu0 0
        %2588 = vmatpush1.bf16.msra.mxu0 0
        %2589 = vmatprep.subr.bf16.mxu0 0
        %2590 = vmatpush1.bf16.msra.mxu0 0
        %2591 = vmatprep.subr.bf16.mxu0 0
        %2592 = vmatpush1.bf16.msra.mxu0 0
        %2593 = vmatprep.subr.bf16.mxu0 0
        %2594 = vmatpush1.bf16.msra.mxu0 0
        %2595 = vmatprep.subr.bf16.mxu0 0
        %2596 = vmatpush1.bf16.msra.mxu0 0
        %2597 = vmatprep.subr.bf16.mxu0 0
        %2598 = vmatpush1.bf16.msra.mxu0 0
        %2599 = vmatprep.subr.bf16.mxu0 0
        %2600 = vmatpush1.bf16.msra.mxu0 0
        %2601 = vmatprep.subr.bf16.mxu0 0
        %2602 = vmatpush1.bf16.msra.mxu0 0
        %2603 = vmatprep.subr.bf16.mxu0 0
        %2604 = vmatpush1.bf16.msra.mxu0 0
        %2605 = vmatprep.subr.bf16.mxu0 0
        %2606 = vmatpush1.bf16.msra.mxu0 0
        %2607 = vmatprep.subr.bf16.mxu0 0
        %2608 = vmatpush1.bf16.msra.mxu0 0
        %2609 = vmatprep.subr.bf16.mxu0 0
        %2610 = vmatpush1.bf16.msra.mxu0 0
        %2611 = vmatprep.mubr.bf16.mxu0 0
        %2612 = vmatmul.mubr.bf16.gmra.mrb[0].mxu0 %v2574
        %v2613 = vpop.f32.mrb[0].mxu0
        %v2614 = vadd.f32 0.0, %v2613
        %v2615 = vpop.f32.mrb[0].mxu0
        %v2616 = vpop.f32.mrb[0].mxu0
        %v2617 = vadd.f32 0.0, %v2616
        %v2618 = vpop.f32.mrb[0].mxu0
        %2619 = vdwg.mxu0
        %v2620 = vadd.f32 %v2567, %v2614
        %v2621 = vadd.f32 %v2568, %v2617
        %2622 = vrot.lane.b32.xlu0 %v2308, 92
        %v2623 = vpop.permute.xlu0 %2622
        %2624 = vrot.lane.b32.xlu0 %v2300, 115
        %v2625 = vpop.permute.xlu0 %2624
        %v2627 = vsel %vm2314, %v2623, 0
        %v2630 = vsel %vm2318, %v2625, 0
        %2632 = vmatprep.subr.bf16.mxu0 0
        %2633 = vmatpush1.bf16.msra.mxu0 %v2630
        %2634 = vmatprep.subr.bf16.mxu0 0
        %2635 = vmatpush1.bf16.msra.mxu0 0
        %2636 = vmatprep.subr.bf16.mxu0 0
        %2637 = vmatpush1.bf16.msra.mxu0 0
        %2638 = vmatprep.subr.bf16.mxu0 0
        %2639 = vmatpush1.bf16.msra.mxu0 0
        %2640 = vmatprep.subr.bf16.mxu0 0
        %2641 = vmatpush1.bf16.msra.mxu0 0
        %2642 = vmatprep.subr.bf16.mxu0 0
        %2643 = vmatpush1.bf16.msra.mxu0 0
        %2644 = vmatprep.subr.bf16.mxu0 0
        %2645 = vmatpush1.bf16.msra.mxu0 0
        %2646 = vmatprep.subr.bf16.mxu0 0
        %2647 = vmatpush1.bf16.msra.mxu0 0
        %2648 = vmatprep.subr.bf16.mxu0 0
        %2649 = vmatpush1.bf16.msra.mxu0 0
        %2650 = vmatprep.subr.bf16.mxu0 0
        %2651 = vmatpush1.bf16.msra.mxu0 0
        %2652 = vmatprep.subr.bf16.mxu0 0
        %2653 = vmatpush1.bf16.msra.mxu0 0
        %2654 = vmatprep.subr.bf16.mxu0 0
        %2655 = vmatpush1.bf16.msra.mxu0 0
        %2656 = vmatprep.subr.bf16.mxu0 0
        %2657 = vmatpush1.bf16.msra.mxu0 0
        %2658 = vmatprep.subr.bf16.mxu0 0
        %2659 = vmatpush1.bf16.msra.mxu0 0
        %2660 = vmatprep.subr.bf16.mxu0 0
        %2661 = vmatpush1.bf16.msra.mxu0 0
        %2662 = vmatprep.subr.bf16.mxu0 0
        %2663 = vmatpush1.bf16.msra.mxu0 0
        %2664 = vmatprep.mubr.bf16.mxu0 0
        %2665 = vmatmul.mubr.bf16.gmra.mrb[0].mxu0 %v2627
        %v2666 = vpop.f32.mrb[0].mxu0
        %v2667 = vadd.f32 0.0, %v2666
        %v2668 = vpop.f32.mrb[0].mxu0
        %v2669 = vpop.f32.mrb[0].mxu0
        %v2670 = vadd.f32 0.0, %v2669
        %v2671 = vpop.f32.mrb[0].mxu0
        %2672 = vdwg.mxu0
        %v2673 = vadd.f32 %v2620, %v2667
        %v2674 = vadd.f32 %v2621, %v2670
        %2675 = vrot.lane.b32.xlu0 %v2308, 86
        %v2676 = vpop.permute.xlu0 %2675
        %2677 = vrot.lane.b32.xlu0 %v2300, 114
        %v2678 = vpop.permute.xlu0 %2677
        %v2680 = vsel %vm2314, %v2676, 0
        %v2683 = vsel %vm2318, %v2678, 0
        %2685 = vmatprep.subr.bf16.mxu0 0
        %2686 = vmatpush1.bf16.msra.mxu0 %v2683
        %2687 = vmatprep.subr.bf16.mxu0 0
        %2688 = vmatpush1.bf16.msra.mxu0 0
        %2689 = vmatprep.subr.bf16.mxu0 0
        %2690 = vmatpush1.bf16.msra.mxu0 0
        %2691 = vmatprep.subr.bf16.mxu0 0
        %2692 = vmatpush1.bf16.msra.mxu0 0
        %2693 = vmatprep.subr.bf16.mxu0 0
        %2694 = vmatpush1.bf16.msra.mxu0 0
        %2695 = vmatprep.subr.bf16.mxu0 0
        %2696 = vmatpush1.bf16.msra.mxu0 0
        %2697 = vmatprep.subr.bf16.mxu0 0
        %2698 = vmatpush1.bf16.msra.mxu0 0
        %2699 = vmatprep.subr.bf16.mxu0 0
        %2700 = vmatpush1.bf16.msra.mxu0 0
        %2701 = vmatprep.subr.bf16.mxu0 0
        %2702 = vmatpush1.bf16.msra.mxu0 0
        %2703 = vmatprep.subr.bf16.mxu0 0
        %2704 = vmatpush1.bf16.msra.mxu0 0
        %2705 = vmatprep.subr.bf16.mxu0 0
        %2706 = vmatpush1.bf16.msra.mxu0 0
        %2707 = vmatprep.subr.bf16.mxu0 0
        %2708 = vmatpush1.bf16.msra.mxu0 0
        %2709 = vmatprep.subr.bf16.mxu0 0
        %2710 = vmatpush1.bf16.msra.mxu0 0
        %2711 = vmatprep.subr.bf16.mxu0 0
        %2712 = vmatpush1.bf16.msra.mxu0 0
        %2713 = vmatprep.subr.bf16.mxu0 0
        %2714 = vmatpush1.bf16.msra.mxu0 0
        %2715 = vmatprep.subr.bf16.mxu0 0
        %2716 = vmatpush1.bf16.msra.mxu0 0
        %2717 = vmatprep.mubr.bf16.mxu0 0
        %2718 = vmatmul.mubr.bf16.gmra.mrb[0].mxu0 %v2680
        %v2719 = vpop.f32.mrb[0].mxu0
        %v2720 = vadd.f32 0.0, %v2719
        %v2721 = vpop.f32.mrb[0].mxu0
        %v2722 = vpop.f32.mrb[0].mxu0
        %v2723 = vadd.f32 0.0, %v2722
        %v2724 = vpop.f32.mrb[0].mxu0
        %2725 = vdwg.mxu0
        %v2726 = vadd.f32 %v2673, %v2720
        %v2727 = vadd.f32 %v2674, %v2723
        %2728 = vrot.lane.b32.xlu0 %v2308, 80
        %v2729 = vpop.permute.xlu0 %2728
        %2730 = vrot.lane.b32.xlu0 %v2300, 113
        %v2731 = vpop.permute.xlu0 %2730
        %v2733 = vsel %vm2314, %v2729, 0
        %v2736 = vsel %vm2318, %v2731, 0
        %2738 = vmatprep.subr.bf16.mxu0 0
        %2739 = vmatpush1.bf16.msra.mxu0 %v2736
        %2740 = vmatprep.subr.bf16.mxu0 0
        %2741 = vmatpush1.bf16.msra.mxu0 0
        %2742 = vmatprep.subr.bf16.mxu0 0
        %2743 = vmatpush1.bf16.msra.mxu0 0
        %2744 = vmatprep.subr.bf16.mxu0 0
        %2745 = vmatpush1.bf16.msra.mxu0 0
        %2746 = vmatprep.subr.bf16.mxu0 0
        %2747 = vmatpush1.bf16.msra.mxu0 0
        %2748 = vmatprep.subr.bf16.mxu0 0
        %2749 = vmatpush1.bf16.msra.mxu0 0
        %2750 = vmatprep.subr.bf16.mxu0 0
        %2751 = vmatpush1.bf16.msra.mxu0 0
        %2752 = vmatprep.subr.bf16.mxu0 0
        %2753 = vmatpush1.bf16.msra.mxu0 0
        %2754 = vmatprep.subr.bf16.mxu0 0
        %2755 = vmatpush1.bf16.msra.mxu0 0
        %2756 = vmatprep.subr.bf16.mxu0 0
        %2757 = vmatpush1.bf16.msra.mxu0 0
        %2758 = vmatprep.subr.bf16.mxu0 0
        %2759 = vmatpush1.bf16.msra.mxu0 0
        %2760 = vmatprep.subr.bf16.mxu0 0
        %2761 = vmatpush1.bf16.msra.mxu0 0
        %2762 = vmatprep.subr.bf16.mxu0 0
        %2763 = vmatpush1.bf16.msra.mxu0 0
        %2764 = vmatprep.subr.bf16.mxu0 0
        %2765 = vmatpush1.bf16.msra.mxu0 0
        %2766 = vmatprep.subr.bf16.mxu0 0
        %2767 = vmatpush1.bf16.msra.mxu0 0
        %2768 = vmatprep.subr.bf16.mxu0 0
        %2769 = vmatpush1.bf16.msra.mxu0 0
        %2770 = vmatprep.mubr.bf16.mxu0 0
        %2771 = vmatmul.mubr.bf16.gmra.mrb[0].mxu0 %v2733
        %v2772 = vpop.f32.mrb[0].mxu0
        %v2773 = vadd.f32 0.0, %v2772
        %v2774 = vpop.f32.mrb[0].mxu0
        %v2775 = vpop.f32.mrb[0].mxu0
        %v2776 = vadd.f32 0.0, %v2775
        %v2777 = vpop.f32.mrb[0].mxu0
        %2778 = vdwg.mxu0
        %v2779 = vadd.f32 %v2726, %v2773
        %v2780 = vadd.f32 %v2727, %v2776
        %2781 = vrot.lane.b32.xlu0 %v2308, 74
        %v2782 = vpop.permute.xlu0 %2781
        %2783 = vrot.lane.b32.xlu0 %v2300, 112
        %v2784 = vpop.permute.xlu0 %2783
        %v2786 = vsel %vm2314, %v2782, 0
        %v2789 = vsel %vm2318, %v2784, 0
        %2791 = vmatprep.subr.bf16.mxu0 0
        %2792 = vmatpush1.bf16.msra.mxu0 %v2789
        %2793 = vmatprep.subr.bf16.mxu0 0
        %2794 = vmatpush1.bf16.msra.mxu0 0
        %2795 = vmatprep.subr.bf16.mxu0 0
        %2796 = vmatpush1.bf16.msra.mxu0 0
        %2797 = vmatprep.subr.bf16.mxu0 0
        %2798 = vmatpush1.bf16.msra.mxu0 0
        %2799 = vmatprep.subr.bf16.mxu0 0
        %2800 = vmatpush1.bf16.msra.mxu0 0
        %2801 = vmatprep.subr.bf16.mxu0 0
        %2802 = vmatpush1.bf16.msra.mxu0 0
        %2803 = vmatprep.subr.bf16.mxu0 0
        %2804 = vmatpush1.bf16.msra.mxu0 0
        %2805 = vmatprep.subr.bf16.mxu0 0
        %2806 = vmatpush1.bf16.msra.mxu0 0
        %2807 = vmatprep.subr.bf16.mxu0 0
        %2808 = vmatpush1.bf16.msra.mxu0 0
        %2809 = vmatprep.subr.bf16.mxu0 0
        %2810 = vmatpush1.bf16.msra.mxu0 0
        %2811 = vmatprep.subr.bf16.mxu0 0
        %2812 = vmatpush1.bf16.msra.mxu0 0
        %2813 = vmatprep.subr.bf16.mxu0 0
        %2814 = vmatpush1.bf16.msra.mxu0 0
        %2815 = vmatprep.subr.bf16.mxu0 0
        %2816 = vmatpush1.bf16.msra.mxu0 0
        %2817 = vmatprep.subr.bf16.mxu0 0
        %2818 = vmatpush1.bf16.msra.mxu0 0
        %2819 = vmatprep.subr.bf16.mxu0 0
        %2820 = vmatpush1.bf16.msra.mxu0 0
        %2821 = vmatprep.subr.bf16.mxu0 0
        %2822 = vmatpush1.bf16.msra.mxu0 0
        %2823 = vmatprep.mubr.bf16.mxu0 0
        %2824 = vmatmul.mubr.bf16.gmra.mrb[0].mxu0 %v2786
        %v2825 = vpop.f32.mrb[0].mxu0
        %v2826 = vadd.f32 0.0, %v2825
        %v2827 = vpop.f32.mrb[0].mxu0
        %v2828 = vpop.f32.mrb[0].mxu0
        %v2829 = vadd.f32 0.0, %v2828
        %v2830 = vpop.f32.mrb[0].mxu0
        %2831 = vdwg.mxu0
        %v2832 = vadd.f32 %v2779, %v2826
        %v2833 = vadd.f32 %v2780, %v2829
        %2834 = vrot.lane.b32.xlu0 %v2308, 68
        %v2835 = vpop.permute.xlu0 %2834
        %2836 = vrot.lane.b32.xlu0 %v2300, 104
        %v2837 = vpop.permute.xlu0 %2836
        %v2839 = vsel %vm2314, %v2835, 0
        %v2842 = vsel %vm2318, %v2837, 0
        %2844 = vmatprep.subr.bf16.mxu0 0
        %2845 = vmatpush1.bf16.msra.mxu0 %v2842
        %2846 = vmatprep.subr.bf16.mxu0 0
        %2847 = vmatpush1.bf16.msra.mxu0 0
        %2848 = vmatprep.subr.bf16.mxu0 0
        %2849 = vmatpush1.bf16.msra.mxu0 0
        %2850 = vmatprep.subr.bf16.mxu0 0
        %2851 = vmatpush1.bf16.msra.mxu0 0
        %2852 = vmatprep.subr.bf16.mxu0 0
        %2853 = vmatpush1.bf16.msra.mxu0 0
        %2854 = vmatprep.subr.bf16.mxu0 0
        %2855 = vmatpush1.bf16.msra.mxu0 0
        %2856 = vmatprep.subr.bf16.mxu0 0
        %2857 = vmatpush1.bf16.msra.mxu0 0
        %2858 = vmatprep.subr.bf16.mxu0 0
        %2859 = vmatpush1.bf16.msra.mxu0 0
        %2860 = vmatprep.subr.bf16.mxu0 0
        %2861 = vmatpush1.bf16.msra.mxu0 0
        %2862 = vmatprep.subr.bf16.mxu0 0
        %2863 = vmatpush1.bf16.msra.mxu0 0
        %2864 = vmatprep.subr.bf16.mxu0 0
        %2865 = vmatpush1.bf16.msra.mxu0 0
        %2866 = vmatprep.subr.bf16.mxu0 0
        %2867 = vmatpush1.bf16.msra.mxu0 0
        %2868 = vmatprep.subr.bf16.mxu0 0
        %2869 = vmatpush1.bf16.msra.mxu0 0
        %2870 = vmatprep.subr.bf16.mxu0 0
        %2871 = vmatpush1.bf16.msra.mxu0 0
        %2872 = vmatprep.subr.bf16.mxu0 0
        %2873 = vmatpush1.bf16.msra.mxu0 0
        %2874 = vmatprep.subr.bf16.mxu0 0
        %2875 = vmatpush1.bf16.msra.mxu0 0
        %2876 = vmatprep.mubr.bf16.mxu0 0
        %2877 = vmatmul.mubr.bf16.gmra.mrb[0].mxu0 %v2839
        %v2878 = vpop.f32.mrb[0].mxu0
        %v2879 = vadd.f32 0.0, %v2878
        %v2880 = vpop.f32.mrb[0].mxu0
        %v2881 = vpop.f32.mrb[0].mxu0
        %v2882 = vadd.f32 0.0, %v2881
        %v2883 = vpop.f32.mrb[0].mxu0
        %2884 = vdwg.mxu0
        %v2885 = vadd.f32 %v2832, %v2879
        %v2886 = vadd.f32 %v2833, %v2882
        %2887 = vrot.lane.b32.xlu0 %v2308, 62
        %v2888 = vpop.permute.xlu0 %2887
        %2889 = vrot.lane.b32.xlu0 %v2300, 103
        %v2890 = vpop.permute.xlu0 %2889
        %v2892 = vsel %vm2314, %v2888, 0
        %v2895 = vsel %vm2318, %v2890, 0
        %2897 = vmatprep.subr.bf16.mxu0 0
        %2898 = vmatpush1.bf16.msra.mxu0 %v2895
        %2899 = vmatprep.subr.bf16.mxu0 0
        %2900 = vmatpush1.bf16.msra.mxu0 0
        %2901 = vmatprep.subr.bf16.mxu0 0
        %2902 = vmatpush1.bf16.msra.mxu0 0
        %2903 = vmatprep.subr.bf16.mxu0 0
        %2904 = vmatpush1.bf16.msra.mxu0 0
        %2905 = vmatprep.subr.bf16.mxu0 0
        %2906 = vmatpush1.bf16.msra.mxu0 0
        %2907 = vmatprep.subr.bf16.mxu0 0
        %2908 = vmatpush1.bf16.msra.mxu0 0
        %2909 = vmatprep.subr.bf16.mxu0 0
        %2910 = vmatpush1.bf16.msra.mxu0 0
        %2911 = vmatprep.subr.bf16.mxu0 0
        %2912 = vmatpush1.bf16.msra.mxu0 0
        %2913 = vmatprep.subr.bf16.mxu0 0
        %2914 = vmatpush1.bf16.msra.mxu0 0
        %2915 = vmatprep.subr.bf16.mxu0 0
        %2916 = vmatpush1.bf16.msra.mxu0 0
        %2917 = vmatprep.subr.bf16.mxu0 0
        %2918 = vmatpush1.bf16.msra.mxu0 0
        %2919 = vmatprep.subr.bf16.mxu0 0
        %2920 = vmatpush1.bf16.msra.mxu0 0
        %2921 = vmatprep.subr.bf16.mxu0 0
        %2922 = vmatpush1.bf16.msra.mxu0 0
        %2923 = vmatprep.subr.bf16.mxu0 0
        %2924 = vmatpush1.bf16.msra.mxu0 0
        %2925 = vmatprep.subr.bf16.mxu0 0
        %2926 = vmatpush1.bf16.msra.mxu0 0
        %2927 = vmatprep.subr.bf16.mxu0 0
        %2928 = vmatpush1.bf16.msra.mxu0 0
        %2929 = vmatprep.mubr.bf16.mxu0 0
        %2930 = vmatmul.mubr.bf16.gmra.mrb[0].mxu0 %v2892
        %v2931 = vpop.f32.mrb[0].mxu0
        %v2932 = vadd.f32 0.0, %v2931
        %v2933 = vpop.f32.mrb[0].mxu0
        %v2934 = vpop.f32.mrb[0].mxu0
        %v2935 = vadd.f32 0.0, %v2934
        %v2936 = vpop.f32.mrb[0].mxu0
        %2937 = vdwg.mxu0
        %v2938 = vadd.f32 %v2885, %v2932
        %v2939 = vadd.f32 %v2886, %v2935
        %2940 = vrot.lane.b32.xlu0 %v2308, 56
        %v2941 = vpop.permute.xlu0 %2940
        %2942 = vrot.lane.b32.xlu0 %v2300, 102
        %v2943 = vpop.permute.xlu0 %2942
        %v2945 = vsel %vm2314, %v2941, 0
        %v2948 = vsel %vm2318, %v2943, 0
        %2950 = vmatprep.subr.bf16.mxu0 0
        %2951 = vmatpush1.bf16.msra.mxu0 %v2948
        %2952 = vmatprep.subr.bf16.mxu0 0
        %2953 = vmatpush1.bf16.msra.mxu0 0
        %2954 = vmatprep.subr.bf16.mxu0 0
        %2955 = vmatpush1.bf16.msra.mxu0 0
        %2956 = vmatprep.subr.bf16.mxu0 0
        %2957 = vmatpush1.bf16.msra.mxu0 0
        %2958 = vmatprep.subr.bf16.mxu0 0
        %2959 = vmatpush1.bf16.msra.mxu0 0
        %2960 = vmatprep.subr.bf16.mxu0 0
        %2961 = vmatpush1.bf16.msra.mxu0 0
        %2962 = vmatprep.subr.bf16.mxu0 0
        %2963 = vmatpush1.bf16.msra.mxu0 0
        %2964 = vmatprep.subr.bf16.mxu0 0
        %2965 = vmatpush1.bf16.msra.mxu0 0
        %2966 = vmatprep.subr.bf16.mxu0 0
        %2967 = vmatpush1.bf16.msra.mxu0 0
        %2968 = vmatprep.subr.bf16.mxu0 0
        %2969 = vmatpush1.bf16.msra.mxu0 0
        %2970 = vmatprep.subr.bf16.mxu0 0
        %2971 = vmatpush1.bf16.msra.mxu0 0
        %2972 = vmatprep.subr.bf16.mxu0 0
        %2973 = vmatpush1.bf16.msra.mxu0 0
        %2974 = vmatprep.subr.bf16.mxu0 0
        %2975 = vmatpush1.bf16.msra.mxu0 0
        %2976 = vmatprep.subr.bf16.mxu0 0
        %2977 = vmatpush1.bf16.msra.mxu0 0
        %2978 = vmatprep.subr.bf16.mxu0 0
        %2979 = vmatpush1.bf16.msra.mxu0 0
        %2980 = vmatprep.subr.bf16.mxu0 0
        %2981 = vmatpush1.bf16.msra.mxu0 0
        %2982 = vmatprep.mubr.bf16.mxu0 0
        %2983 = vmatmul.mubr.bf16.gmra.mrb[0].mxu0 %v2945
        %v2984 = vpop.f32.mrb[0].mxu0
        %v2985 = vadd.f32 0.0, %v2984
        %v2986 = vpop.f32.mrb[0].mxu0
        %v2987 = vpop.f32.mrb[0].mxu0
        %v2988 = vadd.f32 0.0, %v2987
        %v2989 = vpop.f32.mrb[0].mxu0
        %2990 = vdwg.mxu0
        %v2991 = vadd.f32 %v2938, %v2985
        %v2992 = vadd.f32 %v2939, %v2988
        %2993 = vrot.lane.b32.xlu0 %v2308, 50
        %v2994 = vpop.permute.xlu0 %2993
        %2995 = vrot.lane.b32.xlu0 %v2300, 101
        %v2996 = vpop.permute.xlu0 %2995
        %v2998 = vsel %vm2314, %v2994, 0
        %v3001 = vsel %vm2318, %v2996, 0
        %3003 = vmatprep.subr.bf16.mxu0 0
        %3004 = vmatpush1.bf16.msra.mxu0 %v3001
        %3005 = vmatprep.subr.bf16.mxu0 0
        %3006 = vmatpush1.bf16.msra.mxu0 0
        %3007 = vmatprep.subr.bf16.mxu0 0
        %3008 = vmatpush1.bf16.msra.mxu0 0
        %3009 = vmatprep.subr.bf16.mxu0 0
        %3010 = vmatpush1.bf16.msra.mxu0 0
        %3011 = vmatprep.subr.bf16.mxu0 0
        %3012 = vmatpush1.bf16.msra.mxu0 0
        %3013 = vmatprep.subr.bf16.mxu0 0
        %3014 = vmatpush1.bf16.msra.mxu0 0
        %3015 = vmatprep.subr.bf16.mxu0 0
        %3016 = vmatpush1.bf16.msra.mxu0 0
        %3017 = vmatprep.subr.bf16.mxu0 0
        %3018 = vmatpush1.bf16.msra.mxu0 0
        %3019 = vmatprep.subr.bf16.mxu0 0
        %3020 = vmatpush1.bf16.msra.mxu0 0
        %3021 = vmatprep.subr.bf16.mxu0 0
        %3022 = vmatpush1.bf16.msra.mxu0 0
        %3023 = vmatprep.subr.bf16.mxu0 0
        %3024 = vmatpush1.bf16.msra.mxu0 0
        %3025 = vmatprep.subr.bf16.mxu0 0
        %3026 = vmatpush1.bf16.msra.mxu0 0
        %3027 = vmatprep.subr.bf16.mxu0 0
        %3028 = vmatpush1.bf16.msra.mxu0 0
        %3029 = vmatprep.subr.bf16.mxu0 0
        %3030 = vmatpush1.bf16.msra.mxu0 0
        %3031 = vmatprep.subr.bf16.mxu0 0
        %3032 = vmatpush1.bf16.msra.mxu0 0
        %3033 = vmatprep.subr.bf16.mxu0 0
        %3034 = vmatpush1.bf16.msra.mxu0 0
        %3035 = vmatprep.mubr.bf16.mxu0 0
        %3036 = vmatmul.mubr.bf16.gmra.mrb[0].mxu0 %v2998
        %v3037 = vpop.f32.mrb[0].mxu0
        %v3038 = vadd.f32 0.0, %v3037
        %v3039 = vpop.f32.mrb[0].mxu0
        %v3040 = vpop.f32.mrb[0].mxu0
        %v3041 = vadd.f32 0.0, %v3040
        %v3042 = vpop.f32.mrb[0].mxu0
        %3043 = vdwg.mxu0
        %v3044 = vadd.f32 %v2991, %v3038
        %v3045 = vadd.f32 %v2992, %v3041
        %3046 = vrot.lane.b32.xlu0 %v2308, 44
        %v3047 = vpop.permute.xlu0 %3046
        %3048 = vrot.lane.b32.xlu0 %v2300, 100
        %v3049 = vpop.permute.xlu0 %3048
        %v3051 = vsel %vm2314, %v3047, 0
        %v3054 = vsel %vm2318, %v3049, 0
        %3056 = vmatprep.subr.bf16.mxu0 0
        %3057 = vmatpush1.bf16.msra.mxu0 %v3054
        %3058 = vmatprep.subr.bf16.mxu0 0
        %3059 = vmatpush1.bf16.msra.mxu0 0
        %3060 = vmatprep.subr.bf16.mxu0 0
        %3061 = vmatpush1.bf16.msra.mxu0 0
        %3062 = vmatprep.subr.bf16.mxu0 0
        %3063 = vmatpush1.bf16.msra.mxu0 0
        %3064 = vmatprep.subr.bf16.mxu0 0
        %3065 = vmatpush1.bf16.msra.mxu0 0
        %3066 = vmatprep.subr.bf16.mxu0 0
        %3067 = vmatpush1.bf16.msra.mxu0 0
        %3068 = vmatprep.subr.bf16.mxu0 0
        %3069 = vmatpush1.bf16.msra.mxu0 0
        %3070 = vmatprep.subr.bf16.mxu0 0
        %3071 = vmatpush1.bf16.msra.mxu0 0
        %3072 = vmatprep.subr.bf16.mxu0 0
        %3073 = vmatpush1.bf16.msra.mxu0 0
        %3074 = vmatprep.subr.bf16.mxu0 0
        %3075 = vmatpush1.bf16.msra.mxu0 0
        %3076 = vmatprep.subr.bf16.mxu0 0
        %3077 = vmatpush1.bf16.msra.mxu0 0
        %3078 = vmatprep.subr.bf16.mxu0 0
        %3079 = vmatpush1.bf16.msra.mxu0 0
        %3080 = vmatprep.subr.bf16.mxu0 0
        %3081 = vmatpush1.bf16.msra.mxu0 0
        %3082 = vmatprep.subr.bf16.mxu0 0
        %3083 = vmatpush1.bf16.msra.mxu0 0
        %3084 = vmatprep.subr.bf16.mxu0 0
        %3085 = vmatpush1.bf16.msra.mxu0 0
        %3086 = vmatprep.subr.bf16.mxu0 0
        %3087 = vmatpush1.bf16.msra.mxu0 0
        %3088 = vmatprep.mubr.bf16.mxu0 0
        %3089 = vmatmul.mubr.bf16.gmra.mrb[0].mxu0 %v3051
        %v3090 = vpop.f32.mrb[0].mxu0
        %v3091 = vadd.f32 0.0, %v3090
        %v3092 = vpop.f32.mrb[0].mxu0
        %v3093 = vpop.f32.mrb[0].mxu0
        %v3094 = vadd.f32 0.0, %v3093
        %v3095 = vpop.f32.mrb[0].mxu0
        %3096 = vdwg.mxu0
        %v3097 = vadd.f32 %v3044, %v3091
        %v3098 = vadd.f32 %v3045, %v3094
        %3099 = vrot.lane.b32.xlu0 %v2308, 38
        %v3100 = vpop.permute.xlu0 %3099
        %3101 = vrot.lane.b32.xlu0 %v2300, 92
        %v3102 = vpop.permute.xlu0 %3101
        %v3104 = vsel %vm2314, %v3100, 0
        %v3107 = vsel %vm2318, %v3102, 0
        %3109 = vmatprep.subr.bf16.mxu0 0
        %3110 = vmatpush1.bf16.msra.mxu0 %v3107
        %3111 = vmatprep.subr.bf16.mxu0 0
        %3112 = vmatpush1.bf16.msra.mxu0 0
        %3113 = vmatprep.subr.bf16.mxu0 0
        %3114 = vmatpush1.bf16.msra.mxu0 0
        %3115 = vmatprep.subr.bf16.mxu0 0
        %3116 = vmatpush1.bf16.msra.mxu0 0
        %3117 = vmatprep.subr.bf16.mxu0 0
        %3118 = vmatpush1.bf16.msra.mxu0 0
        %3119 = vmatprep.subr.bf16.mxu0 0
        %3120 = vmatpush1.bf16.msra.mxu0 0
        %3121 = vmatprep.subr.bf16.mxu0 0
        %3122 = vmatpush1.bf16.msra.mxu0 0
        %3123 = vmatprep.subr.bf16.mxu0 0
        %3124 = vmatpush1.bf16.msra.mxu0 0
        %3125 = vmatprep.subr.bf16.mxu0 0
        %3126 = vmatpush1.bf16.msra.mxu0 0
        %3127 = vmatprep.subr.bf16.mxu0 0
        %3128 = vmatpush1.bf16.msra.mxu0 0
        %3129 = vmatprep.subr.bf16.mxu0 0
        %3130 = vmatpush1.bf16.msra.mxu0 0
        %3131 = vmatprep.subr.bf16.mxu0 0
        %3132 = vmatpush1.bf16.msra.mxu0 0
        %3133 = vmatprep.subr.bf16.mxu0 0
        %3134 = vmatpush1.bf16.msra.mxu0 0
        %3135 = vmatprep.subr.bf16.mxu0 0
        %3136 = vmatpush1.bf16.msra.mxu0 0
        %3137 = vmatprep.subr.bf16.mxu0 0
        %3138 = vmatpush1.bf16.msra.mxu0 0
        %3139 = vmatprep.subr.bf16.mxu0 0
        %3140 = vmatpush1.bf16.msra.mxu0 0
        %3141 = vmatprep.mubr.bf16.mxu0 0
        %3142 = vmatmul.mubr.bf16.gmra.mrb[0].mxu0 %v3104
        %v3143 = vpop.f32.mrb[0].mxu0
        %v3144 = vadd.f32 0.0, %v3143
        %v3145 = vpop.f32.mrb[0].mxu0
        %v3146 = vpop.f32.mrb[0].mxu0
        %v3147 = vadd.f32 0.0, %v3146
        %v3148 = vpop.f32.mrb[0].mxu0
        %3149 = vdwg.mxu0
        %v3150 = vadd.f32 %v3097, %v3144
        %v3151 = vadd.f32 %v3098, %v3147
        %3152 = vrot.lane.b32.xlu0 %v2308, 32
        %v3153 = vpop.permute.xlu0 %3152
        %3155 = vrot.lane.b32.xlu0 %v2300, 91
        %v3156 = vpop.permute.xlu0 %3155
        %3157 = vrot.lane.b32.xlu0 %v2301, 91
        %v3158 = vpop.permute.xlu0 %3157
        %vm3159 = vcmask 744448
        %v3160 = vsel %vm3159, %v3156, %v3158
        %v3162 = vsel %vm2314, %v3153, 0
        %v3165 = vsel %vm2318, %v3160, 0
        %3167 = vmatprep.subr.bf16.mxu0 0
        %3168 = vmatpush1.bf16.msra.mxu0 %v3165
        %3169 = vmatprep.subr.bf16.mxu0 0
        %3170 = vmatpush1.bf16.msra.mxu0 0
        %3171 = vmatprep.subr.bf16.mxu0 0
        %3172 = vmatpush1.bf16.msra.mxu0 0
        %3173 = vmatprep.subr.bf16.mxu0 0
        %3174 = vmatpush1.bf16.msra.mxu0 0
        %3175 = vmatprep.subr.bf16.mxu0 0
        %3176 = vmatpush1.bf16.msra.mxu0 0
        %3177 = vmatprep.subr.bf16.mxu0 0
        %3178 = vmatpush1.bf16.msra.mxu0 0
        %3179 = vmatprep.subr.bf16.mxu0 0
        %3180 = vmatpush1.bf16.msra.mxu0 0
        %3181 = vmatprep.subr.bf16.mxu0 0
        %3182 = vmatpush1.bf16.msra.mxu0 0
        %3183 = vmatprep.subr.bf16.mxu0 0
        %3184 = vmatpush1.bf16.msra.mxu0 0
        %3185 = vmatprep.subr.bf16.mxu0 0
        %3186 = vmatpush1.bf16.msra.mxu0 0
        %3187 = vmatprep.subr.bf16.mxu0 0
        %3188 = vmatpush1.bf16.msra.mxu0 0
        %3189 = vmatprep.subr.bf16.mxu0 0
        %3190 = vmatpush1.bf16.msra.mxu0 0
        %3191 = vmatprep.subr.bf16.mxu0 0
        %3192 = vmatpush1.bf16.msra.mxu0 0
        %3193 = vmatprep.subr.bf16.mxu0 0
        %3194 = vmatpush1.bf16.msra.mxu0 0
        %3195 = vmatprep.subr.bf16.mxu0 0
        %3196 = vmatpush1.bf16.msra.mxu0 0
        %3197 = vmatprep.subr.bf16.mxu0 0
        %3198 = vmatpush1.bf16.msra.mxu0 0
        %3199 = vmatprep.mubr.bf16.mxu0 0
        %3200 = vmatmul.mubr.bf16.gmra.mrb[0].mxu0 %v3162
        %v3201 = vpop.f32.mrb[0].mxu0
        %v3202 = vadd.f32 0.0, %v3201
        %v3203 = vpop.f32.mrb[0].mxu0
        %v3204 = vpop.f32.mrb[0].mxu0
        %v3205 = vadd.f32 0.0, %v3204
        %v3206 = vpop.f32.mrb[0].mxu0
        %3207 = vdwg.mxu0
        %v3208 = vadd.f32 %v3150, %v3202
        %v3209 = vadd.f32 %v3151, %v3205
        %3210 = vrot.lane.b32.xlu0 %v2308, 26
        %v3211 = vpop.permute.xlu0 %3210
        %3212 = vrot.lane.b32.xlu0 %v2300, 90
        %v3213 = vpop.permute.xlu0 %3212
        %3214 = vrot.lane.b32.xlu0 %v2301, 90
        %v3215 = vpop.permute.xlu0 %3214
        %vm3216 = vcmask 736256
        %v3217 = vsel %vm3216, %v3213, %v3215
        %v3219 = vsel %vm2314, %v3211, 0
        %v3222 = vsel %vm2318, %v3217, 0
        %3224 = vmatprep.subr.bf16.mxu0 0
        %3225 = vmatpush1.bf16.msra.mxu0 %v3222
        %3226 = vmatprep.subr.bf16.mxu0 0
        %3227 = vmatpush1.bf16.msra.mxu0 0
        %3228 = vmatprep.subr.bf16.mxu0 0
        %3229 = vmatpush1.bf16.msra.mxu0 0
        %3230 = vmatprep.subr.bf16.mxu0 0
        %3231 = vmatpush1.bf16.msra.mxu0 0
        %3232 = vmatprep.subr.bf16.mxu0 0
        %3233 = vmatpush1.bf16.msra.mxu0 0
        %3234 = vmatprep.subr.bf16.mxu0 0
        %3235 = vmatpush1.bf16.msra.mxu0 0
        %3236 = vmatprep.subr.bf16.mxu0 0
        %3237 = vmatpush1.bf16.msra.mxu0 0
        %3238 = vmatprep.subr.bf16.mxu0 0
        %3239 = vmatpush1.bf16.msra.mxu0 0
        %3240 = vmatprep.subr.bf16.mxu0 0
        %3241 = vmatpush1.bf16.msra.mxu0 0
        %3242 = vmatprep.subr.bf16.mxu0 0
        %3243 = vmatpush1.bf16.msra.mxu0 0
        %3244 = vmatprep.subr.bf16.mxu0 0
        %3245 = vmatpush1.bf16.msra.mxu0 0
        %3246 = vmatprep.subr.bf16.mxu0 0
        %3247 = vmatpush1.bf16.msra.mxu0 0
        %3248 = vmatprep.subr.bf16.mxu0 0
        %3249 = vmatpush1.bf16.msra.mxu0 0
        %3250 = vmatprep.subr.bf16.mxu0 0
        %3251 = vmatpush1.bf16.msra.mxu0 0
        %3252 = vmatprep.subr.bf16.mxu0 0
        %3253 = vmatpush1.bf16.msra.mxu0 0
        %3254 = vmatprep.subr.bf16.mxu0 0
        %3255 = vmatpush1.bf16.msra.mxu0 0
        %3256 = vmatprep.mubr.bf16.mxu0 0
        %3257 = vmatmul.mubr.bf16.gmra.mrb[0].mxu0 %v3219
        %v3258 = vpop.f32.mrb[0].mxu0
        %v3259 = vadd.f32 0.0, %v3258
        %v3260 = vpop.f32.mrb[0].mxu0
        %v3261 = vpop.f32.mrb[0].mxu0
        %v3262 = vadd.f32 0.0, %v3261
        %v3263 = vpop.f32.mrb[0].mxu0
        %3264 = vdwg.mxu0
        %v3265 = vadd.f32 %v3208, %v3259
        %v3266 = vadd.f32 %v3209, %v3262
        %3267 = vrot.lane.b32.xlu0 %v2308, 20
        %v3268 = vpop.permute.xlu0 %3267
        %3269 = vrot.lane.b32.xlu0 %v2300, 89
        %v3270 = vpop.permute.xlu0 %3269
        %3271 = vrot.lane.b32.xlu0 %v2301, 89
        %v3272 = vpop.permute.xlu0 %3271
        %vm3273 = vcmask 728064
        %v3274 = vsel %vm3273, %v3270, %v3272
        %v3276 = vsel %vm2314, %v3268, 0
        %v3279 = vsel %vm2318, %v3274, 0
        %3281 = vmatprep.subr.bf16.mxu0 0
        %3282 = vmatpush1.bf16.msra.mxu0 %v3279
        %3283 = vmatprep.subr.bf16.mxu0 0
        %3284 = vmatpush1.bf16.msra.mxu0 0
        %3285 = vmatprep.subr.bf16.mxu0 0
        %3286 = vmatpush1.bf16.msra.mxu0 0
        %3287 = vmatprep.subr.bf16.mxu0 0
        %3288 = vmatpush1.bf16.msra.mxu0 0
        %3289 = vmatprep.subr.bf16.mxu0 0
        %3290 = vmatpush1.bf16.msra.mxu0 0
        %3291 = vmatprep.subr.bf16.mxu0 0
        %3292 = vmatpush1.bf16.msra.mxu0 0
        %3293 = vmatprep.subr.bf16.mxu0 0
        %3294 = vmatpush1.bf16.msra.mxu0 0
        %3295 = vmatprep.subr.bf16.mxu0 0
        %3296 = vmatpush1.bf16.msra.mxu0 0
        %3297 = vmatprep.subr.bf16.mxu0 0
        %3298 = vmatpush1.bf16.msra.mxu0 0
        %3299 = vmatprep.subr.bf16.mxu0 0
        %3300 = vmatpush1.bf16.msra.mxu0 0
        %3301 = vmatprep.subr.bf16.mxu0 0
        %3302 = vmatpush1.bf16.msra.mxu0 0
        %3303 = vmatprep.subr.bf16.mxu0 0
        %3304 = vmatpush1.bf16.msra.mxu0 0
        %3305 = vmatprep.subr.bf16.mxu0 0
        %3306 = vmatpush1.bf16.msra.mxu0 0
        %3307 = vmatprep.subr.bf16.mxu0 0
        %3308 = vmatpush1.bf16.msra.mxu0 0
        %3309 = vmatprep.subr.bf16.mxu0 0
        %3310 = vmatpush1.bf16.msra.mxu0 0
        %3311 = vmatprep.subr.bf16.mxu0 0
        %3312 = vmatpush1.bf16.msra.mxu0 0
        %3313 = vmatprep.mubr.bf16.mxu0 0
        %3314 = vmatmul.mubr.bf16.gmra.mrb[0].mxu0 %v3276
        %v3315 = vpop.f32.mrb[0].mxu0
        %v3316 = vadd.f32 0.0, %v3315
        %v3317 = vpop.f32.mrb[0].mxu0
        %v3318 = vpop.f32.mrb[0].mxu0
        %v3319 = vadd.f32 0.0, %v3318
        %v3320 = vpop.f32.mrb[0].mxu0
        %3321 = vdwg.mxu0
        %v3322 = vadd.f32 %v3265, %v3316
        %v3323 = vadd.f32 %v3266, %v3319
        %3324 = vrot.lane.b32.xlu0 %v2308, 14
        %v3325 = vpop.permute.xlu0 %3324
        %3326 = vrot.lane.b32.xlu0 %v2300, 88
        %v3327 = vpop.permute.xlu0 %3326
        %3328 = vrot.lane.b32.xlu0 %v2301, 88
        %v3329 = vpop.permute.xlu0 %3328
        %vm3330 = vcmask 719872
        %v3331 = vsel %vm3330, %v3327, %v3329
        %v3333 = vsel %vm2314, %v3325, 0
        %v3336 = vsel %vm2318, %v3331, 0
        %3338 = vmatprep.subr.bf16.mxu0 0
        %3339 = vmatpush1.bf16.msra.mxu0 %v3336
        %3340 = vmatprep.subr.bf16.mxu0 0
        %3341 = vmatpush1.bf16.msra.mxu0 0
        %3342 = vmatprep.subr.bf16.mxu0 0
        %3343 = vmatpush1.bf16.msra.mxu0 0
        %3344 = vmatprep.subr.bf16.mxu0 0
        %3345 = vmatpush1.bf16.msra.mxu0 0
        %3346 = vmatprep.subr.bf16.mxu0 0
        %3347 = vmatpush1.bf16.msra.mxu0 0
        %3348 = vmatprep.subr.bf16.mxu0 0
        %3349 = vmatpush1.bf16.msra.mxu0 0
        %3350 = vmatprep.subr.bf16.mxu0 0
        %3351 = vmatpush1.bf16.msra.mxu0 0
        %3352 = vmatprep.subr.bf16.mxu0 0
        %3353 = vmatpush1.bf16.msra.mxu0 0
        %3354 = vmatprep.subr.bf16.mxu0 0
        %3355 = vmatpush1.bf16.msra.mxu0 0
        %3356 = vmatprep.subr.bf16.mxu0 0
        %3357 = vmatpush1.bf16.msra.mxu0 0
        %3358 = vmatprep.subr.bf16.mxu0 0
        %3359 = vmatpush1.bf16.msra.mxu0 0
        %3360 = vmatprep.subr.bf16.mxu0 0
        %3361 = vmatpush1.bf16.msra.mxu0 0
        %3362 = vmatprep.subr.bf16.mxu0 0
        %3363 = vmatpush1.bf16.msra.mxu0 0
        %3364 = vmatprep.subr.bf16.mxu0 0
        %3365 = vmatpush1.bf16.msra.mxu0 0
        %3366 = vmatprep.subr.bf16.mxu0 0
        %3367 = vmatpush1.bf16.msra.mxu0 0
        %3368 = vmatprep.subr.bf16.mxu0 0
        %3369 = vmatpush1.bf16.msra.mxu0 0
        %3370 = vmatprep.mubr.bf16.mxu0 0
        %3371 = vmatmul.mubr.bf16.gmra.mrb[0].mxu0 %v3333
        %v3372 = vpop.f32.mrb[0].mxu0
        %v3373 = vadd.f32 0.0, %v3372
        %v3374 = vpop.f32.mrb[0].mxu0
        %v3375 = vpop.f32.mrb[0].mxu0
        %v3376 = vadd.f32 0.0, %v3375
        %v3377 = vpop.f32.mrb[0].mxu0
        %3378 = vdwg.mxu0
        %v3379 = vadd.f32 %v3322, %v3373
        %v3380 = vadd.f32 %v3323, %v3376
        %3381 = vrot.lane.b32.xlu0 %v2308, 8
        %v3382 = vpop.permute.xlu0 %3381
        %3383 = vrot.lane.b32.xlu0 %v2300, 80
        %v3384 = vpop.permute.xlu0 %3383
        %3385 = vrot.lane.b32.xlu0 %v2301, 80
        %v3386 = vpop.permute.xlu0 %3385
        %vm3387 = vcmask 654336
        %v3388 = vsel %vm3387, %v3384, %v3386
        %v3390 = vsel %vm2314, %v3382, 0
        %v3393 = vsel %vm2318, %v3388, 0
        %3395 = vmatprep.subr.bf16.mxu0 0
        %3396 = vmatpush1.bf16.msra.mxu0 %v3393
        %3397 = vmatprep.subr.bf16.mxu0 0
        %3398 = vmatpush1.bf16.msra.mxu0 0
        %3399 = vmatprep.subr.bf16.mxu0 0
        %3400 = vmatpush1.bf16.msra.mxu0 0
        %3401 = vmatprep.subr.bf16.mxu0 0
        %3402 = vmatpush1.bf16.msra.mxu0 0
        %3403 = vmatprep.subr.bf16.mxu0 0
        %3404 = vmatpush1.bf16.msra.mxu0 0
        %3405 = vmatprep.subr.bf16.mxu0 0
        %3406 = vmatpush1.bf16.msra.mxu0 0
        %3407 = vmatprep.subr.bf16.mxu0 0
        %3408 = vmatpush1.bf16.msra.mxu0 0
        %3409 = vmatprep.subr.bf16.mxu0 0
        %3410 = vmatpush1.bf16.msra.mxu0 0
        %3411 = vmatprep.subr.bf16.mxu0 0
        %3412 = vmatpush1.bf16.msra.mxu0 0
        %3413 = vmatprep.subr.bf16.mxu0 0
        %3414 = vmatpush1.bf16.msra.mxu0 0
        %3415 = vmatprep.subr.bf16.mxu0 0
        %3416 = vmatpush1.bf16.msra.mxu0 0
        %3417 = vmatprep.subr.bf16.mxu0 0
        %3418 = vmatpush1.bf16.msra.mxu0 0
        %3419 = vmatprep.subr.bf16.mxu0 0
        %3420 = vmatpush1.bf16.msra.mxu0 0
        %3421 = vmatprep.subr.bf16.mxu0 0
        %3422 = vmatpush1.bf16.msra.mxu0 0
        %3423 = vmatprep.subr.bf16.mxu0 0
        %3424 = vmatpush1.bf16.msra.mxu0 0
        %3425 = vmatprep.subr.bf16.mxu0 0
        %3426 = vmatpush1.bf16.msra.mxu0 0
        %3427 = vmatprep.mubr.bf16.mxu0 0
        %3428 = vmatmul.mubr.bf16.gmra.mrb[0].mxu0 %v3390
        %v3429 = vpop.f32.mrb[0].mxu0
        %v3430 = vadd.f32 0.0, %v3429
        %v3431 = vpop.f32.mrb[0].mxu0
        %v3432 = vpop.f32.mrb[0].mxu0
        %v3433 = vadd.f32 0.0, %v3432
        %v3434 = vpop.f32.mrb[0].mxu0
        %3435 = vdwg.mxu0
        %v3436 = vadd.f32 %v3379, %v3430
        %v3437 = vadd.f32 %v3380, %v3433
        %v3438 = vld [vmem:[%s4] sm:$0xff]
        %v3439 = vld [vmem:[%s4 + $0x8] sm:$0xff]
        %v3442 = vunpack.c.l.b16 %v3438
        %v3443 = vunpack.c.h.b16 %v3438
        %v3444 = vunpack.c.l.b16 %v3439
        %v3445 = vunpack.c.h.b16 %v3439
        %v3446 = vpack.c.b16 %v3444, %v3442
        %v3447 = vpack.c.b16 %v3445, %v3443
        %3448 = vrot.lane.b32.xlu0 %v3446, 2
        %v3449 = vpop.permute.xlu0 %3448
        %3450 = vrot.lane.b32.xlu0 %v3447, 2
        %v3451 = vpop.permute.xlu0 %3450
        %vm3452 = vcmask 15360
        %v3453 = vsel %vm3452, %v3449, %v3451
        %3454 = vrot.lane.b32.xlu0 %v2300, 79
        %v3455 = vpop.permute.xlu0 %3454
        %3456 = vrot.lane.b32.xlu0 %v2301, 79
        %v3457 = vpop.permute.xlu0 %3456
        %vm3458 = vcmask 646144
        %v3459 = vsel %vm3458, %v3455, %v3457
        %v3461 = vsel %vm2314, %v3453, 0
        %v3464 = vsel %vm2318, %v3459, 0
        %3466 = vmatprep.subr.bf16.mxu0 0
        %3467 = vmatpush1.bf16.msra.mxu0 %v3464
        %3468 = vmatprep.subr.bf16.mxu0 0
        %3469 = vmatpush1.bf16.msra.mxu0 0
        %3470 = vmatprep.subr.bf16.mxu0 0
        %3471 = vmatpush1.bf16.msra.mxu0 0
        %3472 = vmatprep.subr.bf16.mxu0 0
        %3473 = vmatpush1.bf16.msra.mxu0 0
        %3474 = vmatprep.subr.bf16.mxu0 0
        %3475 = vmatpush1.bf16.msra.mxu0 0
        %3476 = vmatprep.subr.bf16.mxu0 0
        %3477 = vmatpush1.bf16.msra.mxu0 0
        %3478 = vmatprep.subr.bf16.mxu0 0
        %3479 = vmatpush1.bf16.msra.mxu0 0
        %3480 = vmatprep.subr.bf16.mxu0 0
        %3481 = vmatpush1.bf16.msra.mxu0 0
        %3482 = vmatprep.subr.bf16.mxu0 0
        %3483 = vmatpush1.bf16.msra.mxu0 0
        %3484 = vmatprep.subr.bf16.mxu0 0
        %3485 = vmatpush1.bf16.msra.mxu0 0
        %3486 = vmatprep.subr.bf16.mxu0 0
        %3487 = vmatpush1.bf16.msra.mxu0 0
        %3488 = vmatprep.subr.bf16.mxu0 0
        %3489 = vmatpush1.bf16.msra.mxu0 0
        %3490 = vmatprep.subr.bf16.mxu0 0
        %3491 = vmatpush1.bf16.msra.mxu0 0
        %3492 = vmatprep.subr.bf16.mxu0 0
        %3493 = vmatpush1.bf16.msra.mxu0 0
        %3494 = vmatprep.subr.bf16.mxu0 0
        %3495 = vmatpush1.bf16.msra.mxu0 0
        %3496 = vmatprep.subr.bf16.mxu0 0
        %3497 = vmatpush1.bf16.msra.mxu0 0
        %3498 = vmatprep.mubr.bf16.mxu0 0
        %3499 = vmatmul.mubr.bf16.gmra.mrb[0].mxu0 %v3461
        %v3500 = vpop.f32.mrb[0].mxu0
        %v3501 = vadd.f32 0.0, %v3500
        %v3502 = vpop.f32.mrb[0].mxu0
        %v3503 = vpop.f32.mrb[0].mxu0
        %v3504 = vadd.f32 0.0, %v3503
        %v3505 = vpop.f32.mrb[0].mxu0
        %3506 = vdwg.mxu0
        %v3507 = vadd.f32 %v3436, %v3501
        %v3508 = vadd.f32 %v3437, %v3504
        %v3509 = vld [vmem:[%s4 + $0x4] sm:$0xf]
        %v3510 = vld [vmem:[%s4 + $0xc] sm:$0xf]
        %v3513 = vunpack.c.l.b16 %v3509
        %v3514 = vunpack.c.l.b16 %v3510
        %v3515 = vpack.c.b16 %v3514, %v3513
        %3516 = vrot.lane.b32.xlu0 %v3515, 124
        %v3517 = vpop.permute.xlu0 %3516
        %3518 = vrot.lane.b32.xlu0 %v2300, 78
        %v3519 = vpop.permute.xlu0 %3518
        %3520 = vrot.lane.b32.xlu0 %v2301, 78
        %v3521 = vpop.permute.xlu0 %3520
        %vm3522 = vcmask 637952
        %v3523 = vsel %vm3522, %v3519, %v3521
        %v3525 = vsel %vm2314, %v3517, 0
        %v3528 = vsel %vm2318, %v3523, 0
        %3530 = vmatprep.subr.bf16.mxu0 0
        %3531 = vmatpush1.bf16.msra.mxu0 %v3528
        %3532 = vmatprep.subr.bf16.mxu0 0
        %3533 = vmatpush1.bf16.msra.mxu0 0
        %3534 = vmatprep.subr.bf16.mxu0 0
        %3535 = vmatpush1.bf16.msra.mxu0 0
        %3536 = vmatprep.subr.bf16.mxu0 0
        %3537 = vmatpush1.bf16.msra.mxu0 0
        %3538 = vmatprep.subr.bf16.mxu0 0
        %3539 = vmatpush1.bf16.msra.mxu0 0
        %3540 = vmatprep.subr.bf16.mxu0 0
        %3541 = vmatpush1.bf16.msra.mxu0 0
        %3542 = vmatprep.subr.bf16.mxu0 0
        %3543 = vmatpush1.bf16.msra.mxu0 0
        %3544 = vmatprep.subr.bf16.mxu0 0
        %3545 = vmatpush1.bf16.msra.mxu0 0
        %3546 = vmatprep.subr.bf16.mxu0 0
        %3547 = vmatpush1.bf16.msra.mxu0 0
        %3548 = vmatprep.subr.bf16.mxu0 0
        %3549 = vmatpush1.bf16.msra.mxu0 0
        %3550 = vmatprep.subr.bf16.mxu0 0
        %3551 = vmatpush1.bf16.msra.mxu0 0
        %3552 = vmatprep.subr.bf16.mxu0 0
        %3553 = vmatpush1.bf16.msra.mxu0 0
        %3554 = vmatprep.subr.bf16.mxu0 0
        %3555 = vmatpush1.bf16.msra.mxu0 0
        %3556 = vmatprep.subr.bf16.mxu0 0
        %3557 = vmatpush1.bf16.msra.mxu0 0
        %3558 = vmatprep.subr.bf16.mxu0 0
        %3559 = vmatpush1.bf16.msra.mxu0 0
        %3560 = vmatprep.subr.bf16.mxu0 0
        %3561 = vmatpush1.bf16.msra.mxu0 0
        %3562 = vmatprep.mubr.bf16.mxu0 0
        %3563 = vmatmul.mubr.bf16.gmra.mrb[0].mxu0 %v3525
        %v3564 = vpop.f32.mrb[0].mxu0
        %v3565 = vadd.f32 0.0, %v3564
        %v3566 = vpop.f32.mrb[0].mxu0
        %v3567 = vpop.f32.mrb[0].mxu0
        %v3568 = vadd.f32 0.0, %v3567
        %v3569 = vpop.f32.mrb[0].mxu0
        %3570 = vdwg.mxu0
        %v3571 = vadd.f32 %v3507, %v3565
        %v3572 = vadd.f32 %v3508, %v3568
        %3573 = vrot.lane.b32.xlu0 %v3515, 118
        %v3574 = vpop.permute.xlu0 %3573
        %3575 = vrot.lane.b32.xlu0 %v2300, 77
        %v3576 = vpop.permute.xlu0 %3575
        %3577 = vrot.lane.b32.xlu0 %v2301, 77
        %v3578 = vpop.permute.xlu0 %3577
        %vm3579 = vcmask 629760
        %v3580 = vsel %vm3579, %v3576, %v3578
        %v3582 = vsel %vm2314, %v3574, 0
        %v3585 = vsel %vm2318, %v3580, 0
        %3587 = vmatprep.subr.bf16.mxu0 0
        %3588 = vmatpush1.bf16.msra.mxu0 %v3585
        %3589 = vmatprep.subr.bf16.mxu0 0
        %3590 = vmatpush1.bf16.msra.mxu0 0
        %3591 = vmatprep.subr.bf16.mxu0 0
        %3592 = vmatpush1.bf16.msra.mxu0 0
        %3593 = vmatprep.subr.bf16.mxu0 0
        %3594 = vmatpush1.bf16.msra.mxu0 0
        %3595 = vmatprep.subr.bf16.mxu0 0
        %3596 = vmatpush1.bf16.msra.mxu0 0
        %3597 = vmatprep.subr.bf16.mxu0 0
        %3598 = vmatpush1.bf16.msra.mxu0 0
        %3599 = vmatprep.subr.bf16.mxu0 0
        %3600 = vmatpush1.bf16.msra.mxu0 0
        %3601 = vmatprep.subr.bf16.mxu0 0
        %3602 = vmatpush1.bf16.msra.mxu0 0
        %3603 = vmatprep.subr.bf16.mxu0 0
        %3604 = vmatpush1.bf16.msra.mxu0 0
        %3605 = vmatprep.subr.bf16.mxu0 0
        %3606 = vmatpush1.bf16.msra.mxu0 0
        %3607 = vmatprep.subr.bf16.mxu0 0
        %3608 = vmatpush1.bf16.msra.mxu0 0
        %3609 = vmatprep.subr.bf16.mxu0 0
        %3610 = vmatpush1.bf16.msra.mxu0 0
        %3611 = vmatprep.subr.bf16.mxu0 0
        %3612 = vmatpush1.bf16.msra.mxu0 0
        %3613 = vmatprep.subr.bf16.mxu0 0
        %3614 = vmatpush1.bf16.msra.mxu0 0
        %3615 = vmatprep.subr.bf16.mxu0 0
        %3616 = vmatpush1.bf16.msra.mxu0 0
        %3617 = vmatprep.subr.bf16.mxu0 0
        %3618 = vmatpush1.bf16.msra.mxu0 0
        %3619 = vmatprep.mubr.bf16.mxu0 0
        %3620 = vmatmul.mubr.bf16.gmra.mrb[0].mxu0 %v3582
        %v3621 = vpop.f32.mrb[0].mxu0
        %v3622 = vadd.f32 0.0, %v3621
        %v3623 = vpop.f32.mrb[0].mxu0
        %v3624 = vpop.f32.mrb[0].mxu0
        %v3625 = vadd.f32 0.0, %v3624
        %v3626 = vpop.f32.mrb[0].mxu0
        %3627 = vdwg.mxu0
        %v3628 = vadd.f32 %v3571, %v3622
        %v3629 = vadd.f32 %v3572, %v3625
        %3630 = vrot.lane.b32.xlu0 %v3515, 112
        %v3631 = vpop.permute.xlu0 %3630
        %3632 = vrot.lane.b32.xlu0 %v2300, 76
        %v3633 = vpop.permute.xlu0 %3632
        %3634 = vrot.lane.b32.xlu0 %v2301, 76
        %v3635 = vpop.permute.xlu0 %3634
        %vm3636 = vcmask 621568
        %v3637 = vsel %vm3636, %v3633, %v3635
        %v3639 = vsel %vm2314, %v3631, 0
        %v3642 = vsel %vm2318, %v3637, 0
        %3644 = vmatprep.subr.bf16.mxu0 0
        %3645 = vmatpush1.bf16.msra.mxu0 %v3642
        %3646 = vmatprep.subr.bf16.mxu0 0
        %3647 = vmatpush1.bf16.msra.mxu0 0
        %3648 = vmatprep.subr.bf16.mxu0 0
        %3649 = vmatpush1.bf16.msra.mxu0 0
        %3650 = vmatprep.subr.bf16.mxu0 0
        %3651 = vmatpush1.bf16.msra.mxu0 0
        %3652 = vmatprep.subr.bf16.mxu0 0
        %3653 = vmatpush1.bf16.msra.mxu0 0
        %3654 = vmatprep.subr.bf16.mxu0 0
        %3655 = vmatpush1.bf16.msra.mxu0 0
        %3656 = vmatprep.subr.bf16.mxu0 0
        %3657 = vmatpush1.bf16.msra.mxu0 0
        %3658 = vmatprep.subr.bf16.mxu0 0
        %3659 = vmatpush1.bf16.msra.mxu0 0
        %3660 = vmatprep.subr.bf16.mxu0 0
        %3661 = vmatpush1.bf16.msra.mxu0 0
        %3662 = vmatprep.subr.bf16.mxu0 0
        %3663 = vmatpush1.bf16.msra.mxu0 0
        %3664 = vmatprep.subr.bf16.mxu0 0
        %3665 = vmatpush1.bf16.msra.mxu0 0
        %3666 = vmatprep.subr.bf16.mxu0 0
        %3667 = vmatpush1.bf16.msra.mxu0 0
        %3668 = vmatprep.subr.bf16.mxu0 0
        %3669 = vmatpush1.bf16.msra.mxu0 0
        %3670 = vmatprep.subr.bf16.mxu0 0
        %3671 = vmatpush1.bf16.msra.mxu0 0
        %3672 = vmatprep.subr.bf16.mxu0 0
        %3673 = vmatpush1.bf16.msra.mxu0 0
        %3674 = vmatprep.subr.bf16.mxu0 0
        %3675 = vmatpush1.bf16.msra.mxu0 0
        %3676 = vmatprep.mubr.bf16.mxu0 0
        %3677 = vmatmul.mubr.bf16.gmra.mrb[0].mxu0 %v3639
        %v3678 = vpop.f32.mrb[0].mxu0
        %v3679 = vadd.f32 0.0, %v3678
        %v3680 = vpop.f32.mrb[0].mxu0
        %v3681 = vpop.f32.mrb[0].mxu0
        %v3682 = vadd.f32 0.0, %v3681
        %v3683 = vpop.f32.mrb[0].mxu0
        %3684 = vdwg.mxu0
        %v3685 = vadd.f32 %v3628, %v3679
        %v3686 = vadd.f32 %v3629, %v3682
        %v3687 = vpack.c.bf16 %v3686, %v3685
        %v3688 = vld [vmem:[%s6] sm:$0xff]
        %v3689 = vld [vmem:[%s6 + $0x8] sm:$0xff]
        %v3690 = vld [vmem:[%s6 + $0x10] sm:$0xff]
        %v3691 = vld [vmem:[%s6 + $0x18] sm:$0xff]
        %v3692 = vld [vmem:[%s6 + $0x20] sm:$0xff]
        %v3693 = vld [vmem:[%s6 + $0x28] sm:$0xff]
        %v3694 = vld [vmem:[%s6 + $0x30] sm:$0xff]
        %v3695 = vld [vmem:[%s6 + $0x38] sm:$0xff]
        %v3696 = vld [vmem:[%s6 + $0x40] sm:$0xff]
        %v3697 = vld [vmem:[%s6 + $0x48] sm:$0xff]
        %v3698 = vld [vmem:[%s6 + $0x50] sm:$0xff]
        %v3699 = vld [vmem:[%s6 + $0x58] sm:$0x33]
        %v3700 = vld [vmem:[%s5] sm:$0xff]
        %v3701 = vld [vmem:[%s5 + $0x8] sm:$0xff]
        %3703 = vset.pattern.permute.xlu0 0
        %3704 = vperm.xlu0 %3703, %v3700
        %v3705 = vpop.permute.xlu0 %3704
        %3708 = vset.pattern.permute.xlu0 0
        %3709 = vperm.xlu0 %3708, %v3701
        %v3710 = vpop.permute.xlu0 %3709
        %v3724 = vunpack.c.l.b16 %v3688
        %v3725 = vunpack.c.h.b16 %v3688
        %v3726 = vunpack.c.l.b16 %v3689
        %v3727 = vunpack.c.h.b16 %v3689
        %v3728 = vunpack.c.l.b16 %v3690
        %v3729 = vunpack.c.h.b16 %v3690
        %v3730 = vunpack.c.l.b16 %v3691
        %v3731 = vunpack.c.h.b16 %v3691
        %v3732 = vunpack.c.l.b16 %v3692
        %v3733 = vunpack.c.h.b16 %v3692
        %v3734 = vunpack.c.l.b16 %v3693
        %v3735 = vunpack.c.h.b16 %v3693
        %v3736 = vunpack.c.l.b16 %v3694
        %v3737 = vunpack.c.h.b16 %v3694
        %v3738 = vunpack.c.l.b16 %v3695
        %v3739 = vunpack.c.h.b16 %v3695
        %v3740 = vunpack.c.l.b16 %v3696
        %v3741 = vunpack.c.h.b16 %v3696
        %v3742 = vunpack.c.l.b16 %v3697
        %v3743 = vunpack.c.h.b16 %v3697
        %v3744 = vunpack.c.l.b16 %v3698
        %v3745 = vunpack.c.h.b16 %v3698
        %v3746 = vunpack.c.l.b16 %v3699
        %v3747 = vunpack.c.h.b16 %v3699
        %v3748 = vpack.c.b16 %v3726, %v3724
        %v3749 = vpack.c.b16 %v3727, %v3725
        %v3750 = vpack.c.b16 %v3730, %v3728
        %v3751 = vpack.c.b16 %v3731, %v3729
        %v3752 = vpack.c.b16 %v3734, %v3732
        %v3753 = vpack.c.b16 %v3735, %v3733
        %v3754 = vpack.c.b16 %v3738, %v3736
        %v3755 = vpack.c.b16 %v3739, %v3737
        %v3756 = vpack.c.b16 %v3742, %v3740
        %v3757 = vpack.c.b16 %v3743, %v3741
        %v3758 = vpack.c.b16 %v3746, %v3744
        %v3759 = vpack.c.b16 %v3747, %v3745
        %vm3770 = vcmask 752640
        %v3772 = vsel %vm3770, %v3687, 0
        %v3775 = vsel %vm2170, %v3758, 0
        %v3778 = vsel %vm2170, %v3759, 0
        %3780 = vmatprep.subr.bf16.mxu0 %v3749
        %3781 = vmatpush1.bf16.msra.mxu0 %v3748
        %3782 = vmatprep.subr.bf16.mxu0 %v3751
        %3783 = vmatpush1.bf16.msra.mxu0 %v3750
        %3784 = vmatprep.subr.bf16.mxu0 %v3753
        %3785 = vmatpush1.bf16.msra.mxu0 %v3752
        %3786 = vmatprep.subr.bf16.mxu0 %v3755
        %3787 = vmatpush1.bf16.msra.mxu0 %v3754
        %3788 = vmatprep.subr.bf16.mxu0 %v3757
        %3789 = vmatpush1.bf16.msra.mxu0 %v3756
        %3790 = vmatprep.subr.bf16.mxu0 %v3778
        %3791 = vmatpush1.bf16.msra.mxu0 %v3775
        %3792 = vmatprep.subr.bf16.mxu0 0
        %3793 = vmatpush1.bf16.msra.mxu0 0
        %3794 = vmatprep.subr.bf16.mxu0 0
        %3795 = vmatpush1.bf16.msra.mxu0 0
        %3796 = vmatprep.subr.bf16.mxu0 0
        %3797 = vmatpush1.bf16.msra.mxu0 0
        %3798 = vmatprep.subr.bf16.mxu0 0
        %3799 = vmatpush1.bf16.msra.mxu0 0
        %3800 = vmatprep.subr.bf16.mxu0 0
        %3801 = vmatpush1.bf16.msra.mxu0 0
        %3802 = vmatprep.subr.bf16.mxu0 0
        %3803 = vmatpush1.bf16.msra.mxu0 0
        %3804 = vmatprep.subr.bf16.mxu0 0
        %3805 = vmatpush1.bf16.msra.mxu0 0
        %3806 = vmatprep.subr.bf16.mxu0 0
        %3807 = vmatpush1.bf16.msra.mxu0 0
        %3808 = vmatprep.subr.bf16.mxu0 0
        %3809 = vmatpush1.bf16.msra.mxu0 0
        %3810 = vmatprep.subr.bf16.mxu0 0
        %3811 = vmatpush1.bf16.msra.mxu0 0
        %3812 = vmatprep.mubr.bf16.mxu0 0
        %3813 = vmatmul.mubr.bf16.gmra.mrb[0].mxu0 %v3772
        %v3814 = vpop.f32.mrb[0].mxu0
        %v3815 = vadd.f32 %v3705, %v3814
        %v3816 = vpop.f32.mrb[0].mxu0
        %v3817 = vadd.f32 %v3705, %v3816
        %v3818 = vpop.f32.mrb[0].mxu0
        %v3819 = vadd.f32 %v3710, %v3818
        %v3820 = vpop.f32.mrb[0].mxu0
        %v3821 = vadd.f32 %v3710, %v3820
        %3822 = vdwg.mxu0
        %v3823 = vlaneseq
        %v3824 = vshrl.u32 %v3823, 7
        %v3825 = vadd.s32 %v3824, 8
        %v3826 = vlaneseq
        %v3827 = vand.u32 %v3826, 127
        %v3828 = vadd.s32 %v3827, 128
        %v3829 = vmul.u32 %v3824, 16
        %v3830 = vmul.u32 %v3825, 16
        %vm3831 = vcmp.ge.s32.totalorder %v3827, %v3829
        %vm3832 = vcmp.ge.s32.totalorder %v3828, %v3829
        %vm3833 = vcmp.ge.s32.totalorder %v3827, %v3830
        %vm3834 = vcmp.ge.s32.totalorder %v3828, %v3830
        %v3835 = vadd.s32 %v3829, 16
        %v3836 = vadd.s32 %v3830, 16
        %vm3837 = vcmp.lt.s32.totalorder %v3827, %v3835
        %vm3838 = vcmp.lt.s32.totalorder %v3828, %v3835
        %vm3839 = vcmp.lt.s32.totalorder %v3827, %v3836
        %vm3840 = vcmp.lt.s32.totalorder %v3828, %v3836
        %vm3841 = vmand %vm3831, %vm3837
        %vm3842 = vmand %vm3832, %vm3838
        %vm3843 = vmand %vm3833, %vm3839
        %vm3844 = vmand %vm3834, %vm3840
        %v3845 = vsel %vm3841, %v3815, 0.0
        %v3846 = vsel %vm3842, %v3817, 0.0
        %v3847 = vsel %vm3843, %v3819, 0.0
        %v3848 = vsel %vm3844, %v3821, 0.0
        %v3849 = vadd.f32 %v3845, %v3847
        %v3850 = vrot.slane %v3849, 4
        %v3851 = vadd.f32 %v3849, %v3850
        %v3852 = vrot.slane %v3851, 2
        %v3853 = vadd.f32 %v3851, %v3852
        %v3854 = vrot.slane %v3853, 1
        %v3855 = vadd.f32 %v3853, %v3854
        %v3856 = vadd.f32 %v3846, %v3848
        %v3857 = vrot.slane %v3856, 4
        %v3858 = vadd.f32 %v3856, %v3857
        %v3859 = vrot.slane %v3858, 2
        %v3860 = vadd.f32 %v3858, %v3859
        %v3861 = vrot.slane %v3860, 1
        %v3862 = vadd.f32 %v3860, %v3861
        %v3863 = vpack.c.bf16 %v3855, %v3855
        %v3864 = vpack.c.bf16 %v3862, %v3862
        %v3865 = vld [vmem:[%s7] sm:$0xf]
        %v3866 = vld [vmem:[%s7 + $0x4] sm:$0xf]
        %v3867 = vld [vmem:[%s7 + $0x8] sm:$0xf]
        %v3868 = vld [vmem:[%s7 + $0xc] sm:$0xf]
        %v3869 = vld [vmem:[%s7 + $0x10] sm:$0xf]
        %v3870 = vld [vmem:[%s7 + $0x14] sm:$0xf]
        %v3871 = vld [vmem:[%s7 + $0x18] sm:$0xf]
        %v3872 = vld [vmem:[%s7 + $0x1c] sm:$0xf]
        %v3873 = vld [vmem:[%s7 + $0x20] sm:$0xf]
        %v3874 = vld [vmem:[%s7 + $0x24] sm:$0xf]
        %v3875 = vld [vmem:[%s7 + $0x28] sm:$0xf]
        %v3876 = vld [vmem:[%s7 + $0x2c] sm:$0xf]
        %v3877 = vld [vmem:[%s7 + $0x30] sm:$0xf]
        %v3878 = vld [vmem:[%s7 + $0x34] sm:$0xf]
        %v3879 = vld [vmem:[%s7 + $0x38] sm:$0xf]
        %v3880 = vld [vmem:[%s7 + $0x3c] sm:$0xf]
        %v3881 = vld [vmem:[%s7 + $0x40] sm:$0xf]
        %v3882 = vld [vmem:[%s7 + $0x44] sm:$0xf]
        %v3883 = vld [vmem:[%s7 + $0x48] sm:$0xf]
        %v3884 = vld [vmem:[%s7 + $0x4c] sm:$0xf]
        %v3885 = vld [vmem:[%s7 + $0x50] sm:$0xf]
        %v3886 = vld [vmem:[%s7 + $0x54] sm:$0xf]
        %v3887 = vld [vmem:[%s7 + $0x58] sm:$0xf]
        %v3888 = vld [vmem:[%s7 + $0x5c] sm:$0xf]
        %v3889 = vld [vmem:[%s7 + $0x60] sm:$0xf]
        %v3890 = vld [vmem:[%s7 + $0x64] sm:$0xf]
        %v3891 = vld [vmem:[%s7 + $0x68] sm:$0xf]
        %v3892 = vld [vmem:[%s7 + $0x6c] sm:$0xf]
        %v3893 = vld [vmem:[%s7 + $0x70] sm:$0xf]
        %v3894 = vld [vmem:[%s7 + $0x74] sm:$0xf]
        %v3895 = vld [vmem:[%s7 + $0x78] sm:$0xf]
        %v3896 = vld [vmem:[%s7 + $0x7c] sm:$0xf]
        %v3897 = vld [vmem:[%s8] sm:$0x1]
        %v3930 = vunpack.c.l.b16 %v3865
        %v3931 = vunpack.c.l.b16 %v3866
        %v3932 = vunpack.c.l.b16 %v3867
        %v3933 = vunpack.c.l.b16 %v3868
        %v3934 = vunpack.c.l.b16 %v3869
        %v3935 = vunpack.c.l.b16 %v3870
        %v3936 = vunpack.c.l.b16 %v3871
        %v3937 = vunpack.c.l.b16 %v3872
        %v3938 = vunpack.c.l.b16 %v3873
        %v3939 = vunpack.c.l.b16 %v3874
        %v3940 = vunpack.c.l.b16 %v3875
        %v3941 = vunpack.c.l.b16 %v3876
        %v3942 = vunpack.c.l.b16 %v3877
        %v3943 = vunpack.c.l.b16 %v3878
        %v3944 = vunpack.c.l.b16 %v3879
        %v3945 = vunpack.c.l.b16 %v3880
        %v3946 = vunpack.c.l.b16 %v3881
        %v3947 = vunpack.c.l.b16 %v3882
        %v3948 = vunpack.c.l.b16 %v3883
        %v3949 = vunpack.c.l.b16 %v3884
        %v3950 = vunpack.c.l.b16 %v3885
        %v3951 = vunpack.c.l.b16 %v3886
        %v3952 = vunpack.c.l.b16 %v3887
        %v3953 = vunpack.c.l.b16 %v3888
        %v3954 = vunpack.c.l.b16 %v3889
        %v3955 = vunpack.c.l.b16 %v3890
        %v3956 = vunpack.c.l.b16 %v3891
        %v3957 = vunpack.c.l.b16 %v3892
        %v3958 = vunpack.c.l.b16 %v3893
        %v3959 = vunpack.c.l.b16 %v3894
        %v3960 = vunpack.c.l.b16 %v3895
        %v3961 = vunpack.c.l.b16 %v3896
        %v3962 = vpack.c.b16 %v3931, %v3930
        %v3963 = vpack.c.b16 %v3933, %v3932
        %v3964 = vpack.c.b16 %v3935, %v3934
        %v3965 = vpack.c.b16 %v3937, %v3936
        %v3966 = vpack.c.b16 %v3939, %v3938
        %v3967 = vpack.c.b16 %v3941, %v3940
        %v3968 = vpack.c.b16 %v3943, %v3942
        %v3969 = vpack.c.b16 %v3945, %v3944
        %v3970 = vpack.c.b16 %v3947, %v3946
        %v3971 = vpack.c.b16 %v3949, %v3948
        %v3972 = vpack.c.b16 %v3951, %v3950
        %v3973 = vpack.c.b16 %v3953, %v3952
        %v3974 = vpack.c.b16 %v3955, %v3954
        %v3975 = vpack.c.b16 %v3957, %v3956
        %v3976 = vpack.c.b16 %v3959, %v3958
        %v3977 = vpack.c.b16 %v3961, %v3960
        %3994 = vmatprep.subr.bf16.mxu0 0
        %3995 = vmatpush1.bf16.msra.mxu0 %v3962
        %3996 = vmatprep.subr.bf16.mxu0 0
        %3997 = vmatpush1.bf16.msra.mxu0 %v3963
        %3998 = vmatprep.subr.bf16.mxu0 0
        %3999 = vmatpush1.bf16.msra.mxu0 %v3964
        %4000 = vmatprep.subr.bf16.mxu0 0
        %4001 = vmatpush1.bf16.msra.mxu0 %v3965
        %4002 = vmatprep.subr.bf16.mxu0 0
        %4003 = vmatpush1.bf16.msra.mxu0 %v3966
        %4004 = vmatprep.subr.bf16.mxu0 0
        %4005 = vmatpush1.bf16.msra.mxu0 %v3967
        %4006 = vmatprep.subr.bf16.mxu0 0
        %4007 = vmatpush1.bf16.msra.mxu0 %v3968
        %4008 = vmatprep.subr.bf16.mxu0 0
        %4009 = vmatpush1.bf16.msra.mxu0 %v3969
        %4010 = vmatprep.subr.bf16.mxu0 0
        %4011 = vmatpush1.bf16.msra.mxu0 %v3970
        %4012 = vmatprep.subr.bf16.mxu0 0
        %4013 = vmatpush1.bf16.msra.mxu0 %v3971
        %4014 = vmatprep.subr.bf16.mxu0 0
        %4015 = vmatpush1.bf16.msra.mxu0 %v3972
        %4016 = vmatprep.subr.bf16.mxu0 0
        %4017 = vmatpush1.bf16.msra.mxu0 %v3973
        %4018 = vmatprep.subr.bf16.mxu0 0
        %4019 = vmatpush1.bf16.msra.mxu0 %v3974
        %4020 = vmatprep.subr.bf16.mxu0 0
        %4021 = vmatpush1.bf16.msra.mxu0 %v3975
        %4022 = vmatprep.subr.bf16.mxu0 0
        %4023 = vmatpush1.bf16.msra.mxu0 %v3976
        %4024 = vmatprep.subr.bf16.mxu0 0
        %4025 = vmatpush1.bf16.msra.mxu0 %v3977
        %4026 = vmatprep.mubr.bf16.mxu0 %v3864
        %4027 = vmatmul.mubr.bf16.gmra.mrb[0].mxu0 %v3863
        %v4028 = vpop.f32.mrb[0].mxu0
        %v4029 = vadd.f32 %v3897, %v4028
        %v4030 = vpop.f32.mrb[0].mxu0
        %v4031 = vpop.f32.mrb[0].mxu0
        %v4032 = vpop.f32.mrb[0].mxu0
        %4033 = vdwg.mxu0
        %v4034 = vpack.c.bf16 %v4029, %v4029
        %v4035 = vld [vmem:[%s9] sm:$0xf]
        %v4036 = vld [vmem:[%s9 + $0x4] sm:$0xf]
        %v4037 = vld [vmem:[%s9 + $0x8] sm:$0xf]
        %v4038 = vld [vmem:[%s9 + $0xc] sm:$0xf]
        %v4039 = vld [vmem:[%s9 + $0x10] sm:$0xf]
        %v4040 = vld [vmem:[%s9 + $0x14] sm:$0xf]
        %v4041 = vld [vmem:[%s9 + $0x18] sm:$0xf]
        %v4042 = vld [vmem:[%s9 + $0x1c] sm:$0xf]
        %v4043 = vld [vmem:[%s9 + $0x20] sm:$0xf]
        %v4044 = vld [vmem:[%s9 + $0x24] sm:$0xf]
        %v4045 = vld [vmem:[%s9 + $0x28] sm:$0xf]
        %v4046 = vld [vmem:[%s9 + $0x2c] sm:$0xf]
        %v4047 = vld [vmem:[%s9 + $0x30] sm:$0xf]
        %v4048 = vld [vmem:[%s9 + $0x34] sm:$0xf]
        %v4049 = vld [vmem:[%s9 + $0x38] sm:$0xf]
        %v4050 = vld [vmem:[%s10] sm:$0x1]
        %v4066 = vunpack.c.l.b16 %v4035
        %v4067 = vunpack.c.l.b16 %v4036
        %v4068 = vunpack.c.l.b16 %v4037
        %v4069 = vunpack.c.l.b16 %v4038
        %v4070 = vunpack.c.l.b16 %v4039
        %v4071 = vunpack.c.l.b16 %v4040
        %v4072 = vunpack.c.l.b16 %v4041
        %v4073 = vunpack.c.l.b16 %v4042
        %v4074 = vunpack.c.l.b16 %v4043
        %v4075 = vunpack.c.l.b16 %v4044
        %v4076 = vunpack.c.l.b16 %v4045
        %v4077 = vunpack.c.l.b16 %v4046
        %v4078 = vunpack.c.l.b16 %v4047
        %v4079 = vunpack.c.l.b16 %v4048
        %v4080 = vunpack.c.l.b16 %v4049
        %v4081 = vpack.c.b16 %v4067, %v4066
        %v4082 = vpack.c.b16 %v4069, %v4068
        %v4083 = vpack.c.b16 %v4071, %v4070
        %v4084 = vpack.c.b16 %v4073, %v4072
        %v4085 = vpack.c.b16 %v4075, %v4074
        %v4086 = vpack.c.b16 %v4077, %v4076
        %v4087 = vpack.c.b16 %v4079, %v4078
        %v4088 = vpack.c.b16 %v4080, %v4080
        %vm4096 = vcmask 982016
        %v4098 = vsel %vm4096, %v4034, 0
        %vm4100 = vcmask 1043456
        %v4102 = vsel %vm4100, %v4088, 0
        %4104 = vmatprep.subr.bf16.mxu0 0
        %4105 = vmatpush1.bf16.msra.mxu0 %v4081
        %4106 = vmatprep.subr.bf16.mxu0 0
        %4107 = vmatpush1.bf16.msra.mxu0 %v4082
        %4108 = vmatprep.subr.bf16.mxu0 0
        %4109 = vmatpush1.bf16.msra.mxu0 %v4083
        %4110 = vmatprep.subr.bf16.mxu0 0
        %4111 = vmatpush1.bf16.msra.mxu0 %v4084
        %4112 = vmatprep.subr.bf16.mxu0 0
        %4113 = vmatpush1.bf16.msra.mxu0 %v4085
        %4114 = vmatprep.subr.bf16.mxu0 0
        %4115 = vmatpush1.bf16.msra.mxu0 %v4086
        %4116 = vmatprep.subr.bf16.mxu0 0
        %4117 = vmatpush1.bf16.msra.mxu0 %v4087
        %4118 = vmatprep.subr.bf16.mxu0 0
        %4119 = vmatpush1.bf16.msra.mxu0 %v4102
        %4120 = vmatprep.subr.bf16.mxu0 0
        %4121 = vmatpush1.bf16.msra.mxu0 0
        %4122 = vmatprep.subr.bf16.mxu0 0
        %4123 = vmatpush1.bf16.msra.mxu0 0
        %4124 = vmatprep.subr.bf16.mxu0 0
        %4125 = vmatpush1.bf16.msra.mxu0 0
        %4126 = vmatprep.subr.bf16.mxu0 0
        %4127 = vmatpush1.bf16.msra.mxu0 0
        %4128 = vmatprep.subr.bf16.mxu0 0
        %4129 = vmatpush1.bf16.msra.mxu0 0
        %4130 = vmatprep.subr.bf16.mxu0 0
        %4131 = vmatpush1.bf16.msra.mxu0 0
        %4132 = vmatprep.subr.bf16.mxu0 0
        %4133 = vmatpush1.bf16.msra.mxu0 0
        %4134 = vmatprep.subr.bf16.mxu0 0
        %4135 = vmatpush1.bf16.msra.mxu0 0
        %4136 = vmatprep.mubr.bf16.mxu0 0
        %4137 = vmatmul.mubr.bf16.gmra.mrb[0].mxu0 %v4098
        %v4138 = vpop.f32.mrb[0].mxu0
        %v4139 = vadd.f32 %v4050, %v4138
        %v4140 = vpop.f32.mrb[0].mxu0
        %v4141 = vpop.f32.mrb[0].mxu0
        %v4142 = vpop.f32.mrb[0].mxu0
        %4143 = vdwg.mxu0
        %v4144 = vpack.c.bf16 %v4139, %v4139
        %v4145 = vld [vmem:[%s11] sm:$0xf]
        %v4146 = vld [vmem:[%s11 + $0x4] sm:$0xf]
        %v4147 = vld [vmem:[%s11 + $0x8] sm:$0xf]
        %v4148 = vld [vmem:[%s11 + $0xc] sm:$0xf]
        %v4149 = vld [vmem:[%s11 + $0x10] sm:$0xf]
        %v4150 = vld [vmem:[%s11 + $0x14] sm:$0xf]
        %v4151 = vld [vmem:[%s11 + $0x18] sm:$0xf]
        %v4152 = vld [vmem:[%s11 + $0x1c] sm:$0xf]
        %v4153 = vld [vmem:[%s11 + $0x20] sm:$0xf]
        %v4154 = vld [vmem:[%s11 + $0x24] sm:$0xf]
        %v4155 = vld [vmem:[%s11 + $0x28] sm:$0x3]
        %v4156 = vld [vmem:[%s12] sm:$0x1]
        %v4168 = vunpack.c.l.b16 %v4145
        %v4169 = vunpack.c.l.b16 %v4146
        %v4170 = vunpack.c.l.b16 %v4147
        %v4171 = vunpack.c.l.b16 %v4148
        %v4172 = vunpack.c.l.b16 %v4149
        %v4173 = vunpack.c.l.b16 %v4150
        %v4174 = vunpack.c.l.b16 %v4151
        %v4175 = vunpack.c.l.b16 %v4152
        %v4176 = vunpack.c.l.b16 %v4153
        %v4177 = vunpack.c.l.b16 %v4154
        %v4178 = vunpack.c.l.b16 %v4155
        %v4179 = vpack.c.b16 %v4169, %v4168
        %v4180 = vpack.c.b16 %v4171, %v4170
        %v4181 = vpack.c.b16 %v4173, %v4172
        %v4182 = vpack.c.b16 %v4175, %v4174
        %v4183 = vpack.c.b16 %v4177, %v4176
        %v4184 = vpack.c.b16 %v4178, %v4178
        %vm4190 = vcmask 687104
        %v4192 = vsel %vm4190, %v4144, 0
        %vm4194 = vcmask 1041408
        %v4196 = vsel %vm4194, %v4184, 0
        %4198 = vmatprep.subr.bf16.mxu0 0
        %4199 = vmatpush1.bf16.msra.mxu0 %v4179
        %4200 = vmatprep.subr.bf16.mxu0 0
        %4201 = vmatpush1.bf16.msra.mxu0 %v4180
        %4202 = vmatprep.subr.bf16.mxu0 0
        %4203 = vmatpush1.bf16.msra.mxu0 %v4181
        %4204 = vmatprep.subr.bf16.mxu0 0
        %4205 = vmatpush1.bf16.msra.mxu0 %v4182
        %4206 = vmatprep.subr.bf16.mxu0 0
        %4207 = vmatpush1.bf16.msra.mxu0 %v4183
        %4208 = vmatprep.subr.bf16.mxu0 0
        %4209 = vmatpush1.bf16.msra.mxu0 %v4196
        %4210 = vmatprep.subr.bf16.mxu0 0
        %4211 = vmatpush1.bf16.msra.mxu0 0
        %4212 = vmatprep.subr.bf16.mxu0 0
        %4213 = vmatpush1.bf16.msra.mxu0 0
        %4214 = vmatprep.subr.bf16.mxu0 0
        %4215 = vmatpush1.bf16.msra.mxu0 0
        %4216 = vmatprep.subr.bf16.mxu0 0
        %4217 = vmatpush1.bf16.msra.mxu0 0
        %4218 = vmatprep.subr.bf16.mxu0 0
        %4219 = vmatpush1.bf16.msra.mxu0 0
        %4220 = vmatprep.subr.bf16.mxu0 0
        %4221 = vmatpush1.bf16.msra.mxu0 0
        %4222 = vmatprep.subr.bf16.mxu0 0
        %4223 = vmatpush1.bf16.msra.mxu0 0
        %4224 = vmatprep.subr.bf16.mxu0 0
        %4225 = vmatpush1.bf16.msra.mxu0 0
        %4226 = vmatprep.subr.bf16.mxu0 0
        %4227 = vmatpush1.bf16.msra.mxu0 0
        %4228 = vmatprep.subr.bf16.mxu0 0
        %4229 = vmatpush1.bf16.msra.mxu0 0
        %4230 = vmatprep.mubr.bf16.mxu0 0
        %4231 = vmatmul.mubr.bf16.gmra.mrb[0].mxu0 %v4192
        %v4232 = vpop.f32.mrb[0].mxu0
        %v4233 = vadd.f32 %v4156, %v4232
        %v4234 = vpop.f32.mrb[0].mxu0
        %v4235 = vpop.f32.mrb[0].mxu0
        %v4236 = vpop.f32.mrb[0].mxu0
        %4237 = vdwg.mxu0
        %4238 = vst [vmem:[%s430] sm:$0x1] %v4233
        %s4239 = sand.u32 %s313, 1
        %s4240 = scalar_lea.sflag [#allocation3], %s4239
        %s4241 = sand.u32 %s313, 1
        %s4242 = scalar_lea.vmem [#allocation2], %s4241
        // Predicated region
        $region73: #{lenet_forward.1} parent=71 // pred_check
          %p4243 = pneg %p323
        $region74: #{lenet_forward.1} parent=71 // pred_check_branch
          %4245 = sbr.rel (%p4243) target = $region76
        $region75: #{lenet_forward.1} parent=71 // pred_region
          %s4247 = ssub.s32 16, 16
          %4248 = vsyncadd %s4240, %s4247
          %s4249 = smul.addr %s27, 16
          %s4250 = scalar_lea.hbm %s13, %s4249
          %s4252 = sshll.u32 %s4242, 4
          %s4253 = int_to_ptr.vmem [resolvable:$true] %s4252
          %4255 = dma.vmem_to_hbm [thread:$0]  %s4253, 16, %s4250, %s4240
        $region76: #{lenet_forward.1} parent=71 // pred_fallthru
          _
      $region72: #{lenet_forward.1} parent=5 // pred_fallthru
        _
      %p4256 = scmp.le.s32.totalorder 2, %s22
      // Predicated region
      $region77: #{lenet_forward.1} parent=5 // pred_check
        %p4257 = pneg %p4256
      $region78: #{lenet_forward.1} parent=5 // pred_check_branch
        %4259 = sbr.rel (%p4257) target = $region80
      $region79: #{lenet_forward.1} parent=5 // pred_region
        %s4260 = ssub.s32 %s22, 2
        // Predicated region
        $region81: #{lenet_forward.1} parent=79 // pred_check
          %p4261 = pneg %p329
        $region82: #{lenet_forward.1} parent=79 // pred_check_branch
          %4263 = sbr.rel (%p4261) target = $region84
        $region83: #{lenet_forward.1} parent=79 // pred_region
          %s4264 = sand.u32 %s314, 1
          %s4265 = scalar_lea.sflag [#allocation3], %s4264
          %s4266 = sand.u32 %s314, 1
          %s4267 = scalar_lea.vmem [#allocation2], %s4266
          %4268 = dma.done %s4265, 16
        $region84: #{lenet_forward.1} parent=79 // pred_fallthru
          _
      $region80: #{lenet_forward.1} parent=5 // pred_fallthru
        _
    $region6: #{lenet_forward.1} parent=1 // loop_footer
      %s26 = sadd.s32 1, %s22
    $region7: #{lenet_forward.1} parent=1 // loop_footer_branch
      %21 = sbr.rel target = $region3
    $region8: #{lenet_forward.1} parent=1 // loop_exit
      _
    %4269 = vsyncpa [#allocation3], 1
    %s4270 = scalar_lea.sflag [#allocation3], 1
    %4271 = vsyncpa %s4270, 1

</llo_original>
